<compile_context>
chip_gen: v7x
topology: tpu7x:2x2x1
jax: 0.10.0
libtpu: 0.0.40
codegen_flags: <defaults>
</compile_context>

<pallas_src>
import jax
import jax.numpy as jnp
from jax.experimental import pallas as pl
from jax.experimental.pallas import tpu as pltpu

BN_EPS = 1e-5
TM = 256                         # row-tile size for the GEMMs
VMEM_LIMIT = 40 * 1024 * 1024    # fits v7x (64 MiB) / v6e / v5e with headroom


def _round_up(x, m):
    return (x + m - 1) // m * m


def _pad2d(x, rows, cols):
    r, c = x.shape
    return jnp.pad(x, ((0, rows - r), (0, cols - c)))


# ----------------------------- Pallas kernels ------------------------------ #

def gemm_stats_kernel(a_ref, w_ref, y_ref, sum_ref, sumsq_ref):
    """One M-tile of Y = A @ W (bf16 in, f32 accumulate) plus per-column
    sum / sum-of-squares accumulated across the M grid axis (for BN stats)."""
    y = jnp.dot(a_ref[...], w_ref[...], preferred_element_type=jnp.float32)
    y_ref[...] = y

    @pl.when(pl.program_id(0) == 0)
    def _init():
        sum_ref[...] = jnp.zeros_like(sum_ref)
        sumsq_ref[...] = jnp.zeros_like(sumsq_ref)

    sum_ref[...] += jnp.sum(y, axis=0, keepdims=True)
    sumsq_ref[...] += jnp.sum(y * y, axis=0, keepdims=True)


def scale_shift_relu_kernel(y_ref, scale_ref, shift_ref, o_ref):
    """Fused BatchNorm affine (precomputed per-column scale/shift) + ReLU."""
    y = y_ref[...] * scale_ref[...] + shift_ref[...]
    o_ref[...] = jnp.maximum(y, 0.0).astype(o_ref.dtype)


def gemm_tanh_kernel(a_ref, w_ref, o_ref):
    """One M-tile of Tanh(A @ W) for the final layer."""
    y = jnp.dot(a_ref[...], w_ref[...], preferred_element_type=jnp.float32)
    o_ref[...] = jnp.tanh(y)


# --------------------------- pallas_call wrappers --------------------------- #

def _gemm_with_stats(a, w, tm):
    mp, kp = a.shape
    np_ = w.shape[1]
    return pl.pallas_call(
        gemm_stats_kernel,
        out_shape=(
            jax.ShapeDtypeStruct((mp, np_), jnp.float32),
            jax.ShapeDtypeStruct((1, np_), jnp.float32),
            jax.ShapeDtypeStruct((1, np_), jnp.float32),
        ),
        grid=(mp // tm,),
        in_specs=[
            pl.BlockSpec((tm, kp), lambda i: (i, 0)),
            pl.BlockSpec((kp, np_), lambda i: (0, 0)),
        ],
        out_specs=(
            pl.BlockSpec((tm, np_), lambda i: (i, 0)),
            pl.BlockSpec((1, np_), lambda i: (0, 0)),   # resident accumulator
            pl.BlockSpec((1, np_), lambda i: (0, 0)),   # resident accumulator
        ),
        compiler_params=pltpu.CompilerParams(
            dimension_semantics=("arbitrary",),  # stats accumulate across M tiles
            vmem_limit_bytes=VMEM_LIMIT,
        ),
    )(a, w)


def _scale_shift_relu(y, scale, shift, tm, out_dtype=jnp.bfloat16):
    mp, np_ = y.shape
    return pl.pallas_call(
        scale_shift_relu_kernel,
        out_shape=jax.ShapeDtypeStruct((mp, np_), out_dtype),
        grid=(mp // tm,),
        in_specs=[
            pl.BlockSpec((tm, np_), lambda i: (i, 0)),
            pl.BlockSpec((1, np_), lambda i: (0, 0)),
            pl.BlockSpec((1, np_), lambda i: (0, 0)),
        ],
        out_specs=pl.BlockSpec((tm, np_), lambda i: (i, 0)),
        compiler_params=pltpu.CompilerParams(
            dimension_semantics=("parallel",),
            vmem_limit_bytes=VMEM_LIMIT,
        ),
    )(y, scale, shift)


def _gemm_tanh(a, w, tm):
    mp, kp = a.shape
    np_ = w.shape[1]
    return pl.pallas_call(
        gemm_tanh_kernel,
        out_shape=jax.ShapeDtypeStruct((mp, np_), jnp.float32),
        grid=(mp // tm,),
        in_specs=[
            pl.BlockSpec((tm, kp), lambda i: (i, 0)),
            pl.BlockSpec((kp, np_), lambda i: (0, 0)),
        ],
        out_specs=pl.BlockSpec((tm, np_), lambda i: (i, 0)),
        compiler_params=pltpu.CompilerParams(
            dimension_semantics=("parallel",),
            vmem_limit_bytes=VMEM_LIMIT,
        ),
    )(a, w)


# --------------------------- layer-level helpers ---------------------------- #

def _prep_operands(a, wm):
    """Pad M to a tile multiple, K/N to multiples of 128, cast to bf16."""
    m, k = a.shape
    n = wm.shape[1]
    kp = _round_up(k, 128)
    np_ = _round_up(max(n, 128), 128)
    tm = TM if m >= TM else _round_up(m, 16)
    mp = _round_up(m, tm)
    a_p = _pad2d(a, mp, kp).astype(jnp.bfloat16)      # zero rows -> zero Y rows
    w_p = _pad2d(wm, kp, np_).astype(jnp.bfloat16)
    return a_p, w_p, tm


def _gemm_bn_relu_layer(a, wm, groups, cout, gamma, beta):
    """Y = A @ Wm (N = groups*cout, column order (group, channel)),
    training-mode BatchNorm over the channel axis (stats pooled over all rows
    AND the `groups` output taps), then ReLU.  Returns [M, groups*cout] bf16."""
    m, n = a.shape[0], groups * cout
    a_p, w_p, tm = _prep_operands(a, wm)
    y, s, ss = _gemm_with_stats(a_p, w_p, tm)

    # Tiny per-channel reduction of per-column partial stats (plain-JAX glue).
    count = m * groups
    s_c = s[0, :n].reshape(groups, cout).sum(axis=0)
    ss_c = ss[0, :n].reshape(groups, cout).sum(axis=0)
    mean = s_c / count
    var = jnp.maximum(ss_c / count - mean * mean, 0.0)   # biased var (BN train)
    scale_c = gamma / jnp.sqrt(var + BN_EPS)
    shift_c = beta - mean * scale_c

    np_ = y.shape[1]
    scale = jnp.zeros((1, np_), jnp.float32).at[0, :n].set(jnp.tile(scale_c, groups))
    shift = jnp.zeros((1, np_), jnp.float32).at[0, :n].set(jnp.tile(shift_c, groups))

    y = _scale_shift_relu(y, scale, shift, tm)
    return y[:m, :n]


def _gemm_tanh_layer(a, wm, n):
    m = a.shape[0]
    a_p, w_p, tm = _prep_operands(a, wm)
    y = _gemm_tanh(a_p, w_p, tm)
    return y[:m, :n]


# ----------------------- transposed-conv GEMM lowering ---------------------- #

def _stride2_patches(x):
    """x: NHWC [B,H,W,C] -> 3x3 patch matrix [B*H*W, 9*C] of the 1-padded input."""
    b, h, w, c = x.shape
    xp = jnp.pad(x, ((0, 0), (1, 1), (1, 1), (0, 0)))
    cols = [xp[:, dy:dy + h, dx:dx + w, :] for dy in range(3) for dx in range(3)]
    return jnp.concatenate(cols, axis=-1).reshape(b * h * w, 9 * c)


def _stride2_weight(w):
    """ConvTranspose2d weight [Cin,Cout,4,4] (k=4,s=2,p=1) -> combined sub-pixel
    GEMM weight [9*Cin, 4*Cout].  Column group g = py*2+px is the output parity;
    tap (dy,dx) of the 3x3 window uses kernel entry (3+py-2*dy, 3+px-2*dx)."""
    cin, cout = w.shape[0], w.shape[1]
    wc = jnp.zeros((3, 3, cin, 2, 2, cout), w.dtype)
    for dy in range(3):
        for py in range(2):
            ky = 3 + py - 2 * dy
            if not 0 <= ky < 4:
                continue
            for dx in range(3):
                for px in range(2):
                    kx = 3 + px - 2 * dx
                    if not 0 <= kx < 4:
                        continue
                    wc = wc.at[dy, dx, :, py, px, :].set(w[:, :, ky, kx])
    return wc.reshape(9 * cin, 4 * cout)


def _depth_to_space(y, b, h, w, cout):
    """[B*H*W, 4*Cout] (parity-major columns) -> NHWC [B, 2H, 2W, Cout]."""
    y = y.reshape(b, h, w, 2, 2, cout).transpose(0, 1, 3, 2, 4, 5)
    return y.reshape(b, 2 * h, 2 * w, cout)


# ------------------------------ model wrapper ------------------------------- #

def init_params(key, latent_dim, hidden_dim, out_channels):
    """Matches WGANGenerator._init_weights: conv ~ N(0, 0.02);
    BN gamma ~ N(1, 0.02), beta = 0."""
    ks = jax.random.split(key, 7)

    def conv_w(k, cin, cout):
        return 0.02 * jax.random.normal(k, (cin, cout, 4, 4), jnp.float32)

    def bn(k, c):
        return (1.0 + 0.02 * jax.random.normal(k, (c,), jnp.float32),
                jnp.zeros((c,), jnp.float32))

    return {
        "w1": conv_w(ks[0], latent_dim, hidden_dim * 4),
        "bn1": bn(ks[1], hidden_dim * 4),
        "w2": conv_w(ks[2], hidden_dim * 4, hidden_dim * 2),
        "bn2": bn(ks[3], hidden_dim * 2),
        "w3": conv_w(ks[4], hidden_dim * 2, hidden_dim),
        "bn3": bn(ks[5], hidden_dim),
        "w4": conv_w(ks[6], hidden_dim, out_channels),
    }


def wgan_generator_forward(z, params):
    """z: [B, latent_dim] (or [B, latent_dim, 1, 1]) -> images [B, C, 32, 32] (NCHW)."""
    if z.ndim == 4:
        z = z.reshape(z.shape[0], z.shape[1])
    b = z.shape[0]

    # Layer 1: ConvTranspose2d(latent, 4h, 4, 1, 0) on a 1x1 input == linear
    # with the 16 spatial taps folded into N, then BN + ReLU.
    w1 = params["w1"]
    c1 = w1.shape[1]
    wm1 = jnp.transpose(w1, (0, 2, 3, 1)).reshape(w1.shape[0], 16 * c1)
    y = _gemm_bn_relu_layer(z, wm1, 16, c1, *params["bn1"])
    x = y.reshape(b, 4, 4, c1)                                    # NHWC

    # Layers 2-3: ConvTranspose2d(k=4, s=2, p=1) via sub-pixel GEMM + BN + ReLU.
    for wname, bnname in (("w2", "bn2"), ("w3", "bn3")):
        w = params[wname]
        cout = w.shape[1]
        _, h, wdim, _ = x.shape
        a = _stride2_patches(x)
        y = _gemm_bn_relu_layer(a, _stride2_weight(w), 4, cout, *params[bnname])
        x = _depth_to_space(y, b, h, wdim, cout)

    # Layer 4: ConvTranspose2d(k=4, s=2, p=1) + Tanh.
    w4 = params["w4"]
    c4 = w4.shape[1]
    _, h, wdim, _ = x.shape
    a = _stride2_patches(x)
    y = _gemm_tanh_layer(a, _stride2_weight(w4), 4 * c4)
    x = _depth_to_space(y, b, h, wdim, c4)                        # [B, 2H, 2W, C]
    return x.transpose(0, 3, 1, 2)                                # NCHW


if __name__ == "__main__":
    B, LATENT, HIDDEN, OUT_CH = 8, 16, 8, 1

    key = jax.random.PRNGKey(0)
    kz, kp = jax.random.split(key)
    z = jax.random.normal(kz, (B, LATENT), jnp.float32)
    params = init_params(kp, LATENT, HIDDEN, OUT_CH)

    fwd = jax.jit(wgan_generator_forward)
    img = jax.block_until_ready(fwd(z, params))

    assert img.shape == (B, OUT_CH, 32, 32), img.shape
    assert bool(jnp.all(jnp.isfinite(img)))
    assert bool(jnp.all(jnp.abs(img) <= 1.0 + 1e-5))  # Tanh range
    print("KERNEL_OK")
</pallas_src>

<mosaic_0001>
module attributes {stable_mosaic.version = 11 : i64} {
  func.func @gemm_stats_kernel(%arg0: i32, %arg1: memref<16x128xbf16, #tpu.memory_space<vmem>>, %arg2: memref<128x512xbf16, #tpu.memory_space<vmem>>, %arg3: memref<16x512xf32, #tpu.memory_space<vmem>>, %arg4: memref<1x512xf32, #tpu.memory_space<vmem>>, %arg5: memref<1x512xf32, #tpu.memory_space<vmem>>) attributes {dimension_semantics = [#tpu.dimension_semantics<arbitrary>], iteration_bounds = array<i64: 1>, scalar_prefetch = 0 : i64, scratch_operands = 0 : i64, tpu.core_type = #tpu.core_type<tc>, window_params = [{transform_indices = @transform_0, window_bounds = array<i64: 16, 128>}, {pipeline_mode = #tpu.pipeline_mode<synchronous>, transform_indices = @transform_1, window_bounds = array<i64: 128, 512>}, {transform_indices = @transform_2, window_bounds = array<i64: 16, 512>}, {pipeline_mode = #tpu.pipeline_mode<synchronous>, transform_indices = @transform_3, window_bounds = array<i64: 1, 512>}, {pipeline_mode = #tpu.pipeline_mode<synchronous>, transform_indices = @transform_4, window_bounds = array<i64: 1, 512>}]} {
    %c0 = arith.constant 0 : index
    %c0_0 = arith.constant 0 : index
    %0 = vector.load %arg1[%c0, %c0_0] : memref<16x128xbf16, #tpu.memory_space<vmem>>, vector<16x128xbf16>
    %c0_1 = arith.constant 0 : index
    %c0_2 = arith.constant 0 : index
    %1 = vector.load %arg2[%c0_1, %c0_2] : memref<128x512xbf16, #tpu.memory_space<vmem>>, vector<128x512xbf16>
    %cst = arith.constant dense<0.000000e+00> : vector<16x512xf32>
    %2 = tpu.matmul %0, %1, %cst {dimension_numbers = #tpu.dot_dimension_numbers<[1], [0], [0], [1], [0, 0, 1, 1], [], []>} : vector<16x128xbf16>, vector<128x512xbf16>, vector<16x512xf32> -> vector<16x512xf32>
    %c0_3 = arith.constant 0 : index
    %c0_4 = arith.constant 0 : index
    %3 = vector.load %arg3[%c0_3, %c0_4] : memref<16x512xf32, #tpu.memory_space<vmem>>, vector<16x512xf32>
    tpu.vector_store %arg3[%c0_3, %c0_4], %2 {strides = array<i32>} : memref<16x512xf32, #tpu.memory_space<vmem>>, vector<16x512xf32>,
    %c0_i32 = arith.constant 0 : i32
    %4 = arith.cmpi eq, %arg0, %c0_i32 : i32
    %5 = arith.extui %4 : i1 to i32
    %c0_i32_5 = arith.constant 0 : i32
    %6 = arith.cmpi ne, %5, %c0_i32_5 : i32
    scf.if %6 {
      %cst_16 = arith.constant 0.000000e+00 : f32
      %18 = vector.broadcast %cst_16 : f32 to vector<1x512xf32>
      %c0_17 = arith.constant 0 : index
      %c0_18 = arith.constant 0 : index
      %19 = vector.load %arg4[%c0_17, %c0_18] : memref<1x512xf32, #tpu.memory_space<vmem>>, vector<1x512xf32>
      tpu.vector_store %arg4[%c0_17, %c0_18], %18 {strides = array<i32>} : memref<1x512xf32, #tpu.memory_space<vmem>>, vector<1x512xf32>,
      %cst_19 = arith.constant 0.000000e+00 : f32
      %20 = vector.broadcast %cst_19 : f32 to vector<1x512xf32>
      %c0_20 = arith.constant 0 : index
      %c0_21 = arith.constant 0 : index
      %21 = vector.load %arg5[%c0_20, %c0_21] : memref<1x512xf32, #tpu.memory_space<vmem>>, vector<1x512xf32>
      tpu.vector_store %arg5[%c0_20, %c0_21], %20 {strides = array<i32>} : memref<1x512xf32, #tpu.memory_space<vmem>>, vector<1x512xf32>,
    } else {
    }
    %c0_6 = arith.constant 0 : index
    %c0_7 = arith.constant 0 : index
    %7 = vector.load %arg4[%c0_6, %c0_7] : memref<1x512xf32, #tpu.memory_space<vmem>>, vector<1x512xf32>
    %cst_8 = arith.constant dense<0.000000e+00> : vector<512xf32>
    %8 = vector.multi_reduction <add>, %2, %cst_8 [0] : vector<16x512xf32> to vector<512xf32>
    %9 = vector.shape_cast %8 : vector<512xf32> to vector<1x512xf32>
    %10 = arith.addf %7, %9 : vector<1x512xf32>
    %c0_9 = arith.constant 0 : index
    %c0_10 = arith.constant 0 : index
    %11 = vector.load %arg4[%c0_9, %c0_10] : memref<1x512xf32, #tpu.memory_space<vmem>>, vector<1x512xf32>
    tpu.vector_store %arg4[%c0_9, %c0_10], %10 {strides = array<i32>} : memref<1x512xf32, #tpu.memory_space<vmem>>, vector<1x512xf32>,
    %c0_11 = arith.constant 0 : index
    %c0_12 = arith.constant 0 : index
    %12 = vector.load %arg5[%c0_11, %c0_12] : memref<1x512xf32, #tpu.memory_space<vmem>>, vector<1x512xf32>
    %13 = arith.mulf %2, %2 : vector<16x512xf32>
    %cst_13 = arith.constant dense<0.000000e+00> : vector<512xf32>
    %14 = vector.multi_reduction <add>, %13, %cst_13 [0] : vector<16x512xf32> to vector<512xf32>
    %15 = vector.shape_cast %14 : vector<512xf32> to vector<1x512xf32>
    %16 = arith.addf %12, %15 : vector<1x512xf32>
    %c0_14 = arith.constant 0 : index
    %c0_15 = arith.constant 0 : index
    %17 = vector.load %arg5[%c0_14, %c0_15] : memref<1x512xf32, #tpu.memory_space<vmem>>, vector<1x512xf32>
    tpu.vector_store %arg5[%c0_14, %c0_15], %16 {strides = array<i32>} : memref<1x512xf32, #tpu.memory_space<vmem>>, vector<1x512xf32>,
    return
  }
  func.func @transform_0(%arg0: i32) -> (i32, i32) {
    %c0_i32 = arith.constant 0 : i32
    %c0_i32_0 = arith.constant 0 : i32
    return %arg0, %c0_i32 : i32, i32
  }
  func.func @transform_1(%arg0: i32) -> (i32, i32) {
    %c0_i32 = arith.constant 0 : i32
    %c0_i32_0 = arith.constant 0 : i32
    %c0_i32_1 = arith.constant 0 : i32
    return %c0_i32, %c0_i32_0 : i32, i32
  }
  func.func @transform_2(%arg0: i32) -> (i32, i32) {
    %c0_i32 = arith.constant 0 : i32
    %c0_i32_0 = arith.constant 0 : i32
    return %arg0, %c0_i32 : i32, i32
  }
  func.func @transform_3(%arg0: i32) -> (i32, i32) {
    %c0_i32 = arith.constant 0 : i32
    %c0_i32_0 = arith.constant 0 : i32
    %c0_i32_1 = arith.constant 0 : i32
    return %c0_i32, %c0_i32_0 : i32, i32
  }
  func.func @transform_4(%arg0: i32) -> (i32, i32) {
    %c0_i32 = arith.constant 0 : i32
    %c0_i32_0 = arith.constant 0 : i32
    %c0_i32_1 = arith.constant 0 : i32
    return %c0_i32, %c0_i32_0 : i32, i32
  }
}

module attributes {stable_mosaic.version = 11 : i64} {
  func.func @scale_shift_relu_kernel(%arg0: i32, %arg1: memref<16x512xf32, #tpu.memory_space<vmem>>, %arg2: memref<1x512xf32, #tpu.memory_space<vmem>>, %arg3: memref<1x512xf32, #tpu.memory_space<vmem>>, %arg4: memref<16x512xbf16, #tpu.memory_space<vmem>>) attributes {dimension_semantics = [#tpu.dimension_semantics<parallel>], iteration_bounds = array<i64: 1>, scalar_prefetch = 0 : i64, scratch_operands = 0 : i64, tpu.core_type = #tpu.core_type<tc>, window_params = [{transform_indices = @transform_0, window_bounds = array<i64: 16, 512>}, {pipeline_mode = #tpu.pipeline_mode<synchronous>, transform_indices = @transform_1, window_bounds = array<i64: 1, 512>}, {pipeline_mode = #tpu.pipeline_mode<synchronous>, transform_indices = @transform_2, window_bounds = array<i64: 1, 512>}, {transform_indices = @transform_3, window_bounds = array<i64: 16, 512>}]} {
    %c0 = arith.constant 0 : index
    %c0_0 = arith.constant 0 : index
    %0 = vector.load %arg1[%c0, %c0_0] : memref<16x512xf32, #tpu.memory_space<vmem>>, vector<16x512xf32>
    %c0_1 = arith.constant 0 : index
    %c0_2 = arith.constant 0 : index
    %1 = vector.load %arg2[%c0_1, %c0_2] : memref<1x512xf32, #tpu.memory_space<vmem>>, vector<1x512xf32>
    %2 = vector.broadcast %1 : vector<1x512xf32> to vector<16x512xf32>
    %3 = arith.mulf %0, %2 : vector<16x512xf32>
    %c0_3 = arith.constant 0 : index
    %c0_4 = arith.constant 0 : index
    %4 = vector.load %arg3[%c0_3, %c0_4] : memref<1x512xf32, #tpu.memory_space<vmem>>, vector<1x512xf32>
    %5 = vector.broadcast %4 : vector<1x512xf32> to vector<16x512xf32>
    %6 = arith.addf %3, %5 : vector<16x512xf32>
    %cst = arith.constant 0.000000e+00 : f32
    %7 = vector.broadcast %cst : f32 to vector<16x512xf32>
    %8 = arith.maximumf %6, %7 : vector<16x512xf32>
    %9 = arith.truncf %8 : vector<16x512xf32> to vector<16x512xbf16>
    %c0_5 = arith.constant 0 : index
    %c0_6 = arith.constant 0 : index
    %10 = vector.load %arg4[%c0_5, %c0_6] : memref<16x512xbf16, #tpu.memory_space<vmem>>, vector<16x512xbf16>
    tpu.vector_store %arg4[%c0_5, %c0_6], %9 {strides = array<i32>} : memref<16x512xbf16, #tpu.memory_space<vmem>>, vector<16x512xbf16>,
    return
  }
  func.func @transform_0(%arg0: i32) -> (i32, i32) {
    %c0_i32 = arith.constant 0 : i32
    %c0_i32_0 = arith.constant 0 : i32
    return %arg0, %c0_i32 : i32, i32
  }
  func.func @transform_1(%arg0: i32) -> (i32, i32) {
    %c0_i32 = arith.constant 0 : i32
    %c0_i32_0 = arith.constant 0 : i32
    %c0_i32_1 = arith.constant 0 : i32
    return %c0_i32, %c0_i32_0 : i32, i32
  }
  func.func @transform_2(%arg0: i32) -> (i32, i32) {
    %c0_i32 = arith.constant 0 : i32
    %c0_i32_0 = arith.constant 0 : i32
    %c0_i32_1 = arith.constant 0 : i32
    return %c0_i32, %c0_i32_0 : i32, i32
  }
  func.func @transform_3(%arg0: i32) -> (i32, i32) {
    %c0_i32 = arith.constant 0 : i32
    %c0_i32_0 = arith.constant 0 : i32
    return %arg0, %c0_i32 : i32, i32
  }
}

module attributes {stable_mosaic.version = 11 : i64} {
  func.func @gemm_stats_kernel(%arg0: i32, %arg1: memref<128x384xbf16, #tpu.memory_space<vmem>>, %arg2: memref<384x128xbf16, #tpu.memory_space<vmem>>, %arg3: memref<128x128xf32, #tpu.memory_space<vmem>>, %arg4: memref<1x128xf32, #tpu.memory_space<vmem>>, %arg5: memref<1x128xf32, #tpu.memory_space<vmem>>) attributes {dimension_semantics = [#tpu.dimension_semantics<arbitrary>], iteration_bounds = array<i64: 1>, scalar_prefetch = 0 : i64, scratch_operands = 0 : i64, tpu.core_type = #tpu.core_type<tc>, window_params = [{transform_indices = @transform_0, window_bounds = array<i64: 128, 384>}, {pipeline_mode = #tpu.pipeline_mode<synchronous>, transform_indices = @transform_1, window_bounds = array<i64: 384, 128>}, {transform_indices = @transform_2, window_bounds = array<i64: 128, 128>}, {pipeline_mode = #tpu.pipeline_mode<synchronous>, transform_indices = @transform_3, window_bounds = array<i64: 1, 128>}, {pipeline_mode = #tpu.pipeline_mode<synchronous>, transform_indices = @transform_4, window_bounds = array<i64: 1, 128>}]} {
    %c0 = arith.constant 0 : index
    %c0_0 = arith.constant 0 : index
    %0 = vector.load %arg1[%c0, %c0_0] : memref<128x384xbf16, #tpu.memory_space<vmem>>, vector<128x384xbf16>
    %c0_1 = arith.constant 0 : index
    %c0_2 = arith.constant 0 : index
    %1 = vector.load %arg2[%c0_1, %c0_2] : memref<384x128xbf16, #tpu.memory_space<vmem>>, vector<384x128xbf16>
    %cst = arith.constant dense<0.000000e+00> : vector<128x128xf32>
    %2 = tpu.matmul %0, %1, %cst {dimension_numbers = #tpu.dot_dimension_numbers<[1], [0], [0], [1], [0, 0, 1, 1], [], []>} : vector<128x384xbf16>, vector<384x128xbf16>, vector<128x128xf32> -> vector<128x128xf32>
    %c0_3 = arith.constant 0 : index
    %c0_4 = arith.constant 0 : index
    %3 = vector.load %arg3[%c0_3, %c0_4] : memref<128x128xf32, #tpu.memory_space<vmem>>, vector<128x128xf32>
    tpu.vector_store %arg3[%c0_3, %c0_4], %2 {strides = array<i32>} : memref<128x128xf32, #tpu.memory_space<vmem>>, vector<128x128xf32>,
    %c0_i32 = arith.constant 0 : i32
    %4 = arith.cmpi eq, %arg0, %c0_i32 : i32
    %5 = arith.extui %4 : i1 to i32
    %c0_i32_5 = arith.constant 0 : i32
    %6 = arith.cmpi ne, %5, %c0_i32_5 : i32
    scf.if %6 {
      %cst_16 = arith.constant 0.000000e+00 : f32
      %18 = vector.broadcast %cst_16 : f32 to vector<1x128xf32>
      %c0_17 = arith.constant 0 : index
      %c0_18 = arith.constant 0 : index
      %19 = vector.load %arg4[%c0_17, %c0_18] : memref<1x128xf32, #tpu.memory_space<vmem>>, vector<1x128xf32>
      tpu.vector_store %arg4[%c0_17, %c0_18], %18 {strides = array<i32>} : memref<1x128xf32, #tpu.memory_space<vmem>>, vector<1x128xf32>,
      %cst_19 = arith.constant 0.000000e+00 : f32
      %20 = vector.broadcast %cst_19 : f32 to vector<1x128xf32>
      %c0_20 = arith.constant 0 : index
      %c0_21 = arith.constant 0 : index
      %21 = vector.load %arg5[%c0_20, %c0_21] : memref<1x128xf32, #tpu.memory_space<vmem>>, vector<1x128xf32>
      tpu.vector_store %arg5[%c0_20, %c0_21], %20 {strides = array<i32>} : memref<1x128xf32, #tpu.memory_space<vmem>>, vector<1x128xf32>,
    } else {
    }
    %c0_6 = arith.constant 0 : index
    %c0_7 = arith.constant 0 : index
    %7 = vector.load %arg4[%c0_6, %c0_7] : memref<1x128xf32, #tpu.memory_space<vmem>>, vector<1x128xf32>
    %cst_8 = arith.constant dense<0.000000e+00> : vector<128xf32>
    %8 = vector.multi_reduction <add>, %2, %cst_8 [0] : vector<128x128xf32> to vector<128xf32>
    %9 = vector.shape_cast %8 : vector<128xf32> to vector<1x128xf32>
    %10 = arith.addf %7, %9 : vector<1x128xf32>
    %c0_9 = arith.constant 0 : index
    %c0_10 = arith.constant 0 : index
    %11 = vector.load %arg4[%c0_9, %c0_10] : memref<1x128xf32, #tpu.memory_space<vmem>>, vector<1x128xf32>
    tpu.vector_store %arg4[%c0_9, %c0_10], %10 {strides = array<i32>} : memref<1x128xf32, #tpu.memory_space<vmem>>, vector<1x128xf32>,
    %c0_11 = arith.constant 0 : index
    %c0_12 = arith.constant 0 : index
    %12 = vector.load %arg5[%c0_11, %c0_12] : memref<1x128xf32, #tpu.memory_space<vmem>>, vector<1x128xf32>
    %13 = arith.mulf %2, %2 : vector<128x128xf32>
    %cst_13 = arith.constant dense<0.000000e+00> : vector<128xf32>
    %14 = vector.multi_reduction <add>, %13, %cst_13 [0] : vector<128x128xf32> to vector<128xf32>
    %15 = vector.shape_cast %14 : vector<128xf32> to vector<1x128xf32>
    %16 = arith.addf %12, %15 : vector<1x128xf32>
    %c0_14 = arith.constant 0 : index
    %c0_15 = arith.constant 0 : index
    %17 = vector.load %arg5[%c0_14, %c0_15] : memref<1x128xf32, #tpu.memory_space<vmem>>, vector<1x128xf32>
    tpu.vector_store %arg5[%c0_14, %c0_15], %16 {strides = array<i32>} : memref<1x128xf32, #tpu.memory_space<vmem>>, vector<1x128xf32>,
    return
  }
  func.func @transform_0(%arg0: i32) -> (i32, i32) {
    %c0_i32 = arith.constant 0 : i32
    %c0_i32_0 = arith.constant 0 : i32
    return %arg0, %c0_i32 : i32, i32
  }
  func.func @transform_1(%arg0: i32) -> (i32, i32) {
    %c0_i32 = arith.constant 0 : i32
    %c0_i32_0 = arith.constant 0 : i32
    %c0_i32_1 = arith.constant 0 : i32
    return %c0_i32, %c0_i32_0 : i32, i32
  }
  func.func @transform_2(%arg0: i32) -> (i32, i32) {
    %c0_i32 = arith.constant 0 : i32
    %c0_i32_0 = arith.constant 0 : i32
    return %arg0, %c0_i32 : i32, i32
  }
  func.func @transform_3(%arg0: i32) -> (i32, i32) {
    %c0_i32 = arith.constant 0 : i32
    %c0_i32_0 = arith.constant 0 : i32
    %c0_i32_1 = arith.constant 0 : i32
    return %c0_i32, %c0_i32_0 : i32, i32
  }
  func.func @transform_4(%arg0: i32) -> (i32, i32) {
    %c0_i32 = arith.constant 0 : i32
    %c0_i32_0 = arith.constant 0 : i32
    %c0_i32_1 = arith.constant 0 : i32
    return %c0_i32, %c0_i32_0 : i32, i32
  }
}

module attributes {stable_mosaic.version = 11 : i64} {
  func.func @scale_shift_relu_kernel(%arg0: i32, %arg1: memref<128x128xf32, #tpu.memory_space<vmem>>, %arg2: memref<1x128xf32, #tpu.memory_space<vmem>>, %arg3: memref<1x128xf32, #tpu.memory_space<vmem>>, %arg4: memref<128x128xbf16, #tpu.memory_space<vmem>>) attributes {dimension_semantics = [#tpu.dimension_semantics<parallel>], iteration_bounds = array<i64: 1>, scalar_prefetch = 0 : i64, scratch_operands = 0 : i64, tpu.core_type = #tpu.core_type<tc>, window_params = [{transform_indices = @transform_0, window_bounds = array<i64: 128, 128>}, {pipeline_mode = #tpu.pipeline_mode<synchronous>, transform_indices = @transform_1, window_bounds = array<i64: 1, 128>}, {pipeline_mode = #tpu.pipeline_mode<synchronous>, transform_indices = @transform_2, window_bounds = array<i64: 1, 128>}, {transform_indices = @transform_3, window_bounds = array<i64: 128, 128>}]} {
    %c0 = arith.constant 0 : index
    %c0_0 = arith.constant 0 : index
    %0 = vector.load %arg1[%c0, %c0_0] : memref<128x128xf32, #tpu.memory_space<vmem>>, vector<128x128xf32>
    %c0_1 = arith.constant 0 : index
    %c0_2 = arith.constant 0 : index
    %1 = vector.load %arg2[%c0_1, %c0_2] : memref<1x128xf32, #tpu.memory_space<vmem>>, vector<1x128xf32>
    %2 = vector.broadcast %1 : vector<1x128xf32> to vector<128x128xf32>
    %3 = arith.mulf %0, %2 : vector<128x128xf32>
    %c0_3 = arith.constant 0 : index
    %c0_4 = arith.constant 0 : index
    %4 = vector.load %arg3[%c0_3, %c0_4] : memref<1x128xf32, #tpu.memory_space<vmem>>, vector<1x128xf32>
    %5 = vector.broadcast %4 : vector<1x128xf32> to vector<128x128xf32>
    %6 = arith.addf %3, %5 : vector<128x128xf32>
    %cst = arith.constant 0.000000e+00 : f32
    %7 = vector.broadcast %cst : f32 to vector<128x128xf32>
    %8 = arith.maximumf %6, %7 : vector<128x128xf32>
    %9 = arith.truncf %8 : vector<128x128xf32> to vector<128x128xbf16>
    %c0_5 = arith.constant 0 : index
    %c0_6 = arith.constant 0 : index
    %10 = vector.load %arg4[%c0_5, %c0_6] : memref<128x128xbf16, #tpu.memory_space<vmem>>, vector<128x128xbf16>
    tpu.vector_store %arg4[%c0_5, %c0_6], %9 {strides = array<i32>} : memref<128x128xbf16, #tpu.memory_space<vmem>>, vector<128x128xbf16>,
    return
  }
  func.func @transform_0(%arg0: i32) -> (i32, i32) {
    %c0_i32 = arith.constant 0 : i32
    %c0_i32_0 = arith.constant 0 : i32
    return %arg0, %c0_i32 : i32, i32
  }
  func.func @transform_1(%arg0: i32) -> (i32, i32) {
    %c0_i32 = arith.constant 0 : i32
    %c0_i32_0 = arith.constant 0 : i32
    %c0_i32_1 = arith.constant 0 : i32
    return %c0_i32, %c0_i32_0 : i32, i32
  }
  func.func @transform_2(%arg0: i32) -> (i32, i32) {
    %c0_i32 = arith.constant 0 : i32
    %c0_i32_0 = arith.constant 0 : i32
    %c0_i32_1 = arith.constant 0 : i32
    return %c0_i32, %c0_i32_0 : i32, i32
  }
  func.func @transform_3(%arg0: i32) -> (i32, i32) {
    %c0_i32 = arith.constant 0 : i32
    %c0_i32_0 = arith.constant 0 : i32
    return %arg0, %c0_i32 : i32, i32
  }
}

module attributes {stable_mosaic.version = 11 : i64} {
  func.func @gemm_stats_kernel(%arg0: i32, %arg1: memref<256x256xbf16, #tpu.memory_space<vmem>>, %arg2: memref<256x128xbf16, #tpu.memory_space<vmem>>, %arg3: memref<256x128xf32, #tpu.memory_space<vmem>>, %arg4: memref<1x128xf32, #tpu.memory_space<vmem>>, %arg5: memref<1x128xf32, #tpu.memory_space<vmem>>) attributes {dimension_semantics = [#tpu.dimension_semantics<arbitrary>], iteration_bounds = array<i64: 2>, scalar_prefetch = 0 : i64, scratch_operands = 0 : i64, tpu.core_type = #tpu.core_type<tc>, window_params = [{transform_indices = @transform_0, window_bounds = array<i64: 256, 256>}, {pipeline_mode = #tpu.pipeline_mode<synchronous>, transform_indices = @transform_1, window_bounds = array<i64: 256, 128>}, {transform_indices = @transform_2, window_bounds = array<i64: 256, 128>}, {pipeline_mode = #tpu.pipeline_mode<synchronous>, transform_indices = @transform_3, window_bounds = array<i64: 1, 128>}, {pipeline_mode = #tpu.pipeline_mode<synchronous>, transform_indices = @transform_4, window_bounds = array<i64: 1, 128>}]} {
    %c0 = arith.constant 0 : index
    %c0_0 = arith.constant 0 : index
    %0 = vector.load %arg1[%c0, %c0_0] : memref<256x256xbf16, #tpu.memory_space<vmem>>, vector<256x256xbf16>
    %c0_1 = arith.constant 0 : index
    %c0_2 = arith.constant 0 : index
    %1 = vector.load %arg2[%c0_1, %c0_2] : memref<256x128xbf16, #tpu.memory_space<vmem>>, vector<256x128xbf16>
    %cst = arith.constant dense<0.000000e+00> : vector<256x128xf32>
    %2 = tpu.matmul %0, %1, %cst {dimension_numbers = #tpu.dot_dimension_numbers<[1], [0], [0], [1], [0, 0, 1, 1], [], []>} : vector<256x256xbf16>, vector<256x128xbf16>, vector<256x128xf32> -> vector<256x128xf32>
    %c0_3 = arith.constant 0 : index
    %c0_4 = arith.constant 0 : index
    %3 = vector.load %arg3[%c0_3, %c0_4] : memref<256x128xf32, #tpu.memory_space<vmem>>, vector<256x128xf32>
    tpu.vector_store %arg3[%c0_3, %c0_4], %2 {strides = array<i32>} : memref<256x128xf32, #tpu.memory_space<vmem>>, vector<256x128xf32>,
    %c0_i32 = arith.constant 0 : i32
    %4 = arith.cmpi eq, %arg0, %c0_i32 : i32
    %5 = arith.extui %4 : i1 to i32
    %c0_i32_5 = arith.constant 0 : i32
    %6 = arith.cmpi ne, %5, %c0_i32_5 : i32
    scf.if %6 {
      %cst_16 = arith.constant 0.000000e+00 : f32
      %18 = vector.broadcast %cst_16 : f32 to vector<1x128xf32>
      %c0_17 = arith.constant 0 : index
      %c0_18 = arith.constant 0 : index
      %19 = vector.load %arg4[%c0_17, %c0_18] : memref<1x128xf32, #tpu.memory_space<vmem>>, vector<1x128xf32>
      tpu.vector_store %arg4[%c0_17, %c0_18], %18 {strides = array<i32>} : memref<1x128xf32, #tpu.memory_space<vmem>>, vector<1x128xf32>,
      %cst_19 = arith.constant 0.000000e+00 : f32
      %20 = vector.broadcast %cst_19 : f32 to vector<1x128xf32>
      %c0_20 = arith.constant 0 : index
      %c0_21 = arith.constant 0 : index
      %21 = vector.load %arg5[%c0_20, %c0_21] : memref<1x128xf32, #tpu.memory_space<vmem>>, vector<1x128xf32>
      tpu.vector_store %arg5[%c0_20, %c0_21], %20 {strides = array<i32>} : memref<1x128xf32, #tpu.memory_space<vmem>>, vector<1x128xf32>,
    } else {
    }
    %c0_6 = arith.constant 0 : index
    %c0_7 = arith.constant 0 : index
    %7 = vector.load %arg4[%c0_6, %c0_7] : memref<1x128xf32, #tpu.memory_space<vmem>>, vector<1x128xf32>
    %cst_8 = arith.constant dense<0.000000e+00> : vector<128xf32>
    %8 = vector.multi_reduction <add>, %2, %cst_8 [0] : vector<256x128xf32> to vector<128xf32>
    %9 = vector.shape_cast %8 : vector<128xf32> to vector<1x128xf32>
    %10 = arith.addf %7, %9 : vector<1x128xf32>
    %c0_9 = arith.constant 0 : index
    %c0_10 = arith.constant 0 : index
    %11 = vector.load %arg4[%c0_9, %c0_10] : memref<1x128xf32, #tpu.memory_space<vmem>>, vector<1x128xf32>
    tpu.vector_store %arg4[%c0_9, %c0_10], %10 {strides = array<i32>} : memref<1x128xf32, #tpu.memory_space<vmem>>, vector<1x128xf32>,
    %c0_11 = arith.constant 0 : index
    %c0_12 = arith.constant 0 : index
    %12 = vector.load %arg5[%c0_11, %c0_12] : memref<1x128xf32, #tpu.memory_space<vmem>>, vector<1x128xf32>
    %13 = arith.mulf %2, %2 : vector<256x128xf32>
    %cst_13 = arith.constant dense<0.000000e+00> : vector<128xf32>
    %14 = vector.multi_reduction <add>, %13, %cst_13 [0] : vector<256x128xf32> to vector<128xf32>
    %15 = vector.shape_cast %14 : vector<128xf32> to vector<1x128xf32>
    %16 = arith.addf %12, %15 : vector<1x128xf32>
    %c0_14 = arith.constant 0 : index
    %c0_15 = arith.constant 0 : index
    %17 = vector.load %arg5[%c0_14, %c0_15] : memref<1x128xf32, #tpu.memory_space<vmem>>, vector<1x128xf32>
    tpu.vector_store %arg5[%c0_14, %c0_15], %16 {strides = array<i32>} : memref<1x128xf32, #tpu.memory_space<vmem>>, vector<1x128xf32>,
    return
  }
  func.func @transform_0(%arg0: i32) -> (i32, i32) {
    %c0_i32 = arith.constant 0 : i32
    %c0_i32_0 = arith.constant 0 : i32
    return %arg0, %c0_i32 : i32, i32
  }
  func.func @transform_1(%arg0: i32) -> (i32, i32) {
    %c0_i32 = arith.constant 0 : i32
    %c0_i32_0 = arith.constant 0 : i32
    %c0_i32_1 = arith.constant 0 : i32
    return %c0_i32, %c0_i32_0 : i32, i32
  }
  func.func @transform_2(%arg0: i32) -> (i32, i32) {
    %c0_i32 = arith.constant 0 : i32
    %c0_i32_0 = arith.constant 0 : i32
    return %arg0, %c0_i32 : i32, i32
  }
  func.func @transform_3(%arg0: i32) -> (i32, i32) {
    %c0_i32 = arith.constant 0 : i32
    %c0_i32_0 = arith.constant 0 : i32
    %c0_i32_1 = arith.constant 0 : i32
    return %c0_i32, %c0_i32_0 : i32, i32
  }
  func.func @transform_4(%arg0: i32) -> (i32, i32) {
    %c0_i32 = arith.constant 0 : i32
    %c0_i32_0 = arith.constant 0 : i32
    %c0_i32_1 = arith.constant 0 : i32
    return %c0_i32, %c0_i32_0 : i32, i32
  }
}

module attributes {stable_mosaic.version = 11 : i64} {
  func.func @scale_shift_relu_kernel(%arg0: i32, %arg1: memref<256x128xf32, #tpu.memory_space<vmem>>, %arg2: memref<1x128xf32, #tpu.memory_space<vmem>>, %arg3: memref<1x128xf32, #tpu.memory_space<vmem>>, %arg4: memref<256x128xbf16, #tpu.memory_space<vmem>>) attributes {dimension_semantics = [#tpu.dimension_semantics<parallel>], iteration_bounds = array<i64: 2>, scalar_prefetch = 0 : i64, scratch_operands = 0 : i64, tpu.core_type = #tpu.core_type<tc>, window_params = [{transform_indices = @transform_0, window_bounds = array<i64: 256, 128>}, {pipeline_mode = #tpu.pipeline_mode<synchronous>, transform_indices = @transform_1, window_bounds = array<i64: 1, 128>}, {pipeline_mode = #tpu.pipeline_mode<synchronous>, transform_indices = @transform_2, window_bounds = array<i64: 1, 128>}, {transform_indices = @transform_3, window_bounds = array<i64: 256, 128>}]} {
    %c0 = arith.constant 0 : index
    %c0_0 = arith.constant 0 : index
    %0 = vector.load %arg1[%c0, %c0_0] : memref<256x128xf32, #tpu.memory_space<vmem>>, vector<256x128xf32>
    %c0_1 = arith.constant 0 : index
    %c0_2 = arith.constant 0 : index
    %1 = vector.load %arg2[%c0_1, %c0_2] : memref<1x128xf32, #tpu.memory_space<vmem>>, vector<1x128xf32>
    %2 = vector.broadcast %1 : vector<1x128xf32> to vector<256x128xf32>
    %3 = arith.mulf %0, %2 : vector<256x128xf32>
    %c0_3 = arith.constant 0 : index
    %c0_4 = arith.constant 0 : index
    %4 = vector.load %arg3[%c0_3, %c0_4] : memref<1x128xf32, #tpu.memory_space<vmem>>, vector<1x128xf32>
    %5 = vector.broadcast %4 : vector<1x128xf32> to vector<256x128xf32>
    %6 = arith.addf %3, %5 : vector<256x128xf32>
    %cst = arith.constant 0.000000e+00 : f32
    %7 = vector.broadcast %cst : f32 to vector<256x128xf32>
    %8 = arith.maximumf %6, %7 : vector<256x128xf32>
    %9 = arith.truncf %8 : vector<256x128xf32> to vector<256x128xbf16>
    %c0_5 = arith.constant 0 : index
    %c0_6 = arith.constant 0 : index
    %10 = vector.load %arg4[%c0_5, %c0_6] : memref<256x128xbf16, #tpu.memory_space<vmem>>, vector<256x128xbf16>
    tpu.vector_store %arg4[%c0_5, %c0_6], %9 {strides = array<i32>} : memref<256x128xbf16, #tpu.memory_space<vmem>>, vector<256x128xbf16>,
    return
  }
  func.func @transform_0(%arg0: i32) -> (i32, i32) {
    %c0_i32 = arith.constant 0 : i32
    %c0_i32_0 = arith.constant 0 : i32
    return %arg0, %c0_i32 : i32, i32
  }
  func.func @transform_1(%arg0: i32) -> (i32, i32) {
    %c0_i32 = arith.constant 0 : i32
    %c0_i32_0 = arith.constant 0 : i32
    %c0_i32_1 = arith.constant 0 : i32
    return %c0_i32, %c0_i32_0 : i32, i32
  }
  func.func @transform_2(%arg0: i32) -> (i32, i32) {
    %c0_i32 = arith.constant 0 : i32
    %c0_i32_0 = arith.constant 0 : i32
    %c0_i32_1 = arith.constant 0 : i32
    return %c0_i32, %c0_i32_0 : i32, i32
  }
  func.func @transform_3(%arg0: i32) -> (i32, i32) {
    %c0_i32 = arith.constant 0 : i32
    %c0_i32_0 = arith.constant 0 : i32
    return %arg0, %c0_i32 : i32, i32
  }
}

module attributes {stable_mosaic.version = 11 : i64} {
  func.func @gemm_tanh_kernel(%arg0: i32, %arg1: memref<256x128xbf16, #tpu.memory_space<vmem>>, %arg2: memref<128x128xbf16, #tpu.memory_space<vmem>>, %arg3: memref<256x128xf32, #tpu.memory_space<vmem>>) attributes {dimension_semantics = [#tpu.dimension_semantics<parallel>], iteration_bounds = array<i64: 8>, scalar_prefetch = 0 : i64, scratch_operands = 0 : i64, tpu.core_type = #tpu.core_type<tc>, window_params = [{transform_indices = @transform_0, window_bounds = array<i64: 256, 128>}, {pipeline_mode = #tpu.pipeline_mode<synchronous>, transform_indices = @transform_1, window_bounds = array<i64: 128, 128>}, {transform_indices = @transform_2, window_bounds = array<i64: 256, 128>}]} {
    %c0 = arith.constant 0 : index
    %c0_0 = arith.constant 0 : index
    %0 = vector.load %arg1[%c0, %c0_0] : memref<256x128xbf16, #tpu.memory_space<vmem>>, vector<256x128xbf16>
    %c0_1 = arith.constant 0 : index
    %c0_2 = arith.constant 0 : index
    %1 = vector.load %arg2[%c0_1, %c0_2] : memref<128x128xbf16, #tpu.memory_space<vmem>>, vector<128x128xbf16>
    %cst = arith.constant dense<0.000000e+00> : vector<256x128xf32>
    %2 = tpu.matmul %0, %1, %cst {dimension_numbers = #tpu.dot_dimension_numbers<[1], [0], [0], [1], [0, 0, 1, 1], [], []>} : vector<256x128xbf16>, vector<128x128xbf16>, vector<256x128xf32> -> vector<256x128xf32>
    %3 = math.tanh %2 : vector<256x128xf32>
    %c0_3 = arith.constant 0 : index
    %c0_4 = arith.constant 0 : index
    %4 = vector.load %arg3[%c0_3, %c0_4] : memref<256x128xf32, #tpu.memory_space<vmem>>, vector<256x128xf32>
    tpu.vector_store %arg3[%c0_3, %c0_4], %3 {strides = array<i32>} : memref<256x128xf32, #tpu.memory_space<vmem>>, vector<256x128xf32>,
    return
  }
  func.func @transform_0(%arg0: i32) -> (i32, i32) {
    %c0_i32 = arith.constant 0 : i32
    %c0_i32_0 = arith.constant 0 : i32
    return %arg0, %c0_i32 : i32, i32
  }
  func.func @transform_1(%arg0: i32) -> (i32, i32) {
    %c0_i32 = arith.constant 0 : i32
    %c0_i32_0 = arith.constant 0 : i32
    %c0_i32_1 = arith.constant 0 : i32
    return %c0_i32, %c0_i32_0 : i32, i32
  }
  func.func @transform_2(%arg0: i32) -> (i32, i32) {
    %c0_i32 = arith.constant 0 : i32
    %c0_i32_0 = arith.constant 0 : i32
    return %arg0, %c0_i32 : i32, i32
  }
}

</mosaic_0001>

<llo_original>
// kernel: squeeze.54
$region0: #{squeeze.54}
  %s0 = inlined_call_operand.vmem [shape: f32[512], index: 0, kind: input, shape index: {}]
  %s1 = inlined_call_operand.vmem [shape: f32[16,32], index: 1, kind: output, shape index: {}]
  $region1: #{squeeze.54} parent=0
    #allocation0 [shape = 'u8[4096]{0}', space=vmem, size = 0x1000, scoped, tag = 'scoped mem for input reshape']
    %s3 = sshllo.u32 0, 4
    %v4 = vld [vmem:[%s0] sm:%s3]
    %5 = vst [vmem:[#allocation0] sm:%s3] %v4
    %v6 = vld [vmem:[#allocation0] sm:$0xf]
    %vm7 = vcmask 261120
    %8 = vst.msk [vmem:[%s1] ss:$4 sm:$0xf] %vm7, %v6
    %v9 = vld [vmem:[#allocation0] sm:$0xf]
    %10 = vrot.lane.b32.xlu0 %v9, 96
    %v11 = vpop.permute.xlu0 %10
    %vm12 = vcmask 261120
    %s13 = scalar_lea.vmem %s1, 1
    %14 = vst.msk [vmem:[%s13] ss:$4 sm:$0xf] %vm12, %v11
    %v15 = vld [vmem:[#allocation0] sm:$0xf]
    %16 = vrot.lane.b32.xlu0 %v15, 64
    %v17 = vpop.permute.xlu0 %16
    %vm18 = vcmask 261120
    %s19 = scalar_lea.vmem %s1, 2
    %20 = vst.msk [vmem:[%s19] ss:$4 sm:$0xf] %vm18, %v17
    %v21 = vld [vmem:[#allocation0] sm:$0xf]
    %22 = vrot.lane.b32.xlu0 %v21, 32
    %v23 = vpop.permute.xlu0 %22
    %vm24 = vcmask 261120
    %s25 = scalar_lea.vmem %s1, 3
    %26 = vst.msk [vmem:[%s25] ss:$4 sm:$0xf] %vm24, %v23

// kernel: tile.33
$region0: #{tile.33}
  #allocation0 [shape = 's32[1]{0}', space=sflag, size = 0x4, scoped, tag = 'scoped memory for tile.33']
  %s0 = inlined_call_operand.vmem [shape: f32[32], index: 0, kind: input, shape index: {}]
  %s1 = inlined_call_operand.vmem [shape: f32[16,32], index: 1, kind: output, shape index: {}]
  // Predicated region
  $region2: #{tile.33} parent=0 // pred_check
    _
  $region3: #{tile.33} parent=0 // pred_check_branch
    %3 = sbr.rel (0) target = $region5
  $region4: #{tile.33} parent=0 // pred_region
    _
  $region5: #{tile.33} parent=0 // pred_fallthru
    _
  %v4 = vld [vmem:[%s0] ss:$0 sm:$0xff]
  %5 = vst [vmem:[%s1] sm:$0xff] %v4
  %s6 = scalar_lea.vmem %s1, 8
  %7 = vst [vmem:[%s6] sm:$0xff] %v4

// kernel: wgan_generator_forward.8
$region0: #{wgan_generator_forward.8}
  #allocation0 [shape = 'u32[]', space=smem, size = 0x4, offset = 0x4, fixed_abs, tag = 'smem constant byte address 0x4 - core index']
  #allocation1 [shape = 'u32[144,128]{1,0:T(1,128)}', space=vmem, size = 0x12000, scoped, tag = 'internal scratch']
  %s0 = inlined_call_operand.vmem [shape: f32[16,512], index: 0, kind: input, shape index: {}]
  %s1 = inlined_call_operand.vmem [shape: f32[1,512], index: 1, kind: input, shape index: {}]
  %s2 = inlined_call_operand.vmem [shape: f32[1,512], index: 2, kind: input, shape index: {}]
  %s3 = inlined_call_operand.vmem [shape: bf16[16,512], index: 3, kind: output, shape index: {}]
  %s4 = sld [smem:[#allocation0]]
  $region22: #{wgan_generator_forward.8} parent=0
    _
  %s6 = ssub.s32 1, %s4
  %s7 = scalar_select 0, %s6, %s4
  // Predicated region
  $region2: #{wgan_generator_forward.8} parent=0 // pred_check
    _
  $region3: #{wgan_generator_forward.8} parent=0 // pred_check_branch
    %9 = sbr.rel (0) target = $region5
  $region4: #{wgan_generator_forward.8} parent=0 // pred_region
    _
  $region5: #{wgan_generator_forward.8} parent=0 // pred_fallthru
    _
  // Predicated region
  $region6: #{wgan_generator_forward.8} parent=0 // pred_check
    _
  $region7: #{wgan_generator_forward.8} parent=0 // pred_check_branch
    %11 = sbr.rel (0) target = $region9
  $region8: #{wgan_generator_forward.8} parent=0 // pred_region
    _
  $region9: #{wgan_generator_forward.8} parent=0 // pred_fallthru
    _
  // Predicated region
  $region10: #{wgan_generator_forward.8} parent=0 // pred_check
    _
  $region11: #{wgan_generator_forward.8} parent=0 // pred_check_branch
    %13 = sbr.rel (0) target = $region13
  $region12: #{wgan_generator_forward.8} parent=0 // pred_region
    _
  $region13: #{wgan_generator_forward.8} parent=0 // pred_fallthru
    _
  %v14 = vld [vmem:[%s0] sm:$0xff]
  %v15 = vld [vmem:[%s0 + $0x8] sm:$0xff]
  %v16 = vld [vmem:[%s0 + $0x10] sm:$0xff]
  %v17 = vld [vmem:[%s0 + $0x18] sm:$0xff]
  %v18 = vld [vmem:[%s0 + $0x20] sm:$0xff]
  %v19 = vld [vmem:[%s0 + $0x28] sm:$0xff]
  %v20 = vld [vmem:[%s0 + $0x30] sm:$0xff]
  %v21 = vld [vmem:[%s0 + $0x38] sm:$0xff]
  %v22 = vld [vmem:[%s1] sm:$0xf]
  %v24 = vlaneseq
  %v25 = vshrl.u32 %v24, 7
  %v26 = vsub.s32 0, %v25
  %v27 = vrot.slane %v22, %v26
  %v28 = vlaneseq
  %v29 = vshrl.u32 %v28, 7
  %v30 = vsub.s32 1, %v29
  %v31 = vrot.slane %v22, %v30
  %v32 = vlaneseq
  %v33 = vshrl.u32 %v32, 7
  %v34 = vsub.s32 2, %v33
  %v35 = vrot.slane %v22, %v34
  %v36 = vlaneseq
  %v37 = vshrl.u32 %v36, 7
  %v38 = vsub.s32 3, %v37
  %v39 = vrot.slane %v22, %v38
  %v44 = vmul.f32 %v14, %v27
  %v45 = vmul.f32 %v15, %v31
  %v46 = vmul.f32 %v16, %v35
  %v47 = vmul.f32 %v17, %v39
  %v48 = vmul.f32 %v18, %v27
  %v49 = vmul.f32 %v19, %v31
  %v50 = vmul.f32 %v20, %v35
  %v51 = vmul.f32 %v21, %v39
  %v52 = vld [vmem:[%s2] sm:$0xf]
  %v54 = vlaneseq
  %v55 = vshrl.u32 %v54, 7
  %v56 = vsub.s32 0, %v55
  %v57 = vrot.slane %v52, %v56
  %v58 = vlaneseq
  %v59 = vshrl.u32 %v58, 7
  %v60 = vsub.s32 1, %v59
  %v61 = vrot.slane %v52, %v60
  %v62 = vlaneseq
  %v63 = vshrl.u32 %v62, 7
  %v64 = vsub.s32 2, %v63
  %v65 = vrot.slane %v52, %v64
  %v66 = vlaneseq
  %v67 = vshrl.u32 %v66, 7
  %v68 = vsub.s32 3, %v67
  %v69 = vrot.slane %v52, %v68
  %v74 = vadd.f32 %v44, %v57
  %v75 = vadd.f32 %v45, %v61
  %v76 = vadd.f32 %v46, %v65
  %v77 = vadd.f32 %v47, %v69
  %v78 = vadd.f32 %v48, %v57
  %v79 = vadd.f32 %v49, %v61
  %v80 = vadd.f32 %v50, %v65
  %v81 = vadd.f32 %v51, %v69
  %v82 = vmax.f32 %v74, 0.0
  %v83 = vmax.f32 %v75, 0.0
  %v84 = vmax.f32 %v76, 0.0
  %v85 = vmax.f32 %v77, 0.0
  %v86 = vmax.f32 %v78, 0.0
  %v87 = vmax.f32 %v79, 0.0
  %v88 = vmax.f32 %v80, 0.0
  %v89 = vmax.f32 %v81, 0.0
  %v90 = vpack.c.bf16 %v86, %v82
  %v91 = vpack.c.bf16 %v87, %v83
  %v92 = vpack.c.bf16 %v88, %v84
  %v93 = vpack.c.bf16 %v89, %v85
  %v98 = vunpack.c.l.b16 %v90
  %v99 = vunpack.c.l.b16 %v91
  %v100 = vunpack.c.l.b16 %v92
  %v101 = vunpack.c.l.b16 %v93
  %v102 = vunpack.c.h.b16 %v90
  %v103 = vunpack.c.h.b16 %v91
  %v104 = vunpack.c.h.b16 %v92
  %v105 = vunpack.c.h.b16 %v93
  %v106 = vpack.c.b16 %v99, %v98
  %v107 = vpack.c.b16 %v101, %v100
  %v108 = vpack.c.b16 %v103, %v102
  %v109 = vpack.c.b16 %v105, %v104
  %114 = vst [vmem:[%s3] sm:$0xff] %v106
  %115 = vst [vmem:[%s3 + $0x8] sm:$0xff] %v107
  %116 = vst [vmem:[%s3 + $0x10] sm:$0xff] %v108
  %117 = vst [vmem:[%s3 + $0x18] sm:$0xff] %v109
  // Predicated region
  $region14: #{wgan_generator_forward.8} parent=0 // pred_check
    _
  $region15: #{wgan_generator_forward.8} parent=0 // pred_check_branch
    %119 = sbr.rel (0) target = $region17
  $region16: #{wgan_generator_forward.8} parent=0 // pred_region
    _
  $region17: #{wgan_generator_forward.8} parent=0 // pred_fallthru
    _
  // Predicated region
  $region18: #{wgan_generator_forward.8} parent=0 // pred_check
    _
  $region19: #{wgan_generator_forward.8} parent=0 // pred_check_branch
    %121 = sbr.rel (0) target = $region21
  $region20: #{wgan_generator_forward.8} parent=0 // pred_region
    _
  $region21: #{wgan_generator_forward.8} parent=0 // pred_fallthru
    _

// kernel: wgan_generator_forward.7
$region0: #{wgan_generator_forward.7}
  #allocation0 [shape = 'u32[]', space=smem, size = 0x4, offset = 0x4, fixed_abs, tag = 'smem constant byte address 0x4 - core index']
  #allocation1 [shape = 'u32[144,128]{1,0:T(1,128)}', space=vmem, size = 0x12000, scoped, tag = 'internal scratch']
  %s0 = inlined_call_operand.vmem [shape: bf16[16,128], index: 0, kind: input, shape index: {}]
  %s1 = inlined_call_operand.vmem [shape: bf16[128,512], index: 1, kind: input, shape index: {}]
  %s2 = inlined_call_operand.vmem [shape: f32[16,512], index: 2, kind: output, shape index: {0}]
  %s3 = inlined_call_operand.vmem [shape: f32[1,512], index: 3, kind: output, shape index: {1}]
  %s4 = inlined_call_operand.vmem [shape: f32[1,512], index: 4, kind: output, shape index: {2}]
  %5 = xla_tuple %s2, %s3, %s4
  %s6 = sld [smem:[#allocation0]]
  $region38: #{wgan_generator_forward.7} parent=0
    _
  %s8 = ssub.s32 1, %s6
  %s9 = scalar_select 0, %s8, %s6
  // Predicated region
  $region2: #{wgan_generator_forward.7} parent=0 // pred_check
    _
  $region3: #{wgan_generator_forward.7} parent=0 // pred_check_branch
    %11 = sbr.rel (0) target = $region5
  $region4: #{wgan_generator_forward.7} parent=0 // pred_region
    _
  $region5: #{wgan_generator_forward.7} parent=0 // pred_fallthru
    _
  // Predicated region
  $region6: #{wgan_generator_forward.7} parent=0 // pred_check
    _
  $region7: #{wgan_generator_forward.7} parent=0 // pred_check_branch
    %13 = sbr.rel (0) target = $region9
  $region8: #{wgan_generator_forward.7} parent=0 // pred_region
    _
  $region9: #{wgan_generator_forward.7} parent=0 // pred_fallthru
    _
  %v15 = vld [vmem:[%s0] sm:$0xf]
  %v16 = vld [vmem:[%s0 + $0x4] sm:$0xf]
  %v17 = vld [vmem:[%s1] sm:$0xff]
  %v18 = vld [vmem:[%s1 + $0x8] sm:$0xff]
  %v19 = vld [vmem:[%s1 + $0x10] sm:$0xff]
  %v20 = vld [vmem:[%s1 + $0x18] sm:$0xff]
  %v21 = vld [vmem:[%s1 + $0x20] sm:$0xff]
  %v22 = vld [vmem:[%s1 + $0x28] sm:$0xff]
  %v23 = vld [vmem:[%s1 + $0x30] sm:$0xff]
  %v24 = vld [vmem:[%s1 + $0x38] sm:$0xff]
  %v25 = vld [vmem:[%s1 + $0x40] sm:$0xff]
  %v26 = vld [vmem:[%s1 + $0x48] sm:$0xff]
  %v27 = vld [vmem:[%s1 + $0x50] sm:$0xff]
  %v28 = vld [vmem:[%s1 + $0x58] sm:$0xff]
  %v29 = vld [vmem:[%s1 + $0x60] sm:$0xff]
  %v30 = vld [vmem:[%s1 + $0x68] sm:$0xff]
  %v31 = vld [vmem:[%s1 + $0x70] sm:$0xff]
  %v32 = vld [vmem:[%s1 + $0x78] sm:$0xff]
  %v33 = vld [vmem:[%s1 + $0x80] sm:$0xff]
  %v34 = vld [vmem:[%s1 + $0x88] sm:$0xff]
  %v35 = vld [vmem:[%s1 + $0x90] sm:$0xff]
  %v36 = vld [vmem:[%s1 + $0x98] sm:$0xff]
  %v37 = vld [vmem:[%s1 + $0xa0] sm:$0xff]
  %v38 = vld [vmem:[%s1 + $0xa8] sm:$0xff]
  %v39 = vld [vmem:[%s1 + $0xb0] sm:$0xff]
  %v40 = vld [vmem:[%s1 + $0xb8] sm:$0xff]
  %v41 = vld [vmem:[%s1 + $0xc0] sm:$0xff]
  %v42 = vld [vmem:[%s1 + $0xc8] sm:$0xff]
  %v43 = vld [vmem:[%s1 + $0xd0] sm:$0xff]
  %v44 = vld [vmem:[%s1 + $0xd8] sm:$0xff]
  %v45 = vld [vmem:[%s1 + $0xe0] sm:$0xff]
  %v46 = vld [vmem:[%s1 + $0xe8] sm:$0xff]
  %v47 = vld [vmem:[%s1 + $0xf0] sm:$0xff]
  %v48 = vld [vmem:[%s1 + $0xf8] sm:$0xff]
  %v51 = vunpack.c.l.b16 %v15
  %v52 = vunpack.c.l.b16 %v16
  %v53 = vpack.c.b16 %v52, %v51
  %v87 = vunpack.c.l.b16 %v17
  %v88 = vunpack.c.h.b16 %v17
  %v89 = vunpack.c.l.b16 %v18
  %v90 = vunpack.c.h.b16 %v18
  %v91 = vunpack.c.l.b16 %v19
  %v92 = vunpack.c.h.b16 %v19
  %v93 = vunpack.c.l.b16 %v20
  %v94 = vunpack.c.h.b16 %v20
  %v95 = vunpack.c.l.b16 %v21
  %v96 = vunpack.c.h.b16 %v21
  %v97 = vunpack.c.l.b16 %v22
  %v98 = vunpack.c.h.b16 %v22
  %v99 = vunpack.c.l.b16 %v23
  %v100 = vunpack.c.h.b16 %v23
  %v101 = vunpack.c.l.b16 %v24
  %v102 = vunpack.c.h.b16 %v24
  %v103 = vunpack.c.l.b16 %v25
  %v104 = vunpack.c.h.b16 %v25
  %v105 = vunpack.c.l.b16 %v26
  %v106 = vunpack.c.h.b16 %v26
  %v107 = vunpack.c.l.b16 %v27
  %v108 = vunpack.c.h.b16 %v27
  %v109 = vunpack.c.l.b16 %v28
  %v110 = vunpack.c.h.b16 %v28
  %v111 = vunpack.c.l.b16 %v29
  %v112 = vunpack.c.h.b16 %v29
  %v113 = vunpack.c.l.b16 %v30
  %v114 = vunpack.c.h.b16 %v30
  %v115 = vunpack.c.l.b16 %v31
  %v116 = vunpack.c.h.b16 %v31
  %v117 = vunpack.c.l.b16 %v32
  %v118 = vunpack.c.h.b16 %v32
  %v119 = vunpack.c.l.b16 %v33
  %v120 = vunpack.c.h.b16 %v33
  %v121 = vunpack.c.l.b16 %v34
  %v122 = vunpack.c.h.b16 %v34
  %v123 = vunpack.c.l.b16 %v35
  %v124 = vunpack.c.h.b16 %v35
  %v125 = vunpack.c.l.b16 %v36
  %v126 = vunpack.c.h.b16 %v36
  %v127 = vunpack.c.l.b16 %v37
  %v128 = vunpack.c.h.b16 %v37
  %v129 = vunpack.c.l.b16 %v38
  %v130 = vunpack.c.h.b16 %v38
  %v131 = vunpack.c.l.b16 %v39
  %v132 = vunpack.c.h.b16 %v39
  %v133 = vunpack.c.l.b16 %v40
  %v134 = vunpack.c.h.b16 %v40
  %v135 = vunpack.c.l.b16 %v41
  %v136 = vunpack.c.h.b16 %v41
  %v137 = vunpack.c.l.b16 %v42
  %v138 = vunpack.c.h.b16 %v42
  %v139 = vunpack.c.l.b16 %v43
  %v140 = vunpack.c.h.b16 %v43
  %v141 = vunpack.c.l.b16 %v44
  %v142 = vunpack.c.h.b16 %v44
  %v143 = vunpack.c.l.b16 %v45
  %v144 = vunpack.c.h.b16 %v45
  %v145 = vunpack.c.l.b16 %v46
  %v146 = vunpack.c.h.b16 %v46
  %v147 = vunpack.c.l.b16 %v47
  %v148 = vunpack.c.h.b16 %v47
  %v149 = vunpack.c.l.b16 %v48
  %v150 = vunpack.c.h.b16 %v48
  %v151 = vpack.c.b16 %v91, %v87
  %v152 = vpack.c.b16 %v92, %v88
  %v153 = vpack.c.b16 %v93, %v89
  %v154 = vpack.c.b16 %v94, %v90
  %v155 = vpack.c.b16 %v99, %v95
  %v156 = vpack.c.b16 %v100, %v96
  %v157 = vpack.c.b16 %v101, %v97
  %v158 = vpack.c.b16 %v102, %v98
  %v159 = vpack.c.b16 %v107, %v103
  %v160 = vpack.c.b16 %v108, %v104
  %v161 = vpack.c.b16 %v109, %v105
  %v162 = vpack.c.b16 %v110, %v106
  %v163 = vpack.c.b16 %v115, %v111
  %v164 = vpack.c.b16 %v116, %v112
  %v165 = vpack.c.b16 %v117, %v113
  %v166 = vpack.c.b16 %v118, %v114
  %v167 = vpack.c.b16 %v123, %v119
  %v168 = vpack.c.b16 %v124, %v120
  %v169 = vpack.c.b16 %v125, %v121
  %v170 = vpack.c.b16 %v126, %v122
  %v171 = vpack.c.b16 %v131, %v127
  %v172 = vpack.c.b16 %v132, %v128
  %v173 = vpack.c.b16 %v133, %v129
  %v174 = vpack.c.b16 %v134, %v130
  %v175 = vpack.c.b16 %v139, %v135
  %v176 = vpack.c.b16 %v140, %v136
  %v177 = vpack.c.b16 %v141, %v137
  %v178 = vpack.c.b16 %v142, %v138
  %v179 = vpack.c.b16 %v147, %v143
  %v180 = vpack.c.b16 %v148, %v144
  %v181 = vpack.c.b16 %v149, %v145
  %v182 = vpack.c.b16 %v150, %v146
  %215 = vmatprep.subr.bf16.mxu0 %v152
  %216 = vmatpush1.bf16.msra.mxu0 %v151
  %217 = vmatprep.subr.bf16.mxu0 %v156
  %218 = vmatpush1.bf16.msra.mxu0 %v155
  %219 = vmatprep.subr.bf16.mxu0 %v160
  %220 = vmatpush1.bf16.msra.mxu0 %v159
  %221 = vmatprep.subr.bf16.mxu0 %v164
  %222 = vmatpush1.bf16.msra.mxu0 %v163
  %223 = vmatprep.subr.bf16.mxu0 %v168
  %224 = vmatpush1.bf16.msra.mxu0 %v167
  %225 = vmatprep.subr.bf16.mxu0 %v172
  %226 = vmatpush1.bf16.msra.mxu0 %v171
  %227 = vmatprep.subr.bf16.mxu0 %v176
  %228 = vmatpush1.bf16.msra.mxu0 %v175
  %229 = vmatprep.subr.bf16.mxu0 %v180
  %230 = vmatpush1.bf16.msra.mxu0 %v179
  %231 = vmatprep.subr.bf16.mxu0 0
  %232 = vmatpush1.bf16.msra.mxu0 0
  %233 = vmatprep.subr.bf16.mxu0 0
  %234 = vmatpush1.bf16.msra.mxu0 0
  %235 = vmatprep.subr.bf16.mxu0 0
  %236 = vmatpush1.bf16.msra.mxu0 0
  %237 = vmatprep.subr.bf16.mxu0 0
  %238 = vmatpush1.bf16.msra.mxu0 0
  %239 = vmatprep.subr.bf16.mxu0 0
  %240 = vmatpush1.bf16.msra.mxu0 0
  %241 = vmatprep.subr.bf16.mxu0 0
  %242 = vmatpush1.bf16.msra.mxu0 0
  %243 = vmatprep.subr.bf16.mxu0 0
  %244 = vmatpush1.bf16.msra.mxu0 0
  %245 = vmatprep.subr.bf16.mxu0 0
  %246 = vmatpush1.bf16.msra.mxu0 0
  %247 = vmatprep.mubr.bf16.mxu0 0
  %248 = vmatmul.mubr.bf16.gmra.mrb[0].mxu0 %v53
  %v249 = vpop.f32.mrb[0].mxu0
  %v250 = vadd.f32 0.0, %v249
  %v251 = vpop.f32.mrb[0].mxu0
  %v252 = vadd.f32 0.0, %v251
  %v253 = vpop.f32.mrb[0].mxu0
  %v254 = vadd.f32 0.0, %v253
  %v255 = vpop.f32.mrb[0].mxu0
  %v256 = vadd.f32 0.0, %v255
  %257 = vdwg.mxu0
  %258 = vmatprep.subr.bf16.mxu0 %v154
  %259 = vmatpush1.bf16.msra.mxu0 %v153
  %260 = vmatprep.subr.bf16.mxu0 %v158
  %261 = vmatpush1.bf16.msra.mxu0 %v157
  %262 = vmatprep.subr.bf16.mxu0 %v162
  %263 = vmatpush1.bf16.msra.mxu0 %v161
  %264 = vmatprep.subr.bf16.mxu0 %v166
  %265 = vmatpush1.bf16.msra.mxu0 %v165
  %266 = vmatprep.subr.bf16.mxu0 %v170
  %267 = vmatpush1.bf16.msra.mxu0 %v169
  %268 = vmatprep.subr.bf16.mxu0 %v174
  %269 = vmatpush1.bf16.msra.mxu0 %v173
  %270 = vmatprep.subr.bf16.mxu0 %v178
  %271 = vmatpush1.bf16.msra.mxu0 %v177
  %272 = vmatprep.subr.bf16.mxu0 %v182
  %273 = vmatpush1.bf16.msra.mxu0 %v181
  %274 = vmatprep.subr.bf16.mxu0 0
  %275 = vmatpush1.bf16.msra.mxu0 0
  %276 = vmatprep.subr.bf16.mxu0 0
  %277 = vmatpush1.bf16.msra.mxu0 0
  %278 = vmatprep.subr.bf16.mxu0 0
  %279 = vmatpush1.bf16.msra.mxu0 0
  %280 = vmatprep.subr.bf16.mxu0 0
  %281 = vmatpush1.bf16.msra.mxu0 0
  %282 = vmatprep.subr.bf16.mxu0 0
  %283 = vmatpush1.bf16.msra.mxu0 0
  %284 = vmatprep.subr.bf16.mxu0 0
  %285 = vmatpush1.bf16.msra.mxu0 0
  %286 = vmatprep.subr.bf16.mxu0 0
  %287 = vmatpush1.bf16.msra.mxu0 0
  %288 = vmatprep.subr.bf16.mxu0 0
  %289 = vmatpush1.bf16.msra.mxu0 0
  %290 = vmatprep.mubr.bf16.mxu0 0
  %291 = vmatmul.mubr.bf16.gmra.mrb[0].mxu0 %v53
  %v292 = vpop.f32.mrb[0].mxu0
  %v293 = vadd.f32 0.0, %v292
  %v294 = vpop.f32.mrb[0].mxu0
  %v295 = vadd.f32 0.0, %v294
  %v296 = vpop.f32.mrb[0].mxu0
  %v297 = vadd.f32 0.0, %v296
  %v298 = vpop.f32.mrb[0].mxu0
  %v299 = vadd.f32 0.0, %v298
  %300 = vdwg.mxu0
  %301 = vst [vmem:[%s2] sm:$0xff] %v250
  %302 = vst [vmem:[%s2 + $0x8] sm:$0xff] %v252
  %303 = vst [vmem:[%s2 + $0x10] sm:$0xff] %v293
  %304 = vst [vmem:[%s2 + $0x18] sm:$0xff] %v295
  %305 = vst [vmem:[%s2 + $0x20] sm:$0xff] %v254
  %306 = vst [vmem:[%s2 + $0x28] sm:$0xff] %v256
  %307 = vst [vmem:[%s2 + $0x30] sm:$0xff] %v297
  %308 = vst [vmem:[%s2 + $0x38] sm:$0xff] %v299
  %p309 = scmp.eq.s32.totalorder 0, 0
  // Predicated region
  $region10: #{wgan_generator_forward.7} parent=0 // pred_check
    %p310 = pneg %p309
  $region11: #{wgan_generator_forward.7} parent=0 // pred_check_branch
    %312 = sbr.rel (%p310) target = $region13
  $region12: #{wgan_generator_forward.7} parent=0 // pred_region
    %v313 = vlaneseq
    %vm314 = vcmp.ge.s32.totalorder %v313, 0
    %vm315 = vcmp.lt.s32.totalorder %v313, 512
    %vm316 = vmand %vm314, %vm315
    %317 = vst.msk [vmem:[%s3] sm:$0xf] %vm316, 0.0
    %318 = vst.msk [vmem:[%s4] sm:$0xf] %vm316, 0.0
  $region13: #{wgan_generator_forward.7} parent=0 // pred_fallthru
    _
  %v319 = vld [vmem:[%s3] sm:$0xf]
  %v320 = vadd.f32 %v250, %v254
  %v321 = vrot.slane %v320, 4
  %v322 = vadd.f32 %v320, %v321
  %v323 = vrot.slane %v322, 2
  %v324 = vadd.f32 %v322, %v323
  %v325 = vrot.slane %v324, 1
  %v326 = vadd.f32 %v324, %v325
  %v327 = vadd.f32 %v252, %v256
  %v328 = vrot.slane %v327, 4
  %v329 = vadd.f32 %v327, %v328
  %v330 = vrot.slane %v329, 2
  %v331 = vadd.f32 %v329, %v330
  %v332 = vrot.slane %v331, 1
  %v333 = vadd.f32 %v331, %v332
  %v334 = vadd.f32 %v293, %v297
  %v335 = vrot.slane %v334, 4
  %v336 = vadd.f32 %v334, %v335
  %v337 = vrot.slane %v336, 2
  %v338 = vadd.f32 %v336, %v337
  %v339 = vrot.slane %v338, 1
  %v340 = vadd.f32 %v338, %v339
  %v341 = vadd.f32 %v295, %v299
  %v342 = vrot.slane %v341, 4
  %v343 = vadd.f32 %v341, %v342
  %v344 = vrot.slane %v343, 2
  %v345 = vadd.f32 %v343, %v344
  %v346 = vrot.slane %v345, 1
  %v347 = vadd.f32 %v345, %v346
  %v352 = vcombine.low %v326, %v333
  %v353 = vcombine.low %v340, %v347
  %v355 = vunpack.c.l.s4 1966171168
  %v356 = vunpack.c.0.s8 %v355
  %v357 = vlaneseq
  %v358 = vshrl.u32 %v357, 7
  %v359 = vsub.s32 %v356, %v358
  %v360 = vrot.slane %v352, %v359
  %v362 = vunpack.c.l.s4 1966171168
  %v363 = vunpack.c.0.s8 %v362
  %v364 = vlaneseq
  %v365 = vshrl.u32 %v364, 7
  %v366 = vsub.s32 %v363, %v365
  %v367 = vrot.slane %v353, %v366
  %v368 = vcombine.low %v360, %v367
  %v370 = vunpack.c.l.s4 1966171168
  %v371 = vunpack.c.0.s8 %v370
  %v372 = vlaneseq
  %v373 = vshrl.u32 %v372, 7
  %v374 = vsub.s32 %v371, %v373
  %v375 = vrot.slane %v368, %v374
  %v377 = vadd.f32 %v319, %v375
  %v378 = vlaneseq
  %vm379 = vcmp.ge.s32.totalorder %v378, 0
  %vm380 = vcmp.lt.s32.totalorder %v378, 512
  %vm381 = vmand %vm379, %vm380
  %382 = vst.msk [vmem:[%s3] sm:$0xf] %vm381, %v377
  %v383 = vld [vmem:[%s4] sm:$0xf]
  %v384 = vmul.f32 %v250, %v250
  %v385 = vmul.f32 %v252, %v252
  %v386 = vmul.f32 %v293, %v293
  %v387 = vmul.f32 %v295, %v295
  %v388 = vmul.f32 %v254, %v254
  %v389 = vmul.f32 %v256, %v256
  %v390 = vmul.f32 %v297, %v297
  %v391 = vmul.f32 %v299, %v299
  %v392 = vadd.f32 %v384, %v388
  %v393 = vrot.slane %v392, 4
  %v394 = vadd.f32 %v392, %v393
  %v395 = vrot.slane %v394, 2
  %v396 = vadd.f32 %v394, %v395
  %v397 = vrot.slane %v396, 1
  %v398 = vadd.f32 %v396, %v397
  %v399 = vadd.f32 %v385, %v389
  %v400 = vrot.slane %v399, 4
  %v401 = vadd.f32 %v399, %v400
  %v402 = vrot.slane %v401, 2
  %v403 = vadd.f32 %v401, %v402
  %v404 = vrot.slane %v403, 1
  %v405 = vadd.f32 %v403, %v404
  %v406 = vadd.f32 %v386, %v390
  %v407 = vrot.slane %v406, 4
  %v408 = vadd.f32 %v406, %v407
  %v409 = vrot.slane %v408, 2
  %v410 = vadd.f32 %v408, %v409
  %v411 = vrot.slane %v410, 1
  %v412 = vadd.f32 %v410, %v411
  %v413 = vadd.f32 %v387, %v391
  %v414 = vrot.slane %v413, 4
  %v415 = vadd.f32 %v413, %v414
  %v416 = vrot.slane %v415, 2
  %v417 = vadd.f32 %v415, %v416
  %v418 = vrot.slane %v417, 1
  %v419 = vadd.f32 %v417, %v418
  %v424 = vcombine.low %v398, %v405
  %v425 = vcombine.low %v412, %v419
  %v427 = vunpack.c.l.s4 1966171168
  %v428 = vunpack.c.0.s8 %v427
  %v429 = vlaneseq
  %v430 = vshrl.u32 %v429, 7
  %v431 = vsub.s32 %v428, %v430
  %v432 = vrot.slane %v424, %v431
  %v434 = vunpack.c.l.s4 1966171168
  %v435 = vunpack.c.0.s8 %v434
  %v436 = vlaneseq
  %v437 = vshrl.u32 %v436, 7
  %v438 = vsub.s32 %v435, %v437
  %v439 = vrot.slane %v425, %v438
  %v440 = vcombine.low %v432, %v439
  %v442 = vunpack.c.l.s4 1966171168
  %v443 = vunpack.c.0.s8 %v442
  %v444 = vlaneseq
  %v445 = vshrl.u32 %v444, 7
  %v446 = vsub.s32 %v443, %v445
  %v447 = vrot.slane %v440, %v446
  %v449 = vadd.f32 %v383, %v447
  %450 = vst.msk [vmem:[%s4] sm:$0xf] %vm381, %v449
  // Predicated region
  $region14: #{wgan_generator_forward.7} parent=0 // pred_check
    _
  $region15: #{wgan_generator_forward.7} parent=0 // pred_check_branch
    %452 = sbr.rel (0) target = $region17
  $region16: #{wgan_generator_forward.7} parent=0 // pred_region
    _
  $region17: #{wgan_generator_forward.7} parent=0 // pred_fallthru
    _
  // Predicated region
  $region18: #{wgan_generator_forward.7} parent=0 // pred_check
    _
  $region19: #{wgan_generator_forward.7} parent=0 // pred_check_branch
    %454 = sbr.rel (0) target = $region21
  $region20: #{wgan_generator_forward.7} parent=0 // pred_region
    _
  $region21: #{wgan_generator_forward.7} parent=0 // pred_fallthru
    _
  // Predicated region
  $region22: #{wgan_generator_forward.7} parent=0 // pred_check
    _
  $region23: #{wgan_generator_forward.7} parent=0 // pred_check_branch
    %456 = sbr.rel (0) target = $region25
  $region24: #{wgan_generator_forward.7} parent=0 // pred_region
    _
  $region25: #{wgan_generator_forward.7} parent=0 // pred_fallthru
    _
  // Predicated region
  $region26: #{wgan_generator_forward.7} parent=0 // pred_check
    _
  $region27: #{wgan_generator_forward.7} parent=0 // pred_check_branch
    %458 = sbr.rel (0) target = $region29
  $region28: #{wgan_generator_forward.7} parent=0 // pred_region
    _
  $region29: #{wgan_generator_forward.7} parent=0 // pred_fallthru
    _
  // Predicated region
  $region30: #{wgan_generator_forward.7} parent=0 // pred_check
    _
  $region31: #{wgan_generator_forward.7} parent=0 // pred_check_branch
    %460 = sbr.rel (0) target = $region33
  $region32: #{wgan_generator_forward.7} parent=0 // pred_region
    _
  $region33: #{wgan_generator_forward.7} parent=0 // pred_fallthru
    _
  // Predicated region
  $region34: #{wgan_generator_forward.7} parent=0 // pred_check
    _
  $region35: #{wgan_generator_forward.7} parent=0 // pred_check_branch
    %462 = sbr.rel (0) target = $region37
  $region36: #{wgan_generator_forward.7} parent=0 // pred_region
    _
  $region37: #{wgan_generator_forward.7} parent=0 // pred_fallthru
    _

// kernel: squeeze.72
$region0: #{squeeze.72}
  %s0 = inlined_call_operand.vmem [shape: f32[64], index: 0, kind: input, shape index: {}]
  %s1 = inlined_call_operand.vmem [shape: f32[4,16], index: 1, kind: output, shape index: {}]
  $region1: #{squeeze.72} parent=0
    #allocation0 [shape = 'u8[4096]{0}', space=vmem, size = 0x1000, scoped, tag = 'scoped mem for output reshape']
    #allocation1 [shape = 'u8[4096]{0}', space=vmem, size = 0x1000, scoped, tag = 'scoped mem for input reshape']
    %s3 = sshllo.u32 0, 1
    %v4 = vld [vmem:[%s0] sm:%s3]
    %5 = vst [vmem:[#allocation1] sm:%s3] %v4
    %v6 = vld [vmem:[#allocation1] sm:$0x1]
    %vm7 = vcmask 130048
    %8 = vst.msk [vmem:[#allocation0] sm:$0x1] %vm7, %v6
    %v9 = vld [vmem:[#allocation1] sm:$0x1]
    %10 = vrot.lane.b32.xlu0 %v9, 112
    %v11 = vpop.permute.xlu0 %10
    %vm12 = vcmask 130048
    %s13 = scalar_lea.vmem [#allocation0], 1
    %14 = vst.msk [vmem:[%s13] sm:$0x1] %vm12, %v11
    %v15 = vld [vmem:[#allocation1] sm:$0x1]
    %16 = vrot.lane.b32.xlu0 %v15, 96
    %v17 = vpop.permute.xlu0 %16
    %vm18 = vcmask 130048
    %s19 = scalar_lea.vmem [#allocation0], 2
    %20 = vst.msk [vmem:[%s19] sm:$0x1] %vm18, %v17
    %v21 = vld [vmem:[#allocation1] sm:$0x1]
    %22 = vrot.lane.b32.xlu0 %v21, 80
    %v23 = vpop.permute.xlu0 %22
    %vm24 = vcmask 130048
    %s25 = scalar_lea.vmem [#allocation0], 3
    %26 = vst.msk [vmem:[%s25] sm:$0x1] %vm24, %v23
    %s28 = sshllo.u32 0, 4
    %v30 = vld [vmem:[#allocation0] sm:%s28]
    %s31 = sshllo.u32 0, 4
    %32 = vst [vmem:[%s1] sm:%s31] %v30

// kernel: wgan_generator_forward.9
$region0: #{wgan_generator_forward.9}
  #allocation0 [shape = 'u32[]', space=smem, size = 0x4, offset = 0x4, fixed_abs, tag = 'smem constant byte address 0x4 - core index']
  #allocation1 [shape = 'u32[144,128]{1,0:T(1,128)}', space=vmem, size = 0x12000, scoped, tag = 'internal scratch']
  %s0 = inlined_call_operand.vmem [shape: bf16[128,384], index: 0, kind: input, shape index: {}]
  %s1 = inlined_call_operand.vmem [shape: bf16[384,128], index: 1, kind: input, shape index: {}]
  %s2 = inlined_call_operand.vmem [shape: f32[128,128], index: 2, kind: output, shape index: {0}]
  %s3 = inlined_call_operand.vmem [shape: f32[1,128], index: 3, kind: output, shape index: {1}]
  %s4 = inlined_call_operand.vmem [shape: f32[1,128], index: 4, kind: output, shape index: {2}]
  %5 = xla_tuple %s2, %s3, %s4
  %s6 = sld [smem:[#allocation0]]
  $region38: #{wgan_generator_forward.9} parent=0
    _
  %s8 = ssub.s32 1, %s6
  %s9 = scalar_select 0, %s8, %s6
  // Predicated region
  $region2: #{wgan_generator_forward.9} parent=0 // pred_check
    _
  $region3: #{wgan_generator_forward.9} parent=0 // pred_check_branch
    %11 = sbr.rel (0) target = $region5
  $region4: #{wgan_generator_forward.9} parent=0 // pred_region
    _
  $region5: #{wgan_generator_forward.9} parent=0 // pred_fallthru
    _
  // Predicated region
  $region6: #{wgan_generator_forward.9} parent=0 // pred_check
    _
  $region7: #{wgan_generator_forward.9} parent=0 // pred_check_branch
    %13 = sbr.rel (0) target = $region9
  $region8: #{wgan_generator_forward.9} parent=0 // pred_region
    _
  $region9: #{wgan_generator_forward.9} parent=0 // pred_fallthru
    _
  %v15 = vld [vmem:[%s0] sm:$0xff]
  %v16 = vld [vmem:[%s0 + $0x8] sm:$0xf]
  %v17 = vld [vmem:[%s0 + $0xc] sm:$0xff]
  %v18 = vld [vmem:[%s0 + $0x14] sm:$0xf]
  %v19 = vld [vmem:[%s0 + $0x18] sm:$0xff]
  %v20 = vld [vmem:[%s0 + $0x20] sm:$0xf]
  %v21 = vld [vmem:[%s0 + $0x24] sm:$0xff]
  %v22 = vld [vmem:[%s0 + $0x2c] sm:$0xf]
  %v23 = vld [vmem:[%s0 + $0x30] sm:$0xff]
  %v24 = vld [vmem:[%s0 + $0x38] sm:$0xf]
  %v25 = vld [vmem:[%s0 + $0x3c] sm:$0xff]
  %v26 = vld [vmem:[%s0 + $0x44] sm:$0xf]
  %v27 = vld [vmem:[%s0 + $0x48] sm:$0xff]
  %v28 = vld [vmem:[%s0 + $0x50] sm:$0xf]
  %v29 = vld [vmem:[%s0 + $0x54] sm:$0xff]
  %v30 = vld [vmem:[%s0 + $0x5c] sm:$0xf]
  %v31 = vld [vmem:[%s0 + $0x60] sm:$0xff]
  %v32 = vld [vmem:[%s0 + $0x68] sm:$0xf]
  %v33 = vld [vmem:[%s0 + $0x6c] sm:$0xff]
  %v34 = vld [vmem:[%s0 + $0x74] sm:$0xf]
  %v35 = vld [vmem:[%s0 + $0x78] sm:$0xff]
  %v36 = vld [vmem:[%s0 + $0x80] sm:$0xf]
  %v37 = vld [vmem:[%s0 + $0x84] sm:$0xff]
  %v38 = vld [vmem:[%s0 + $0x8c] sm:$0xf]
  %v39 = vld [vmem:[%s0 + $0x90] sm:$0xff]
  %v40 = vld [vmem:[%s0 + $0x98] sm:$0xf]
  %v41 = vld [vmem:[%s0 + $0x9c] sm:$0xff]
  %v42 = vld [vmem:[%s0 + $0xa4] sm:$0xf]
  %v43 = vld [vmem:[%s0 + $0xa8] sm:$0xff]
  %v44 = vld [vmem:[%s0 + $0xb0] sm:$0xf]
  %v45 = vld [vmem:[%s0 + $0xb4] sm:$0xff]
  %v46 = vld [vmem:[%s0 + $0xbc] sm:$0xf]
  %v47 = vld [vmem:[%s1] sm:$0xf]
  %v48 = vld [vmem:[%s1 + $0x4] sm:$0xf]
  %v49 = vld [vmem:[%s1 + $0x8] sm:$0xf]
  %v50 = vld [vmem:[%s1 + $0xc] sm:$0xf]
  %v51 = vld [vmem:[%s1 + $0x10] sm:$0xf]
  %v52 = vld [vmem:[%s1 + $0x14] sm:$0xf]
  %v53 = vld [vmem:[%s1 + $0x18] sm:$0xf]
  %v54 = vld [vmem:[%s1 + $0x1c] sm:$0xf]
  %v55 = vld [vmem:[%s1 + $0x20] sm:$0xf]
  %v56 = vld [vmem:[%s1 + $0x24] sm:$0xf]
  %v57 = vld [vmem:[%s1 + $0x28] sm:$0xf]
  %v58 = vld [vmem:[%s1 + $0x2c] sm:$0xf]
  %v59 = vld [vmem:[%s1 + $0x30] sm:$0xf]
  %v60 = vld [vmem:[%s1 + $0x34] sm:$0xf]
  %v61 = vld [vmem:[%s1 + $0x38] sm:$0xf]
  %v62 = vld [vmem:[%s1 + $0x3c] sm:$0xf]
  %v63 = vld [vmem:[%s1 + $0x40] sm:$0xf]
  %v64 = vld [vmem:[%s1 + $0x44] sm:$0xf]
  %v65 = vld [vmem:[%s1 + $0x48] sm:$0xf]
  %v66 = vld [vmem:[%s1 + $0x4c] sm:$0xf]
  %v67 = vld [vmem:[%s1 + $0x50] sm:$0xf]
  %v68 = vld [vmem:[%s1 + $0x54] sm:$0xf]
  %v69 = vld [vmem:[%s1 + $0x58] sm:$0xf]
  %v70 = vld [vmem:[%s1 + $0x5c] sm:$0xf]
  %v71 = vld [vmem:[%s1 + $0x60] sm:$0xf]
  %v72 = vld [vmem:[%s1 + $0x64] sm:$0xf]
  %v73 = vld [vmem:[%s1 + $0x68] sm:$0xf]
  %v74 = vld [vmem:[%s1 + $0x6c] sm:$0xf]
  %v75 = vld [vmem:[%s1 + $0x70] sm:$0xf]
  %v76 = vld [vmem:[%s1 + $0x74] sm:$0xf]
  %v77 = vld [vmem:[%s1 + $0x78] sm:$0xf]
  %v78 = vld [vmem:[%s1 + $0x7c] sm:$0xf]
  %v79 = vld [vmem:[%s1 + $0x80] sm:$0xf]
  %v80 = vld [vmem:[%s1 + $0x84] sm:$0xf]
  %v81 = vld [vmem:[%s1 + $0x88] sm:$0xf]
  %v82 = vld [vmem:[%s1 + $0x8c] sm:$0xf]
  %v83 = vld [vmem:[%s1 + $0x90] sm:$0xf]
  %v84 = vld [vmem:[%s1 + $0x94] sm:$0xf]
  %v85 = vld [vmem:[%s1 + $0x98] sm:$0xf]
  %v86 = vld [vmem:[%s1 + $0x9c] sm:$0xf]
  %v87 = vld [vmem:[%s1 + $0xa0] sm:$0xf]
  %v88 = vld [vmem:[%s1 + $0xa4] sm:$0xf]
  %v89 = vld [vmem:[%s1 + $0xa8] sm:$0xf]
  %v90 = vld [vmem:[%s1 + $0xac] sm:$0xf]
  %v91 = vld [vmem:[%s1 + $0xb0] sm:$0xf]
  %v92 = vld [vmem:[%s1 + $0xb4] sm:$0xf]
  %v93 = vld [vmem:[%s1 + $0xb8] sm:$0xf]
  %v94 = vld [vmem:[%s1 + $0xbc] sm:$0xf]
  %v127 = vunpack.c.l.b16 %v15
  %v128 = vunpack.c.h.b16 %v15
  %v129 = vunpack.c.l.b16 %v16
  %v130 = vunpack.c.l.b16 %v17
  %v131 = vunpack.c.h.b16 %v17
  %v132 = vunpack.c.l.b16 %v18
  %v133 = vunpack.c.l.b16 %v19
  %v134 = vunpack.c.h.b16 %v19
  %v135 = vunpack.c.l.b16 %v20
  %v136 = vunpack.c.l.b16 %v21
  %v137 = vunpack.c.h.b16 %v21
  %v138 = vunpack.c.l.b16 %v22
  %v139 = vunpack.c.l.b16 %v23
  %v140 = vunpack.c.h.b16 %v23
  %v141 = vunpack.c.l.b16 %v24
  %v142 = vunpack.c.l.b16 %v25
  %v143 = vunpack.c.h.b16 %v25
  %v144 = vunpack.c.l.b16 %v26
  %v145 = vunpack.c.l.b16 %v27
  %v146 = vunpack.c.h.b16 %v27
  %v147 = vunpack.c.l.b16 %v28
  %v148 = vunpack.c.l.b16 %v29
  %v149 = vunpack.c.h.b16 %v29
  %v150 = vunpack.c.l.b16 %v30
  %v151 = vunpack.c.l.b16 %v31
  %v152 = vunpack.c.h.b16 %v31
  %v153 = vunpack.c.l.b16 %v32
  %v154 = vunpack.c.l.b16 %v33
  %v155 = vunpack.c.h.b16 %v33
  %v156 = vunpack.c.l.b16 %v34
  %v157 = vunpack.c.l.b16 %v35
  %v158 = vunpack.c.h.b16 %v35
  %v159 = vunpack.c.l.b16 %v36
  %v160 = vunpack.c.l.b16 %v37
  %v161 = vunpack.c.h.b16 %v37
  %v162 = vunpack.c.l.b16 %v38
  %v163 = vunpack.c.l.b16 %v39
  %v164 = vunpack.c.h.b16 %v39
  %v165 = vunpack.c.l.b16 %v40
  %v166 = vunpack.c.l.b16 %v41
  %v167 = vunpack.c.h.b16 %v41
  %v168 = vunpack.c.l.b16 %v42
  %v169 = vunpack.c.l.b16 %v43
  %v170 = vunpack.c.h.b16 %v43
  %v171 = vunpack.c.l.b16 %v44
  %v172 = vunpack.c.l.b16 %v45
  %v173 = vunpack.c.h.b16 %v45
  %v174 = vunpack.c.l.b16 %v46
  %v175 = vpack.c.b16 %v130, %v127
  %v176 = vpack.c.b16 %v131, %v128
  %v177 = vpack.c.b16 %v132, %v129
  %v178 = vpack.c.b16 %v136, %v133
  %v179 = vpack.c.b16 %v137, %v134
  %v180 = vpack.c.b16 %v138, %v135
  %v181 = vpack.c.b16 %v142, %v139
  %v182 = vpack.c.b16 %v143, %v140
  %v183 = vpack.c.b16 %v144, %v141
  %v184 = vpack.c.b16 %v148, %v145
  %v185 = vpack.c.b16 %v149, %v146
  %v186 = vpack.c.b16 %v150, %v147
  %v187 = vpack.c.b16 %v154, %v151
  %v188 = vpack.c.b16 %v155, %v152
  %v189 = vpack.c.b16 %v156, %v153
  %v190 = vpack.c.b16 %v160, %v157
  %v191 = vpack.c.b16 %v161, %v158
  %v192 = vpack.c.b16 %v162, %v159
  %v193 = vpack.c.b16 %v166, %v163
  %v194 = vpack.c.b16 %v167, %v164
  %v195 = vpack.c.b16 %v168, %v165
  %v196 = vpack.c.b16 %v172, %v169
  %v197 = vpack.c.b16 %v173, %v170
  %v198 = vpack.c.b16 %v174, %v171
  %v271 = vunpack.c.l.b16 %v47
  %v272 = vunpack.c.l.b16 %v48
  %v273 = vunpack.c.l.b16 %v49
  %v274 = vunpack.c.l.b16 %v50
  %v275 = vunpack.c.l.b16 %v51
  %v276 = vunpack.c.l.b16 %v52
  %v277 = vunpack.c.l.b16 %v53
  %v278 = vunpack.c.l.b16 %v54
  %v279 = vunpack.c.l.b16 %v55
  %v280 = vunpack.c.l.b16 %v56
  %v281 = vunpack.c.l.b16 %v57
  %v282 = vunpack.c.l.b16 %v58
  %v283 = vunpack.c.l.b16 %v59
  %v284 = vunpack.c.l.b16 %v60
  %v285 = vunpack.c.l.b16 %v61
  %v286 = vunpack.c.l.b16 %v62
  %v287 = vunpack.c.l.b16 %v63
  %v288 = vunpack.c.l.b16 %v64
  %v289 = vunpack.c.l.b16 %v65
  %v290 = vunpack.c.l.b16 %v66
  %v291 = vunpack.c.l.b16 %v67
  %v292 = vunpack.c.l.b16 %v68
  %v293 = vunpack.c.l.b16 %v69
  %v294 = vunpack.c.l.b16 %v70
  %v295 = vunpack.c.l.b16 %v71
  %v296 = vunpack.c.l.b16 %v72
  %v297 = vunpack.c.l.b16 %v73
  %v298 = vunpack.c.l.b16 %v74
  %v299 = vunpack.c.l.b16 %v75
  %v300 = vunpack.c.l.b16 %v76
  %v301 = vunpack.c.l.b16 %v77
  %v302 = vunpack.c.l.b16 %v78
  %v303 = vunpack.c.l.b16 %v79
  %v304 = vunpack.c.l.b16 %v80
  %v305 = vunpack.c.l.b16 %v81
  %v306 = vunpack.c.l.b16 %v82
  %v307 = vunpack.c.l.b16 %v83
  %v308 = vunpack.c.l.b16 %v84
  %v309 = vunpack.c.l.b16 %v85
  %v310 = vunpack.c.l.b16 %v86
  %v311 = vunpack.c.l.b16 %v87
  %v312 = vunpack.c.l.b16 %v88
  %v313 = vunpack.c.l.b16 %v89
  %v314 = vunpack.c.l.b16 %v90
  %v315 = vunpack.c.l.b16 %v91
  %v316 = vunpack.c.l.b16 %v92
  %v317 = vunpack.c.l.b16 %v93
  %v318 = vunpack.c.l.b16 %v94
  %v319 = vpack.c.b16 %v272, %v271
  %v320 = vpack.c.b16 %v274, %v273
  %v321 = vpack.c.b16 %v276, %v275
  %v322 = vpack.c.b16 %v278, %v277
  %v323 = vpack.c.b16 %v280, %v279
  %v324 = vpack.c.b16 %v282, %v281
  %v325 = vpack.c.b16 %v284, %v283
  %v326 = vpack.c.b16 %v286, %v285
  %v327 = vpack.c.b16 %v288, %v287
  %v328 = vpack.c.b16 %v290, %v289
  %v329 = vpack.c.b16 %v292, %v291
  %v330 = vpack.c.b16 %v294, %v293
  %v331 = vpack.c.b16 %v296, %v295
  %v332 = vpack.c.b16 %v298, %v297
  %v333 = vpack.c.b16 %v300, %v299
  %v334 = vpack.c.b16 %v302, %v301
  %v335 = vpack.c.b16 %v304, %v303
  %v336 = vpack.c.b16 %v306, %v305
  %v337 = vpack.c.b16 %v308, %v307
  %v338 = vpack.c.b16 %v310, %v309
  %v339 = vpack.c.b16 %v312, %v311
  %v340 = vpack.c.b16 %v314, %v313
  %v341 = vpack.c.b16 %v316, %v315
  %v342 = vpack.c.b16 %v318, %v317
  %367 = vmatprep.subr.bf16.mxu0 0
  %368 = vmatpush1.bf16.msra.mxu0 %v319
  %369 = vmatprep.subr.bf16.mxu0 0
  %370 = vmatpush1.bf16.msra.mxu0 %v320
  %371 = vmatprep.subr.bf16.mxu0 0
  %372 = vmatpush1.bf16.msra.mxu0 %v321
  %373 = vmatprep.subr.bf16.mxu0 0
  %374 = vmatpush1.bf16.msra.mxu0 %v322
  %375 = vmatprep.subr.bf16.mxu0 0
  %376 = vmatpush1.bf16.msra.mxu0 %v323
  %377 = vmatprep.subr.bf16.mxu0 0
  %378 = vmatpush1.bf16.msra.mxu0 %v324
  %379 = vmatprep.subr.bf16.mxu0 0
  %380 = vmatpush1.bf16.msra.mxu0 %v325
  %381 = vmatprep.subr.bf16.mxu0 0
  %382 = vmatpush1.bf16.msra.mxu0 %v326
  %383 = vmatprep.subr.bf16.mxu0 0
  %384 = vmatpush1.bf16.msra.mxu0 %v327
  %385 = vmatprep.subr.bf16.mxu0 0
  %386 = vmatpush1.bf16.msra.mxu0 %v328
  %387 = vmatprep.subr.bf16.mxu0 0
  %388 = vmatpush1.bf16.msra.mxu0 %v329
  %389 = vmatprep.subr.bf16.mxu0 0
  %390 = vmatpush1.bf16.msra.mxu0 %v330
  %391 = vmatprep.subr.bf16.mxu0 0
  %392 = vmatpush1.bf16.msra.mxu0 %v331
  %393 = vmatprep.subr.bf16.mxu0 0
  %394 = vmatpush1.bf16.msra.mxu0 %v332
  %395 = vmatprep.subr.bf16.mxu0 0
  %396 = vmatpush1.bf16.msra.mxu0 %v333
  %397 = vmatprep.subr.bf16.mxu0 0
  %398 = vmatpush1.bf16.msra.mxu0 %v334
  %399 = vmatprep.mubr.bf16.mxu0 %v176
  %400 = vmatmul.mubr.bf16.gmra.mrb[0].mxu0 %v175
  %v401 = vpop.f32.mrb[0].mxu0
  %v402 = vadd.f32 0.0, %v401
  %v403 = vpop.f32.mrb[0].mxu0
  %v404 = vpop.f32.mrb[0].mxu0
  %v405 = vadd.f32 0.0, %v404
  %v406 = vpop.f32.mrb[0].mxu0
  %407 = vmatprep.mubr.bf16.mxu0 %v179
  %408 = vmatmul.mubr.bf16.gmra.mrb[0].mxu0 %v178
  %v409 = vpop.f32.mrb[0].mxu0
  %v410 = vadd.f32 0.0, %v409
  %v411 = vpop.f32.mrb[0].mxu0
  %v412 = vpop.f32.mrb[0].mxu0
  %v413 = vadd.f32 0.0, %v412
  %v414 = vpop.f32.mrb[0].mxu0
  %415 = vmatprep.mubr.bf16.mxu0 %v182
  %416 = vmatmul.mubr.bf16.gmra.mrb[0].mxu0 %v181
  %v417 = vpop.f32.mrb[0].mxu0
  %v418 = vadd.f32 0.0, %v417
  %v419 = vpop.f32.mrb[0].mxu0
  %v420 = vpop.f32.mrb[0].mxu0
  %v421 = vadd.f32 0.0, %v420
  %v422 = vpop.f32.mrb[0].mxu0
  %423 = vmatprep.mubr.bf16.mxu0 %v185
  %424 = vmatmul.mubr.bf16.gmra.mrb[0].mxu0 %v184
  %v425 = vpop.f32.mrb[0].mxu0
  %v426 = vadd.f32 0.0, %v425
  %v427 = vpop.f32.mrb[0].mxu0
  %v428 = vpop.f32.mrb[0].mxu0
  %v429 = vadd.f32 0.0, %v428
  %v430 = vpop.f32.mrb[0].mxu0
  %431 = vmatprep.mubr.bf16.mxu0 %v188
  %432 = vmatmul.mubr.bf16.gmra.mrb[0].mxu0 %v187
  %v433 = vpop.f32.mrb[0].mxu0
  %v434 = vadd.f32 0.0, %v433
  %v435 = vpop.f32.mrb[0].mxu0
  %v436 = vpop.f32.mrb[0].mxu0
  %v437 = vadd.f32 0.0, %v436
  %v438 = vpop.f32.mrb[0].mxu0
  %439 = vmatprep.mubr.bf16.mxu0 %v191
  %440 = vmatmul.mubr.bf16.gmra.mrb[0].mxu0 %v190
  %v441 = vpop.f32.mrb[0].mxu0
  %v442 = vadd.f32 0.0, %v441
  %v443 = vpop.f32.mrb[0].mxu0
  %v444 = vpop.f32.mrb[0].mxu0
  %v445 = vadd.f32 0.0, %v444
  %v446 = vpop.f32.mrb[0].mxu0
  %447 = vmatprep.mubr.bf16.mxu0 %v194
  %448 = vmatmul.mubr.bf16.gmra.mrb[0].mxu0 %v193
  %v449 = vpop.f32.mrb[0].mxu0
  %v450 = vadd.f32 0.0, %v449
  %v451 = vpop.f32.mrb[0].mxu0
  %v452 = vpop.f32.mrb[0].mxu0
  %v453 = vadd.f32 0.0, %v452
  %v454 = vpop.f32.mrb[0].mxu0
  %455 = vmatprep.mubr.bf16.mxu0 %v197
  %456 = vmatmul.mubr.bf16.gmra.mrb[0].mxu0 %v196
  %v457 = vpop.f32.mrb[0].mxu0
  %v458 = vadd.f32 0.0, %v457
  %v459 = vpop.f32.mrb[0].mxu0
  %v460 = vpop.f32.mrb[0].mxu0
  %v461 = vadd.f32 0.0, %v460
  %v462 = vpop.f32.mrb[0].mxu0
  %463 = vdwg.mxu0
  %464 = vmatprep.subr.bf16.mxu0 0
  %465 = vmatpush1.bf16.msra.mxu0 %v335
  %466 = vmatprep.subr.bf16.mxu0 0
  %467 = vmatpush1.bf16.msra.mxu0 %v336
  %468 = vmatprep.subr.bf16.mxu0 0
  %469 = vmatpush1.bf16.msra.mxu0 %v337
  %470 = vmatprep.subr.bf16.mxu0 0
  %471 = vmatpush1.bf16.msra.mxu0 %v338
  %472 = vmatprep.subr.bf16.mxu0 0
  %473 = vmatpush1.bf16.msra.mxu0 %v339
  %474 = vmatprep.subr.bf16.mxu0 0
  %475 = vmatpush1.bf16.msra.mxu0 %v340
  %476 = vmatprep.subr.bf16.mxu0 0
  %477 = vmatpush1.bf16.msra.mxu0 %v341
  %478 = vmatprep.subr.bf16.mxu0 0
  %479 = vmatpush1.bf16.msra.mxu0 %v342
  %480 = vmatprep.subr.bf16.mxu0 0
  %481 = vmatpush1.bf16.msra.mxu0 0
  %482 = vmatprep.subr.bf16.mxu0 0
  %483 = vmatpush1.bf16.msra.mxu0 0
  %484 = vmatprep.subr.bf16.mxu0 0
  %485 = vmatpush1.bf16.msra.mxu0 0
  %486 = vmatprep.subr.bf16.mxu0 0
  %487 = vmatpush1.bf16.msra.mxu0 0
  %488 = vmatprep.subr.bf16.mxu0 0
  %489 = vmatpush1.bf16.msra.mxu0 0
  %490 = vmatprep.subr.bf16.mxu0 0
  %491 = vmatpush1.bf16.msra.mxu0 0
  %492 = vmatprep.subr.bf16.mxu0 0
  %493 = vmatpush1.bf16.msra.mxu0 0
  %494 = vmatprep.subr.bf16.mxu0 0
  %495 = vmatpush1.bf16.msra.mxu0 0
  %496 = vmatprep.mubr.bf16.mxu0 0
  %497 = vmatmul.mubr.bf16.gmra.mrb[0].mxu0 %v177
  %v498 = vpop.f32.mrb[0].mxu0
  %v499 = vadd.f32 %v402, %v498
  %v500 = vpop.f32.mrb[0].mxu0
  %v501 = vpop.f32.mrb[0].mxu0
  %v502 = vadd.f32 %v405, %v501
  %v503 = vpop.f32.mrb[0].mxu0
  %504 = vmatprep.mubr.bf16.mxu0 0
  %505 = vmatmul.mubr.bf16.gmra.mrb[0].mxu0 %v180
  %v506 = vpop.f32.mrb[0].mxu0
  %v507 = vadd.f32 %v410, %v506
  %v508 = vpop.f32.mrb[0].mxu0
  %v509 = vpop.f32.mrb[0].mxu0
  %v510 = vadd.f32 %v413, %v509
  %v511 = vpop.f32.mrb[0].mxu0
  %512 = vmatprep.mubr.bf16.mxu0 0
  %513 = vmatmul.mubr.bf16.gmra.mrb[0].mxu0 %v183
  %v514 = vpop.f32.mrb[0].mxu0
  %v515 = vadd.f32 %v418, %v514
  %v516 = vpop.f32.mrb[0].mxu0
  %v517 = vpop.f32.mrb[0].mxu0
  %v518 = vadd.f32 %v421, %v517
  %v519 = vpop.f32.mrb[0].mxu0
  %520 = vmatprep.mubr.bf16.mxu0 0
  %521 = vmatmul.mubr.bf16.gmra.mrb[0].mxu0 %v186
  %v522 = vpop.f32.mrb[0].mxu0
  %v523 = vadd.f32 %v426, %v522
  %v524 = vpop.f32.mrb[0].mxu0
  %v525 = vpop.f32.mrb[0].mxu0
  %v526 = vadd.f32 %v429, %v525
  %v527 = vpop.f32.mrb[0].mxu0
  %528 = vmatprep.mubr.bf16.mxu0 0
  %529 = vmatmul.mubr.bf16.gmra.mrb[0].mxu0 %v189
  %v530 = vpop.f32.mrb[0].mxu0
  %v531 = vadd.f32 %v434, %v530
  %v532 = vpop.f32.mrb[0].mxu0
  %v533 = vpop.f32.mrb[0].mxu0
  %v534 = vadd.f32 %v437, %v533
  %v535 = vpop.f32.mrb[0].mxu0
  %536 = vmatprep.mubr.bf16.mxu0 0
  %537 = vmatmul.mubr.bf16.gmra.mrb[0].mxu0 %v192
  %v538 = vpop.f32.mrb[0].mxu0
  %v539 = vadd.f32 %v442, %v538
  %v540 = vpop.f32.mrb[0].mxu0
  %v541 = vpop.f32.mrb[0].mxu0
  %v542 = vadd.f32 %v445, %v541
  %v543 = vpop.f32.mrb[0].mxu0
  %544 = vmatprep.mubr.bf16.mxu0 0
  %545 = vmatmul.mubr.bf16.gmra.mrb[0].mxu0 %v195
  %v546 = vpop.f32.mrb[0].mxu0
  %v547 = vadd.f32 %v450, %v546
  %v548 = vpop.f32.mrb[0].mxu0
  %v549 = vpop.f32.mrb[0].mxu0
  %v550 = vadd.f32 %v453, %v549
  %v551 = vpop.f32.mrb[0].mxu0
  %552 = vmatprep.mubr.bf16.mxu0 0
  %553 = vmatmul.mubr.bf16.gmra.mrb[0].mxu0 %v198
  %v554 = vpop.f32.mrb[0].mxu0
  %v555 = vadd.f32 %v458, %v554
  %v556 = vpop.f32.mrb[0].mxu0
  %v557 = vpop.f32.mrb[0].mxu0
  %v558 = vadd.f32 %v461, %v557
  %v559 = vpop.f32.mrb[0].mxu0
  %560 = vdwg.mxu0
  %561 = vst [vmem:[%s2] sm:$0xff] %v499
  %562 = vst [vmem:[%s2 + $0x8] sm:$0xff] %v502
  %563 = vst [vmem:[%s2 + $0x10] sm:$0xff] %v507
  %564 = vst [vmem:[%s2 + $0x18] sm:$0xff] %v510
  %565 = vst [vmem:[%s2 + $0x20] sm:$0xff] %v515
  %566 = vst [vmem:[%s2 + $0x28] sm:$0xff] %v518
  %567 = vst [vmem:[%s2 + $0x30] sm:$0xff] %v523
  %568 = vst [vmem:[%s2 + $0x38] sm:$0xff] %v526
  %569 = vst [vmem:[%s2 + $0x40] sm:$0xff] %v531
  %570 = vst [vmem:[%s2 + $0x48] sm:$0xff] %v534
  %571 = vst [vmem:[%s2 + $0x50] sm:$0xff] %v539
  %572 = vst [vmem:[%s2 + $0x58] sm:$0xff] %v542
  %573 = vst [vmem:[%s2 + $0x60] sm:$0xff] %v547
  %574 = vst [vmem:[%s2 + $0x68] sm:$0xff] %v550
  %575 = vst [vmem:[%s2 + $0x70] sm:$0xff] %v555
  %576 = vst [vmem:[%s2 + $0x78] sm:$0xff] %v558
  %p577 = scmp.eq.s32.totalorder 0, 0
  // Predicated region
  $region10: #{wgan_generator_forward.9} parent=0 // pred_check
    %p578 = pneg %p577
  $region11: #{wgan_generator_forward.9} parent=0 // pred_check_branch
    %580 = sbr.rel (%p578) target = $region13
  $region12: #{wgan_generator_forward.9} parent=0 // pred_region
    %581 = vst [vmem:[%s3] sm:$0x1] 0.0
    %582 = vst [vmem:[%s4] sm:$0x1] 0.0
  $region13: #{wgan_generator_forward.9} parent=0 // pred_fallthru
    _
  %v583 = vld [vmem:[%s3] sm:$0x1]
  %v584 = vadd.f32 %v499, %v502
  %v585 = vadd.f32 %v584, %v507
  %v586 = vadd.f32 %v585, %v510
  %v587 = vadd.f32 %v586, %v515
  %v588 = vadd.f32 %v587, %v518
  %v589 = vadd.f32 %v588, %v523
  %v590 = vadd.f32 %v589, %v526
  %v591 = vadd.f32 %v590, %v531
  %v592 = vadd.f32 %v591, %v534
  %v593 = vadd.f32 %v592, %v539
  %v594 = vadd.f32 %v593, %v542
  %v595 = vadd.f32 %v594, %v547
  %v596 = vadd.f32 %v595, %v550
  %v597 = vadd.f32 %v596, %v555
  %v598 = vadd.f32 %v597, %v558
  %v599 = vrot.slane %v598, 4
  %v600 = vadd.f32 %v598, %v599
  %v601 = vrot.slane %v600, 2
  %v602 = vadd.f32 %v600, %v601
  %v603 = vrot.slane %v602, 1
  %v604 = vadd.f32 %v602, %v603
  %v605 = vadd.f32 %v583, %v604
  %606 = vst [vmem:[%s3] sm:$0x1] %v605
  %v607 = vld [vmem:[%s4] sm:$0x1]
  %v608 = vmul.f32 %v499, %v499
  %v609 = vmul.f32 %v502, %v502
  %v610 = vmul.f32 %v507, %v507
  %v611 = vmul.f32 %v510, %v510
  %v612 = vmul.f32 %v515, %v515
  %v613 = vmul.f32 %v518, %v518
  %v614 = vmul.f32 %v523, %v523
  %v615 = vmul.f32 %v526, %v526
  %v616 = vmul.f32 %v531, %v531
  %v617 = vmul.f32 %v534, %v534
  %v618 = vmul.f32 %v539, %v539
  %v619 = vmul.f32 %v542, %v542
  %v620 = vmul.f32 %v547, %v547
  %v621 = vmul.f32 %v550, %v550
  %v622 = vmul.f32 %v555, %v555
  %v623 = vmul.f32 %v558, %v558
  %v624 = vadd.f32 %v608, %v609
  %v625 = vadd.f32 %v624, %v610
  %v626 = vadd.f32 %v625, %v611
  %v627 = vadd.f32 %v626, %v612
  %v628 = vadd.f32 %v627, %v613
  %v629 = vadd.f32 %v628, %v614
  %v630 = vadd.f32 %v629, %v615
  %v631 = vadd.f32 %v630, %v616
  %v632 = vadd.f32 %v631, %v617
  %v633 = vadd.f32 %v632, %v618
  %v634 = vadd.f32 %v633, %v619
  %v635 = vadd.f32 %v634, %v620
  %v636 = vadd.f32 %v635, %v621
  %v637 = vadd.f32 %v636, %v622
  %v638 = vadd.f32 %v637, %v623
  %v639 = vrot.slane %v638, 4
  %v640 = vadd.f32 %v638, %v639
  %v641 = vrot.slane %v640, 2
  %v642 = vadd.f32 %v640, %v641
  %v643 = vrot.slane %v642, 1
  %v644 = vadd.f32 %v642, %v643
  %v645 = vadd.f32 %v607, %v644
  %646 = vst [vmem:[%s4] sm:$0x1] %v645
  // Predicated region
  $region14: #{wgan_generator_forward.9} parent=0 // pred_check
    _
  $region15: #{wgan_generator_forward.9} parent=0 // pred_check_branch
    %648 = sbr.rel (0) target = $region17
  $region16: #{wgan_generator_forward.9} parent=0 // pred_region
    _
  $region17: #{wgan_generator_forward.9} parent=0 // pred_fallthru
    _
  // Predicated region
  $region18: #{wgan_generator_forward.9} parent=0 // pred_check
    _
  $region19: #{wgan_generator_forward.9} parent=0 // pred_check_branch
    %650 = sbr.rel (0) target = $region21
  $region20: #{wgan_generator_forward.9} parent=0 // pred_region
    _
  $region21: #{wgan_generator_forward.9} parent=0 // pred_fallthru
    _
  // Predicated region
  $region22: #{wgan_generator_forward.9} parent=0 // pred_check
    _
  $region23: #{wgan_generator_forward.9} parent=0 // pred_check_branch
    %652 = sbr.rel (0) target = $region25
  $region24: #{wgan_generator_forward.9} parent=0 // pred_region
    _
  $region25: #{wgan_generator_forward.9} parent=0 // pred_fallthru
    _
  // Predicated region
  $region26: #{wgan_generator_forward.9} parent=0 // pred_check
    _
  $region27: #{wgan_generator_forward.9} parent=0 // pred_check_branch
    %654 = sbr.rel (0) target = $region29
  $region28: #{wgan_generator_forward.9} parent=0 // pred_region
    _
  $region29: #{wgan_generator_forward.9} parent=0 // pred_fallthru
    _
  // Predicated region
  $region30: #{wgan_generator_forward.9} parent=0 // pred_check
    _
  $region31: #{wgan_generator_forward.9} parent=0 // pred_check_branch
    %656 = sbr.rel (0) target = $region33
  $region32: #{wgan_generator_forward.9} parent=0 // pred_region
    _
  $region33: #{wgan_generator_forward.9} parent=0 // pred_fallthru
    _
  // Predicated region
  $region34: #{wgan_generator_forward.9} parent=0 // pred_check
    _
  $region35: #{wgan_generator_forward.9} parent=0 // pred_check_branch
    %658 = sbr.rel (0) target = $region37
  $region36: #{wgan_generator_forward.9} parent=0 // pred_region
    _
  $region37: #{wgan_generator_forward.9} parent=0 // pred_fallthru
    _

// kernel: wgan_generator_forward.10
$region0: #{wgan_generator_forward.10}
  #allocation0 [shape = 'u32[]', space=smem, size = 0x4, offset = 0x4, fixed_abs, tag = 'smem constant byte address 0x4 - core index']
  #allocation1 [shape = 'u32[144,128]{1,0:T(1,128)}', space=vmem, size = 0x12000, scoped, tag = 'internal scratch']
  %s0 = inlined_call_operand.vmem [shape: f32[128,128], index: 0, kind: input, shape index: {}]
  %s1 = inlined_call_operand.vmem [shape: f32[1,128], index: 1, kind: input, shape index: {}]
  %s2 = inlined_call_operand.vmem [shape: f32[1,128], index: 2, kind: input, shape index: {}]
  %s3 = inlined_call_operand.vmem [shape: bf16[128,128], index: 3, kind: output, shape index: {}]
  %s4 = sld [smem:[#allocation0]]
  $region22: #{wgan_generator_forward.10} parent=0
    _
  %s6 = ssub.s32 1, %s4
  %s7 = scalar_select 0, %s6, %s4
  // Predicated region
  $region2: #{wgan_generator_forward.10} parent=0 // pred_check
    _
  $region3: #{wgan_generator_forward.10} parent=0 // pred_check_branch
    %9 = sbr.rel (0) target = $region5
  $region4: #{wgan_generator_forward.10} parent=0 // pred_region
    _
  $region5: #{wgan_generator_forward.10} parent=0 // pred_fallthru
    _
  // Predicated region
  $region6: #{wgan_generator_forward.10} parent=0 // pred_check
    _
  $region7: #{wgan_generator_forward.10} parent=0 // pred_check_branch
    %11 = sbr.rel (0) target = $region9
  $region8: #{wgan_generator_forward.10} parent=0 // pred_region
    _
  $region9: #{wgan_generator_forward.10} parent=0 // pred_fallthru
    _
  // Predicated region
  $region10: #{wgan_generator_forward.10} parent=0 // pred_check
    _
  $region11: #{wgan_generator_forward.10} parent=0 // pred_check_branch
    %13 = sbr.rel (0) target = $region13
  $region12: #{wgan_generator_forward.10} parent=0 // pred_region
    _
  $region13: #{wgan_generator_forward.10} parent=0 // pred_fallthru
    _
  %v14 = vld [vmem:[%s0] sm:$0xff]
  %v15 = vld [vmem:[%s0 + $0x8] sm:$0xff]
  %v16 = vld [vmem:[%s0 + $0x10] sm:$0xff]
  %v17 = vld [vmem:[%s0 + $0x18] sm:$0xff]
  %v18 = vld [vmem:[%s0 + $0x20] sm:$0xff]
  %v19 = vld [vmem:[%s0 + $0x28] sm:$0xff]
  %v20 = vld [vmem:[%s0 + $0x30] sm:$0xff]
  %v21 = vld [vmem:[%s0 + $0x38] sm:$0xff]
  %v22 = vld [vmem:[%s0 + $0x40] sm:$0xff]
  %v23 = vld [vmem:[%s0 + $0x48] sm:$0xff]
  %v24 = vld [vmem:[%s0 + $0x50] sm:$0xff]
  %v25 = vld [vmem:[%s0 + $0x58] sm:$0xff]
  %v26 = vld [vmem:[%s0 + $0x60] sm:$0xff]
  %v27 = vld [vmem:[%s0 + $0x68] sm:$0xff]
  %v28 = vld [vmem:[%s0 + $0x70] sm:$0xff]
  %v29 = vld [vmem:[%s0 + $0x78] sm:$0xff]
  %v30 = vld [vmem:[%s1] sm:$0x1]
  %v32 = vlaneseq
  %v33 = vshrl.u32 %v32, 7
  %v34 = vsub.s32 0, %v33
  %v35 = vrot.slane %v30, %v34
  %v37 = vmul.f32 %v14, %v35
  %v38 = vmul.f32 %v15, %v35
  %v39 = vmul.f32 %v16, %v35
  %v40 = vmul.f32 %v17, %v35
  %v41 = vmul.f32 %v18, %v35
  %v42 = vmul.f32 %v19, %v35
  %v43 = vmul.f32 %v20, %v35
  %v44 = vmul.f32 %v21, %v35
  %v45 = vmul.f32 %v22, %v35
  %v46 = vmul.f32 %v23, %v35
  %v47 = vmul.f32 %v24, %v35
  %v48 = vmul.f32 %v25, %v35
  %v49 = vmul.f32 %v26, %v35
  %v50 = vmul.f32 %v27, %v35
  %v51 = vmul.f32 %v28, %v35
  %v52 = vmul.f32 %v29, %v35
  %v53 = vld [vmem:[%s2] sm:$0x1]
  %v55 = vlaneseq
  %v56 = vshrl.u32 %v55, 7
  %v57 = vsub.s32 0, %v56
  %v58 = vrot.slane %v53, %v57
  %v60 = vadd.f32 %v37, %v58
  %v61 = vadd.f32 %v38, %v58
  %v62 = vadd.f32 %v39, %v58
  %v63 = vadd.f32 %v40, %v58
  %v64 = vadd.f32 %v41, %v58
  %v65 = vadd.f32 %v42, %v58
  %v66 = vadd.f32 %v43, %v58
  %v67 = vadd.f32 %v44, %v58
  %v68 = vadd.f32 %v45, %v58
  %v69 = vadd.f32 %v46, %v58
  %v70 = vadd.f32 %v47, %v58
  %v71 = vadd.f32 %v48, %v58
  %v72 = vadd.f32 %v49, %v58
  %v73 = vadd.f32 %v50, %v58
  %v74 = vadd.f32 %v51, %v58
  %v75 = vadd.f32 %v52, %v58
  %v76 = vmax.f32 %v60, 0.0
  %v77 = vmax.f32 %v61, 0.0
  %v78 = vmax.f32 %v62, 0.0
  %v79 = vmax.f32 %v63, 0.0
  %v80 = vmax.f32 %v64, 0.0
  %v81 = vmax.f32 %v65, 0.0
  %v82 = vmax.f32 %v66, 0.0
  %v83 = vmax.f32 %v67, 0.0
  %v84 = vmax.f32 %v68, 0.0
  %v85 = vmax.f32 %v69, 0.0
  %v86 = vmax.f32 %v70, 0.0
  %v87 = vmax.f32 %v71, 0.0
  %v88 = vmax.f32 %v72, 0.0
  %v89 = vmax.f32 %v73, 0.0
  %v90 = vmax.f32 %v74, 0.0
  %v91 = vmax.f32 %v75, 0.0
  %v92 = vpack.c.bf16 %v77, %v76
  %v93 = vpack.c.bf16 %v79, %v78
  %v94 = vpack.c.bf16 %v81, %v80
  %v95 = vpack.c.bf16 %v83, %v82
  %v96 = vpack.c.bf16 %v85, %v84
  %v97 = vpack.c.bf16 %v87, %v86
  %v98 = vpack.c.bf16 %v89, %v88
  %v99 = vpack.c.bf16 %v91, %v90
  %v108 = vunpack.c.l.b16 %v92
  %v109 = vunpack.c.h.b16 %v92
  %v110 = vunpack.c.l.b16 %v93
  %v111 = vunpack.c.h.b16 %v93
  %v112 = vunpack.c.l.b16 %v94
  %v113 = vunpack.c.h.b16 %v94
  %v114 = vunpack.c.l.b16 %v95
  %v115 = vunpack.c.h.b16 %v95
  %v116 = vunpack.c.l.b16 %v96
  %v117 = vunpack.c.h.b16 %v96
  %v118 = vunpack.c.l.b16 %v97
  %v119 = vunpack.c.h.b16 %v97
  %v120 = vunpack.c.l.b16 %v98
  %v121 = vunpack.c.h.b16 %v98
  %v122 = vunpack.c.l.b16 %v99
  %v123 = vunpack.c.h.b16 %v99
  %v124 = vpack.c.b16 %v108, %v108
  %v125 = vpack.c.b16 %v109, %v109
  %v126 = vpack.c.b16 %v110, %v110
  %v127 = vpack.c.b16 %v111, %v111
  %v128 = vpack.c.b16 %v112, %v112
  %v129 = vpack.c.b16 %v113, %v113
  %v130 = vpack.c.b16 %v114, %v114
  %v131 = vpack.c.b16 %v115, %v115
  %v132 = vpack.c.b16 %v116, %v116
  %v133 = vpack.c.b16 %v117, %v117
  %v134 = vpack.c.b16 %v118, %v118
  %v135 = vpack.c.b16 %v119, %v119
  %v136 = vpack.c.b16 %v120, %v120
  %v137 = vpack.c.b16 %v121, %v121
  %v138 = vpack.c.b16 %v122, %v122
  %v139 = vpack.c.b16 %v123, %v123
  %156 = vst [vmem:[%s3] sm:$0xf] %v124
  %157 = vst [vmem:[%s3 + $0x4] sm:$0xf] %v125
  %158 = vst [vmem:[%s3 + $0x8] sm:$0xf] %v126
  %159 = vst [vmem:[%s3 + $0xc] sm:$0xf] %v127
  %160 = vst [vmem:[%s3 + $0x10] sm:$0xf] %v128
  %161 = vst [vmem:[%s3 + $0x14] sm:$0xf] %v129
  %162 = vst [vmem:[%s3 + $0x18] sm:$0xf] %v130
  %163 = vst [vmem:[%s3 + $0x1c] sm:$0xf] %v131
  %164 = vst [vmem:[%s3 + $0x20] sm:$0xf] %v132
  %165 = vst [vmem:[%s3 + $0x24] sm:$0xf] %v133
  %166 = vst [vmem:[%s3 + $0x28] sm:$0xf] %v134
  %167 = vst [vmem:[%s3 + $0x2c] sm:$0xf] %v135
  %168 = vst [vmem:[%s3 + $0x30] sm:$0xf] %v136
  %169 = vst [vmem:[%s3 + $0x34] sm:$0xf] %v137
  %170 = vst [vmem:[%s3 + $0x38] sm:$0xf] %v138
  %171 = vst [vmem:[%s3 + $0x3c] sm:$0xf] %v139
  // Predicated region
  $region14: #{wgan_generator_forward.10} parent=0 // pred_check
    _
  $region15: #{wgan_generator_forward.10} parent=0 // pred_check_branch
    %173 = sbr.rel (0) target = $region17
  $region16: #{wgan_generator_forward.10} parent=0 // pred_region
    _
  $region17: #{wgan_generator_forward.10} parent=0 // pred_fallthru
    _
  // Predicated region
  $region18: #{wgan_generator_forward.10} parent=0 // pred_check
    _
  $region19: #{wgan_generator_forward.10} parent=0 // pred_check_branch
    %175 = sbr.rel (0) target = $region21
  $region20: #{wgan_generator_forward.10} parent=0 // pred_region
    _
  $region21: #{wgan_generator_forward.10} parent=0 // pred_fallthru
    _

// kernel: squeeze.90
$region0: #{squeeze.90}
  %s0 = inlined_call_operand.vmem [shape: f32[32], index: 0, kind: input, shape index: {}]
  %s1 = inlined_call_operand.vmem [shape: f32[4,8], index: 1, kind: output, shape index: {}]
  $region1: #{squeeze.90} parent=0
    #allocation0 [shape = 'u8[4096]{0}', space=vmem, size = 0x1000, scoped, tag = 'scoped mem for output reshape']
    #allocation1 [shape = 'u8[4096]{0}', space=vmem, size = 0x1000, scoped, tag = 'scoped mem for input reshape']
    %s3 = sshllo.u32 0, 1
    %v4 = vld [vmem:[%s0] sm:%s3]
    %5 = vst [vmem:[#allocation1] sm:%s3] %v4
    %v6 = vld [vmem:[#allocation1] sm:$0x1]
    %vm7 = vcmask 64512
    %8 = vst.msk [vmem:[#allocation0] sm:$0x1] %vm7, %v6
    %v9 = vld [vmem:[#allocation1] sm:$0x1]
    %10 = vrot.lane.b32.xlu0 %v9, 120
    %v11 = vpop.permute.xlu0 %10
    %vm12 = vcmask 64512
    %s13 = scalar_lea.vmem [#allocation0], 1
    %14 = vst.msk [vmem:[%s13] sm:$0x1] %vm12, %v11
    %v15 = vld [vmem:[#allocation1] sm:$0x1]
    %16 = vrot.lane.b32.xlu0 %v15, 112
    %v17 = vpop.permute.xlu0 %16
    %vm18 = vcmask 64512
    %s19 = scalar_lea.vmem [#allocation0], 2
    %20 = vst.msk [vmem:[%s19] sm:$0x1] %vm18, %v17
    %v21 = vld [vmem:[#allocation1] sm:$0x1]
    %22 = vrot.lane.b32.xlu0 %v21, 104
    %v23 = vpop.permute.xlu0 %22
    %vm24 = vcmask 64512
    %s25 = scalar_lea.vmem [#allocation0], 3
    %26 = vst.msk [vmem:[%s25] sm:$0x1] %vm24, %v23
    %s28 = sshllo.u32 0, 4
    %v30 = vld [vmem:[#allocation0] sm:%s28]
    %s31 = sshllo.u32 0, 4
    %32 = vst [vmem:[%s1] sm:%s31] %v30

// kernel: wgan_generator_forward.11
$region0: #{wgan_generator_forward.11}
  #allocation0 [shape = 'u32[]', space=smem, size = 0x4, offset = 0x4, fixed_abs, tag = 'smem constant byte address 0x4 - core index']
  #allocation1 [shape = 'u32[144,128]{1,0:T(1,128)}', space=vmem, size = 0x12000, scoped, tag = 'internal scratch']
  %s0 = inlined_call_operand.vmem [shape: bf16[512,256], index: 0, kind: input, shape index: {}]
  %s1 = inlined_call_operand.vmem [shape: bf16[256,128], index: 1, kind: input, shape index: {}]
  %s2 = inlined_call_operand.vmem [shape: f32[512,128], index: 2, kind: output, shape index: {0}]
  %s3 = inlined_call_operand.vmem [shape: f32[1,128], index: 3, kind: output, shape index: {1}]
  %s4 = inlined_call_operand.vmem [shape: f32[1,128], index: 4, kind: output, shape index: {2}]
  %5 = xla_tuple %s2, %s3, %s4
  %s6 = sld [smem:[#allocation0]]
  $region61: #{wgan_generator_forward.11} parent=0
    _
  %s8 = ssub.s32 1, %s6
  %s9 = scalar_select 0, %s8, %s6
  loop: start=0, step=1, limit=4
  $region2: #{wgan_generator_forward.11} parent=0 // loop_pre_header
    _
  $region3: #{wgan_generator_forward.11} parent=0 // loop_header
    %s11 = sphi 0, %s15
    %p12 = scmp.ge.s32.totalorder %s11, 4
    %s21 = sphi 0, %s23
    %s24 = sphi 0, %s21
    %s25 = sphi 0, %s24
    %s41 = sphi 0, %s25
    %s45 = sphi 0, %s45
    %s47 = sphi 0, %s45
    %s48 = sphi 0, %s47
    %s62 = sphi 0, %s48
    %s68 = sphi 0, %s70
    %s71 = sphi 0, %s68
    %s72 = sphi 0, %s71
    %s88 = sphi 0, %s72
    %s92 = sphi 0, %s92
    %s94 = sphi 0, %s92
    %s95 = sphi 0, %s94
    %s109 = sphi 0, %s95
    %s113 = sphi 0, %s113
    %s115 = sphi 0, %s113
    %s116 = sphi 0, %s115
    %s130 = sphi 0, %s116
  $region4: #{wgan_generator_forward.11} parent=0 // loop_header_branch
    %14 = sbr.rel (%p12) target = $region8
  $region5: #{wgan_generator_forward.11} parent=0 // loop_body
    %s16 = ssub.s32 %s11, 1
    %s17 = ssub.s32 %s11, 2
    %s18 = sadd.s32 %s11, 1
    %s19 = ssub.s32 %s11, %s18
    %p20 = scmp.eq.s32.totalorder %s19, 0
    %s22 = sadd.s32 %s21, 1
    %s23 = scalar_select %p20, %s21, %s22
    %p26 = pneg %p20
    %p27 = scmp.eq.s32.totalorder %s11, 1
    %p28 = por %p26, %p27
    %p29 = scmp.ne.s32.totalorder %s21, %s24
    %p30 = scmp.eq.s32.totalorder %s11, 0
    %p31 = por %p29, %p30
    %p32 = scmp.ne.s32.totalorder %s21, %s24
    %p33 = scmp.eq.s32.totalorder %s16, 1
    %p34 = por %p32, %p33
    %p35 = scmp.ne.s32.totalorder %s24, %s25
    %p36 = scmp.eq.s32.totalorder %s16, 0
    %p37 = por %p35, %p36
    %p38 = scmp.ne.s32.totalorder %s24, %s25
    %p39 = scmp.eq.s32.totalorder %s17, 1
    %p40 = por %p38, %p39
    %p42 = scmp.ne.s32.totalorder %s25, %s41
    %p43 = scmp.eq.s32.totalorder %s17, 0
    %p44 = por %p42, %p43
    %s46 = sadd.s32 %s45, 1
    %p49 = scmp.eq.s32.totalorder %s11, 1
    %p50 = scmp.ne.s32.totalorder %s45, %s47
    %p51 = scmp.eq.s32.totalorder %s11, 0
    %p52 = por %p50, %p51
    %p53 = scmp.ne.s32.totalorder %s45, %s47
    %p54 = scmp.eq.s32.totalorder %s16, 1
    %p55 = por %p53, %p54
    %p56 = scmp.ne.s32.totalorder %s47, %s48
    %p57 = scmp.eq.s32.totalorder %s16, 0
    %p58 = por %p56, %p57
    %p59 = scmp.ne.s32.totalorder %s47, %s48
    %p60 = scmp.eq.s32.totalorder %s17, 1
    %p61 = por %p59, %p60
    %p63 = scmp.ne.s32.totalorder %s48, %s62
    %p64 = scmp.eq.s32.totalorder %s17, 0
    %p65 = por %p63, %p64
    %s66 = ssub.s32 %s11, %s18
    %p67 = scmp.eq.s32.totalorder %s66, 0
    %s69 = sadd.s32 %s68, 1
    %s70 = scalar_select %p67, %s68, %s69
    %p73 = pneg %p67
    %p74 = scmp.eq.s32.totalorder %s11, 1
    %p75 = por %p73, %p74
    %p76 = scmp.ne.s32.totalorder %s68, %s71
    %p77 = scmp.eq.s32.totalorder %s11, 0
    %p78 = por %p76, %p77
    %p79 = scmp.ne.s32.totalorder %s68, %s71
    %p80 = scmp.eq.s32.totalorder %s16, 1
    %p81 = por %p79, %p80
    %p82 = scmp.ne.s32.totalorder %s71, %s72
    %p83 = scmp.eq.s32.totalorder %s16, 0
    %p84 = por %p82, %p83
    %p85 = scmp.ne.s32.totalorder %s71, %s72
    %p86 = scmp.eq.s32.totalorder %s17, 1
    %p87 = por %p85, %p86
    %p89 = scmp.ne.s32.totalorder %s72, %s88
    %p90 = scmp.eq.s32.totalorder %s17, 0
    %p91 = por %p89, %p90
    %s93 = sadd.s32 %s92, 1
    %p96 = scmp.eq.s32.totalorder %s11, 1
    %p97 = scmp.ne.s32.totalorder %s92, %s94
    %p98 = scmp.eq.s32.totalorder %s11, 0
    %p99 = por %p97, %p98
    %p100 = scmp.ne.s32.totalorder %s92, %s94
    %p101 = scmp.eq.s32.totalorder %s16, 1
    %p102 = por %p100, %p101
    %p103 = scmp.ne.s32.totalorder %s94, %s95
    %p104 = scmp.eq.s32.totalorder %s16, 0
    %p105 = por %p103, %p104
    %p106 = scmp.ne.s32.totalorder %s94, %s95
    %p107 = scmp.eq.s32.totalorder %s17, 1
    %p108 = por %p106, %p107
    %p110 = scmp.ne.s32.totalorder %s95, %s109
    %p111 = scmp.eq.s32.totalorder %s17, 0
    %p112 = por %p110, %p111
    %s114 = sadd.s32 %s113, 1
    %p117 = scmp.eq.s32.totalorder %s11, 1
    %p118 = scmp.ne.s32.totalorder %s113, %s115
    %p119 = scmp.eq.s32.totalorder %s11, 0
    %p120 = por %p118, %p119
    %p121 = scmp.ne.s32.totalorder %s113, %s115
    %p122 = scmp.eq.s32.totalorder %s16, 1
    %p123 = por %p121, %p122
    %p124 = scmp.ne.s32.totalorder %s115, %s116
    %p125 = scmp.eq.s32.totalorder %s16, 0
    %p126 = por %p124, %p125
    %p127 = scmp.ne.s32.totalorder %s115, %s116
    %p128 = scmp.eq.s32.totalorder %s17, 1
    %p129 = por %p127, %p128
    %p131 = scmp.ne.s32.totalorder %s116, %s130
    %p132 = scmp.eq.s32.totalorder %s17, 0
    %p133 = por %p131, %p132
    %p134 = scmp.le.s32.totalorder 1, %s11
    %p135 = scmp.lt.s32.totalorder %s11, 3
    %p136 = pnand %p134, %p135
    %p137 = pneg %p136
    // Predicated region
    $region9: #{wgan_generator_forward.11} parent=5 // pred_check
      _
    $region10: #{wgan_generator_forward.11} parent=5 // pred_check_branch
      %139 = sbr.rel (%p136) target = $region12
    $region11: #{wgan_generator_forward.11} parent=5 // pred_region
      %s140 = ssub.s32 %s11, 1
      // Predicated region
      $region13: #{wgan_generator_forward.11} parent=11 // pred_check
        %p141 = pneg %p58
      $region14: #{wgan_generator_forward.11} parent=11 // pred_check_branch
        %143 = sbr.rel (%p141) target = $region16
      $region15: #{wgan_generator_forward.11} parent=11 // pred_region
        _
      $region16: #{wgan_generator_forward.11} parent=11 // pred_fallthru
        _
    $region12: #{wgan_generator_forward.11} parent=5 // pred_fallthru
      _
    %p144 = scmp.lt.s32.totalorder %s11, 2
    // Predicated region
    $region17: #{wgan_generator_forward.11} parent=5 // pred_check
      %p145 = pneg %p144
    $region18: #{wgan_generator_forward.11} parent=5 // pred_check_branch
      %147 = sbr.rel (%p145) target = $region20
    $region19: #{wgan_generator_forward.11} parent=5 // pred_region
      // Predicated region
      $region21: #{wgan_generator_forward.11} parent=19 // pred_check
        %p148 = pneg %p31
      $region22: #{wgan_generator_forward.11} parent=19 // pred_check_branch
        %150 = sbr.rel (%p148) target = $region24
      $region23: #{wgan_generator_forward.11} parent=19 // pred_region
        %s151 = smul.u32 32, %s11
        %p152 = scmp.lt.s32.totalorder %s151, 63
        %s153 = scalar_select %p152, %s151, 63
        %s154 = smul.addr %s153, 2
        %s155 = smul.addr %s154, 4
        %s156 = scalar_lea.vmem %s0, %s155
        %s157 = smul.u32 32, %s11
      $region24: #{wgan_generator_forward.11} parent=19 // pred_fallthru
        _
    $region20: #{wgan_generator_forward.11} parent=5 // pred_fallthru
      _
    %p158 = scmp.le.s32.totalorder 1, %s11
    %p159 = scmp.lt.s32.totalorder %s11, 3
    %p160 = pnand %p158, %p159
    %p161 = pneg %p160
    // Predicated region
    $region25: #{wgan_generator_forward.11} parent=5 // pred_check
      _
    $region26: #{wgan_generator_forward.11} parent=5 // pred_check_branch
      %163 = sbr.rel (%p160) target = $region28
    $region27: #{wgan_generator_forward.11} parent=5 // pred_region
      %s164 = ssub.s32 %s11, 1
      %s165 = smul.u32 32, %s16
      %p166 = scmp.lt.s32.totalorder %s165, 63
      %s167 = scalar_select %p166, %s165, 63
      %s168 = smul.addr %s167, 2
      %s169 = smul.addr %s168, 4
      %s170 = scalar_lea.vmem %s0, %s169
      %p171 = pneg %p37
      %p172 = pneg %p34
      %p173 = pneg %p58
      %p174 = pneg %p55
      %p175 = pneg %p84
      %p176 = pneg %p81
      %s177 = smul.u32 32, %s16
      %p178 = scmp.lt.s32.totalorder %s177, 63
      %s179 = scalar_select %p178, %s177, 63
      %s180 = smul.addr %s179, 8
      %s181 = scalar_lea.vmem %s2, %s180
      %p182 = pneg %p105
      %p183 = pneg %p102
      %p184 = pneg %p126
      %p185 = pneg %p123
      %s186 = smul.u32 32, %s16
      %p187 = scmp.lt.s32.totalorder %s186, 63
      %s188 = scalar_select %p187, %s186, 63
      %s189 = smul.addr %s188, 2
      %s190 = smul.addr %s189, 4
      %s191 = scalar_lea.vmem %s0, %s190
      %s192 = smul.u32 32, %s16
      %s193 = smul.u32 32, %s16
      %p194 = scmp.lt.s32.totalorder %s193, 63
      %s195 = scalar_select %p194, %s193, 63
      %s196 = smul.addr %s195, 8
      %s197 = scalar_lea.vmem %s2, %s196
      %s198 = smul.u32 32, %s16
      %v200 = vld [vmem:[%s191] sm:$0xff]
      %v201 = vld [vmem:[%s191 + $0x8] sm:$0xff]
      %v202 = vld [vmem:[%s191 + $0x10] sm:$0xff]
      %v203 = vld [vmem:[%s191 + $0x18] sm:$0xff]
      %v204 = vld [vmem:[%s191 + $0x20] sm:$0xff]
      %v205 = vld [vmem:[%s191 + $0x28] sm:$0xff]
      %v206 = vld [vmem:[%s191 + $0x30] sm:$0xff]
      %v207 = vld [vmem:[%s191 + $0x38] sm:$0xff]
      %v208 = vld [vmem:[%s191 + $0x40] sm:$0xff]
      %v209 = vld [vmem:[%s191 + $0x48] sm:$0xff]
      %v210 = vld [vmem:[%s191 + $0x50] sm:$0xff]
      %v211 = vld [vmem:[%s191 + $0x58] sm:$0xff]
      %v212 = vld [vmem:[%s191 + $0x60] sm:$0xff]
      %v213 = vld [vmem:[%s191 + $0x68] sm:$0xff]
      %v214 = vld [vmem:[%s191 + $0x70] sm:$0xff]
      %v215 = vld [vmem:[%s191 + $0x78] sm:$0xff]
      %v216 = vld [vmem:[%s191 + $0x80] sm:$0xff]
      %v217 = vld [vmem:[%s191 + $0x88] sm:$0xff]
      %v218 = vld [vmem:[%s191 + $0x90] sm:$0xff]
      %v219 = vld [vmem:[%s191 + $0x98] sm:$0xff]
      %v220 = vld [vmem:[%s191 + $0xa0] sm:$0xff]
      %v221 = vld [vmem:[%s191 + $0xa8] sm:$0xff]
      %v222 = vld [vmem:[%s191 + $0xb0] sm:$0xff]
      %v223 = vld [vmem:[%s191 + $0xb8] sm:$0xff]
      %v224 = vld [vmem:[%s191 + $0xc0] sm:$0xff]
      %v225 = vld [vmem:[%s191 + $0xc8] sm:$0xff]
      %v226 = vld [vmem:[%s191 + $0xd0] sm:$0xff]
      %v227 = vld [vmem:[%s191 + $0xd8] sm:$0xff]
      %v228 = vld [vmem:[%s191 + $0xe0] sm:$0xff]
      %v229 = vld [vmem:[%s191 + $0xe8] sm:$0xff]
      %v230 = vld [vmem:[%s191 + $0xf0] sm:$0xff]
      %v231 = vld [vmem:[%s191 + $0xf8] sm:$0xff]
      %v232 = vld [vmem:[%s1] sm:$0xf]
      %v233 = vld [vmem:[%s1 + $0x4] sm:$0xf]
      %v234 = vld [vmem:[%s1 + $0x8] sm:$0xf]
      %v235 = vld [vmem:[%s1 + $0xc] sm:$0xf]
      %v236 = vld [vmem:[%s1 + $0x10] sm:$0xf]
      %v237 = vld [vmem:[%s1 + $0x14] sm:$0xf]
      %v238 = vld [vmem:[%s1 + $0x18] sm:$0xf]
      %v239 = vld [vmem:[%s1 + $0x1c] sm:$0xf]
      %v240 = vld [vmem:[%s1 + $0x20] sm:$0xf]
      %v241 = vld [vmem:[%s1 + $0x24] sm:$0xf]
      %v242 = vld [vmem:[%s1 + $0x28] sm:$0xf]
      %v243 = vld [vmem:[%s1 + $0x2c] sm:$0xf]
      %v244 = vld [vmem:[%s1 + $0x30] sm:$0xf]
      %v245 = vld [vmem:[%s1 + $0x34] sm:$0xf]
      %v246 = vld [vmem:[%s1 + $0x38] sm:$0xf]
      %v247 = vld [vmem:[%s1 + $0x3c] sm:$0xf]
      %v248 = vld [vmem:[%s1 + $0x40] sm:$0xf]
      %v249 = vld [vmem:[%s1 + $0x44] sm:$0xf]
      %v250 = vld [vmem:[%s1 + $0x48] sm:$0xf]
      %v251 = vld [vmem:[%s1 + $0x4c] sm:$0xf]
      %v252 = vld [vmem:[%s1 + $0x50] sm:$0xf]
      %v253 = vld [vmem:[%s1 + $0x54] sm:$0xf]
      %v254 = vld [vmem:[%s1 + $0x58] sm:$0xf]
      %v255 = vld [vmem:[%s1 + $0x5c] sm:$0xf]
      %v256 = vld [vmem:[%s1 + $0x60] sm:$0xf]
      %v257 = vld [vmem:[%s1 + $0x64] sm:$0xf]
      %v258 = vld [vmem:[%s1 + $0x68] sm:$0xf]
      %v259 = vld [vmem:[%s1 + $0x6c] sm:$0xf]
      %v260 = vld [vmem:[%s1 + $0x70] sm:$0xf]
      %v261 = vld [vmem:[%s1 + $0x74] sm:$0xf]
      %v262 = vld [vmem:[%s1 + $0x78] sm:$0xf]
      %v263 = vld [vmem:[%s1 + $0x7c] sm:$0xf]
      %v296 = vunpack.c.l.b16 %v200
      %v297 = vunpack.c.h.b16 %v200
      %v298 = vunpack.c.l.b16 %v201
      %v299 = vunpack.c.h.b16 %v201
      %v300 = vunpack.c.l.b16 %v202
      %v301 = vunpack.c.h.b16 %v202
      %v302 = vunpack.c.l.b16 %v203
      %v303 = vunpack.c.h.b16 %v203
      %v304 = vunpack.c.l.b16 %v204
      %v305 = vunpack.c.h.b16 %v204
      %v306 = vunpack.c.l.b16 %v205
      %v307 = vunpack.c.h.b16 %v205
      %v308 = vunpack.c.l.b16 %v206
      %v309 = vunpack.c.h.b16 %v206
      %v310 = vunpack.c.l.b16 %v207
      %v311 = vunpack.c.h.b16 %v207
      %v312 = vunpack.c.l.b16 %v208
      %v313 = vunpack.c.h.b16 %v208
      %v314 = vunpack.c.l.b16 %v209
      %v315 = vunpack.c.h.b16 %v209
      %v316 = vunpack.c.l.b16 %v210
      %v317 = vunpack.c.h.b16 %v210
      %v318 = vunpack.c.l.b16 %v211
      %v319 = vunpack.c.h.b16 %v211
      %v320 = vunpack.c.l.b16 %v212
      %v321 = vunpack.c.h.b16 %v212
      %v322 = vunpack.c.l.b16 %v213
      %v323 = vunpack.c.h.b16 %v213
      %v324 = vunpack.c.l.b16 %v214
      %v325 = vunpack.c.h.b16 %v214
      %v326 = vunpack.c.l.b16 %v215
      %v327 = vunpack.c.h.b16 %v215
      %v328 = vunpack.c.l.b16 %v216
      %v329 = vunpack.c.h.b16 %v216
      %v330 = vunpack.c.l.b16 %v217
      %v331 = vunpack.c.h.b16 %v217
      %v332 = vunpack.c.l.b16 %v218
      %v333 = vunpack.c.h.b16 %v218
      %v334 = vunpack.c.l.b16 %v219
      %v335 = vunpack.c.h.b16 %v219
      %v336 = vunpack.c.l.b16 %v220
      %v337 = vunpack.c.h.b16 %v220
      %v338 = vunpack.c.l.b16 %v221
      %v339 = vunpack.c.h.b16 %v221
      %v340 = vunpack.c.l.b16 %v222
      %v341 = vunpack.c.h.b16 %v222
      %v342 = vunpack.c.l.b16 %v223
      %v343 = vunpack.c.h.b16 %v223
      %v344 = vunpack.c.l.b16 %v224
      %v345 = vunpack.c.h.b16 %v224
      %v346 = vunpack.c.l.b16 %v225
      %v347 = vunpack.c.h.b16 %v225
      %v348 = vunpack.c.l.b16 %v226
      %v349 = vunpack.c.h.b16 %v226
      %v350 = vunpack.c.l.b16 %v227
      %v351 = vunpack.c.h.b16 %v227
      %v352 = vunpack.c.l.b16 %v228
      %v353 = vunpack.c.h.b16 %v228
      %v354 = vunpack.c.l.b16 %v229
      %v355 = vunpack.c.h.b16 %v229
      %v356 = vunpack.c.l.b16 %v230
      %v357 = vunpack.c.h.b16 %v230
      %v358 = vunpack.c.l.b16 %v231
      %v359 = vunpack.c.h.b16 %v231
      %v360 = vpack.c.b16 %v298, %v296
      %v361 = vpack.c.b16 %v299, %v297
      %v362 = vpack.c.b16 %v302, %v300
      %v363 = vpack.c.b16 %v303, %v301
      %v364 = vpack.c.b16 %v306, %v304
      %v365 = vpack.c.b16 %v307, %v305
      %v366 = vpack.c.b16 %v310, %v308
      %v367 = vpack.c.b16 %v311, %v309
      %v368 = vpack.c.b16 %v314, %v312
      %v369 = vpack.c.b16 %v315, %v313
      %v370 = vpack.c.b16 %v318, %v316
      %v371 = vpack.c.b16 %v319, %v317
      %v372 = vpack.c.b16 %v322, %v320
      %v373 = vpack.c.b16 %v323, %v321
      %v374 = vpack.c.b16 %v326, %v324
      %v375 = vpack.c.b16 %v327, %v325
      %v376 = vpack.c.b16 %v330, %v328
      %v377 = vpack.c.b16 %v331, %v329
      %v378 = vpack.c.b16 %v334, %v332
      %v379 = vpack.c.b16 %v335, %v333
      %v380 = vpack.c.b16 %v338, %v336
      %v381 = vpack.c.b16 %v339, %v337
      %v382 = vpack.c.b16 %v342, %v340
      %v383 = vpack.c.b16 %v343, %v341
      %v384 = vpack.c.b16 %v346, %v344
      %v385 = vpack.c.b16 %v347, %v345
      %v386 = vpack.c.b16 %v350, %v348
      %v387 = vpack.c.b16 %v351, %v349
      %v388 = vpack.c.b16 %v354, %v352
      %v389 = vpack.c.b16 %v355, %v353
      %v390 = vpack.c.b16 %v358, %v356
      %v391 = vpack.c.b16 %v359, %v357
      %v456 = vunpack.c.l.b16 %v232
      %v457 = vunpack.c.l.b16 %v233
      %v458 = vunpack.c.l.b16 %v234
      %v459 = vunpack.c.l.b16 %v235
      %v460 = vunpack.c.l.b16 %v236
      %v461 = vunpack.c.l.b16 %v237
      %v462 = vunpack.c.l.b16 %v238
      %v463 = vunpack.c.l.b16 %v239
      %v464 = vunpack.c.l.b16 %v240
      %v465 = vunpack.c.l.b16 %v241
      %v466 = vunpack.c.l.b16 %v242
      %v467 = vunpack.c.l.b16 %v243
      %v468 = vunpack.c.l.b16 %v244
      %v469 = vunpack.c.l.b16 %v245
      %v470 = vunpack.c.l.b16 %v246
      %v471 = vunpack.c.l.b16 %v247
      %v472 = vunpack.c.l.b16 %v248
      %v473 = vunpack.c.l.b16 %v249
      %v474 = vunpack.c.l.b16 %v250
      %v475 = vunpack.c.l.b16 %v251
      %v476 = vunpack.c.l.b16 %v252
      %v477 = vunpack.c.l.b16 %v253
      %v478 = vunpack.c.l.b16 %v254
      %v479 = vunpack.c.l.b16 %v255
      %v480 = vunpack.c.l.b16 %v256
      %v481 = vunpack.c.l.b16 %v257
      %v482 = vunpack.c.l.b16 %v258
      %v483 = vunpack.c.l.b16 %v259
      %v484 = vunpack.c.l.b16 %v260
      %v485 = vunpack.c.l.b16 %v261
      %v486 = vunpack.c.l.b16 %v262
      %v487 = vunpack.c.l.b16 %v263
      %v488 = vpack.c.b16 %v457, %v456
      %v489 = vpack.c.b16 %v459, %v458
      %v490 = vpack.c.b16 %v461, %v460
      %v491 = vpack.c.b16 %v463, %v462
      %v492 = vpack.c.b16 %v465, %v464
      %v493 = vpack.c.b16 %v467, %v466
      %v494 = vpack.c.b16 %v469, %v468
      %v495 = vpack.c.b16 %v471, %v470
      %v496 = vpack.c.b16 %v473, %v472
      %v497 = vpack.c.b16 %v475, %v474
      %v498 = vpack.c.b16 %v477, %v476
      %v499 = vpack.c.b16 %v479, %v478
      %v500 = vpack.c.b16 %v481, %v480
      %v501 = vpack.c.b16 %v483, %v482
      %v502 = vpack.c.b16 %v485, %v484
      %v503 = vpack.c.b16 %v487, %v486
      %520 = vmatprep.subr.bf16.mxu0 0
      %521 = vmatpush1.bf16.msra.mxu0 %v488
      %522 = vmatprep.subr.bf16.mxu0 0
      %523 = vmatpush1.bf16.msra.mxu0 %v489
      %524 = vmatprep.subr.bf16.mxu0 0
      %525 = vmatpush1.bf16.msra.mxu0 %v490
      %526 = vmatprep.subr.bf16.mxu0 0
      %527 = vmatpush1.bf16.msra.mxu0 %v491
      %528 = vmatprep.subr.bf16.mxu0 0
      %529 = vmatpush1.bf16.msra.mxu0 %v492
      %530 = vmatprep.subr.bf16.mxu0 0
      %531 = vmatpush1.bf16.msra.mxu0 %v493
      %532 = vmatprep.subr.bf16.mxu0 0
      %533 = vmatpush1.bf16.msra.mxu0 %v494
      %534 = vmatprep.subr.bf16.mxu0 0
      %535 = vmatpush1.bf16.msra.mxu0 %v495
      %536 = vmatprep.subr.bf16.mxu0 0
      %537 = vmatpush1.bf16.msra.mxu0 %v496
      %538 = vmatprep.subr.bf16.mxu0 0
      %539 = vmatpush1.bf16.msra.mxu0 %v497
      %540 = vmatprep.subr.bf16.mxu0 0
      %541 = vmatpush1.bf16.msra.mxu0 %v498
      %542 = vmatprep.subr.bf16.mxu0 0
      %543 = vmatpush1.bf16.msra.mxu0 %v499
      %544 = vmatprep.subr.bf16.mxu0 0
      %545 = vmatpush1.bf16.msra.mxu0 %v500
      %546 = vmatprep.subr.bf16.mxu0 0
      %547 = vmatpush1.bf16.msra.mxu0 %v501
      %548 = vmatprep.subr.bf16.mxu0 0
      %549 = vmatpush1.bf16.msra.mxu0 %v502
      %550 = vmatprep.subr.bf16.mxu0 0
      %551 = vmatpush1.bf16.msra.mxu0 %v503
      %552 = vmatprep.mubr.bf16.mxu0 %v361
      %553 = vmatmul.mubr.bf16.gmra.mrb[0].mxu0 %v360
      %v554 = vpop.f32.mrb[0].mxu0
      %v555 = vadd.f32 0.0, %v554
      %v556 = vpop.f32.mrb[0].mxu0
      %v557 = vpop.f32.mrb[0].mxu0
      %v558 = vadd.f32 0.0, %v557
      %v559 = vpop.f32.mrb[0].mxu0
      %560 = vmatprep.mubr.bf16.mxu0 %v363
      %561 = vmatmul.mubr.bf16.gmra.mrb[0].mxu0 %v362
      %v562 = vpop.f32.mrb[0].mxu0
      %v563 = vadd.f32 0.0, %v562
      %v564 = vpop.f32.mrb[0].mxu0
      %v565 = vpop.f32.mrb[0].mxu0
      %v566 = vadd.f32 0.0, %v565
      %v567 = vpop.f32.mrb[0].mxu0
      %568 = vmatprep.mubr.bf16.mxu0 %v365
      %569 = vmatmul.mubr.bf16.gmra.mrb[0].mxu0 %v364
      %v570 = vpop.f32.mrb[0].mxu0
      %v571 = vadd.f32 0.0, %v570
      %v572 = vpop.f32.mrb[0].mxu0
      %v573 = vpop.f32.mrb[0].mxu0
      %v574 = vadd.f32 0.0, %v573
      %v575 = vpop.f32.mrb[0].mxu0
      %576 = vmatprep.mubr.bf16.mxu0 %v367
      %577 = vmatmul.mubr.bf16.gmra.mrb[0].mxu0 %v366
      %v578 = vpop.f32.mrb[0].mxu0
      %v579 = vadd.f32 0.0, %v578
      %v580 = vpop.f32.mrb[0].mxu0
      %v581 = vpop.f32.mrb[0].mxu0
      %v582 = vadd.f32 0.0, %v581
      %v583 = vpop.f32.mrb[0].mxu0
      %584 = vmatprep.mubr.bf16.mxu0 %v369
      %585 = vmatmul.mubr.bf16.gmra.mrb[0].mxu0 %v368
      %v586 = vpop.f32.mrb[0].mxu0
      %v587 = vadd.f32 0.0, %v586
      %v588 = vpop.f32.mrb[0].mxu0
      %v589 = vpop.f32.mrb[0].mxu0
      %v590 = vadd.f32 0.0, %v589
      %v591 = vpop.f32.mrb[0].mxu0
      %592 = vmatprep.mubr.bf16.mxu0 %v371
      %593 = vmatmul.mubr.bf16.gmra.mrb[0].mxu0 %v370
      %v594 = vpop.f32.mrb[0].mxu0
      %v595 = vadd.f32 0.0, %v594
      %v596 = vpop.f32.mrb[0].mxu0
      %v597 = vpop.f32.mrb[0].mxu0
      %v598 = vadd.f32 0.0, %v597
      %v599 = vpop.f32.mrb[0].mxu0
      %600 = vmatprep.mubr.bf16.mxu0 %v373
      %601 = vmatmul.mubr.bf16.gmra.mrb[0].mxu0 %v372
      %v602 = vpop.f32.mrb[0].mxu0
      %v603 = vadd.f32 0.0, %v602
      %v604 = vpop.f32.mrb[0].mxu0
      %v605 = vpop.f32.mrb[0].mxu0
      %v606 = vadd.f32 0.0, %v605
      %v607 = vpop.f32.mrb[0].mxu0
      %608 = vmatprep.mubr.bf16.mxu0 %v375
      %609 = vmatmul.mubr.bf16.gmra.mrb[0].mxu0 %v374
      %v610 = vpop.f32.mrb[0].mxu0
      %v611 = vadd.f32 0.0, %v610
      %v612 = vpop.f32.mrb[0].mxu0
      %v613 = vpop.f32.mrb[0].mxu0
      %v614 = vadd.f32 0.0, %v613
      %v615 = vpop.f32.mrb[0].mxu0
      %616 = vmatprep.mubr.bf16.mxu0 %v377
      %617 = vmatmul.mubr.bf16.gmra.mrb[0].mxu0 %v376
      %v618 = vpop.f32.mrb[0].mxu0
      %v619 = vadd.f32 0.0, %v618
      %v620 = vpop.f32.mrb[0].mxu0
      %v621 = vpop.f32.mrb[0].mxu0
      %v622 = vadd.f32 0.0, %v621
      %v623 = vpop.f32.mrb[0].mxu0
      %624 = vmatprep.mubr.bf16.mxu0 %v379
      %625 = vmatmul.mubr.bf16.gmra.mrb[0].mxu0 %v378
      %v626 = vpop.f32.mrb[0].mxu0
      %v627 = vadd.f32 0.0, %v626
      %v628 = vpop.f32.mrb[0].mxu0
      %v629 = vpop.f32.mrb[0].mxu0
      %v630 = vadd.f32 0.0, %v629
      %v631 = vpop.f32.mrb[0].mxu0
      %632 = vmatprep.mubr.bf16.mxu0 %v381
      %633 = vmatmul.mubr.bf16.gmra.mrb[0].mxu0 %v380
      %v634 = vpop.f32.mrb[0].mxu0
      %v635 = vadd.f32 0.0, %v634
      %v636 = vpop.f32.mrb[0].mxu0
      %v637 = vpop.f32.mrb[0].mxu0
      %v638 = vadd.f32 0.0, %v637
      %v639 = vpop.f32.mrb[0].mxu0
      %640 = vmatprep.mubr.bf16.mxu0 %v383
      %641 = vmatmul.mubr.bf16.gmra.mrb[0].mxu0 %v382
      %v642 = vpop.f32.mrb[0].mxu0
      %v643 = vadd.f32 0.0, %v642
      %v644 = vpop.f32.mrb[0].mxu0
      %v645 = vpop.f32.mrb[0].mxu0
      %v646 = vadd.f32 0.0, %v645
      %v647 = vpop.f32.mrb[0].mxu0
      %648 = vmatprep.mubr.bf16.mxu0 %v385
      %649 = vmatmul.mubr.bf16.gmra.mrb[0].mxu0 %v384
      %v650 = vpop.f32.mrb[0].mxu0
      %v651 = vadd.f32 0.0, %v650
      %v652 = vpop.f32.mrb[0].mxu0
      %v653 = vpop.f32.mrb[0].mxu0
      %v654 = vadd.f32 0.0, %v653
      %v655 = vpop.f32.mrb[0].mxu0
      %656 = vmatprep.mubr.bf16.mxu0 %v387
      %657 = vmatmul.mubr.bf16.gmra.mrb[0].mxu0 %v386
      %v658 = vpop.f32.mrb[0].mxu0
      %v659 = vadd.f32 0.0, %v658
      %v660 = vpop.f32.mrb[0].mxu0
      %v661 = vpop.f32.mrb[0].mxu0
      %v662 = vadd.f32 0.0, %v661
      %v663 = vpop.f32.mrb[0].mxu0
      %664 = vmatprep.mubr.bf16.mxu0 %v389
      %665 = vmatmul.mubr.bf16.gmra.mrb[0].mxu0 %v388
      %v666 = vpop.f32.mrb[0].mxu0
      %v667 = vadd.f32 0.0, %v666
      %v668 = vpop.f32.mrb[0].mxu0
      %v669 = vpop.f32.mrb[0].mxu0
      %v670 = vadd.f32 0.0, %v669
      %v671 = vpop.f32.mrb[0].mxu0
      %672 = vmatprep.mubr.bf16.mxu0 %v391
      %673 = vmatmul.mubr.bf16.gmra.mrb[0].mxu0 %v390
      %v674 = vpop.f32.mrb[0].mxu0
      %v675 = vadd.f32 0.0, %v674
      %v676 = vpop.f32.mrb[0].mxu0
      %v677 = vpop.f32.mrb[0].mxu0
      %v678 = vadd.f32 0.0, %v677
      %v679 = vpop.f32.mrb[0].mxu0
      %680 = vdwg.mxu0
      %681 = vst [vmem:[%s197] sm:$0xff] %v555
      %682 = vst [vmem:[%s197 + $0x8] sm:$0xff] %v558
      %683 = vst [vmem:[%s197 + $0x10] sm:$0xff] %v563
      %684 = vst [vmem:[%s197 + $0x18] sm:$0xff] %v566
      %685 = vst [vmem:[%s197 + $0x20] sm:$0xff] %v571
      %686 = vst [vmem:[%s197 + $0x28] sm:$0xff] %v574
      %687 = vst [vmem:[%s197 + $0x30] sm:$0xff] %v579
      %688 = vst [vmem:[%s197 + $0x38] sm:$0xff] %v582
      %689 = vst [vmem:[%s197 + $0x40] sm:$0xff] %v587
      %690 = vst [vmem:[%s197 + $0x48] sm:$0xff] %v590
      %691 = vst [vmem:[%s197 + $0x50] sm:$0xff] %v595
      %692 = vst [vmem:[%s197 + $0x58] sm:$0xff] %v598
      %693 = vst [vmem:[%s197 + $0x60] sm:$0xff] %v603
      %694 = vst [vmem:[%s197 + $0x68] sm:$0xff] %v606
      %695 = vst [vmem:[%s197 + $0x70] sm:$0xff] %v611
      %696 = vst [vmem:[%s197 + $0x78] sm:$0xff] %v614
      %697 = vst [vmem:[%s197 + $0x80] sm:$0xff] %v619
      %698 = vst [vmem:[%s197 + $0x88] sm:$0xff] %v622
      %699 = vst [vmem:[%s197 + $0x90] sm:$0xff] %v627
      %700 = vst [vmem:[%s197 + $0x98] sm:$0xff] %v630
      %701 = vst [vmem:[%s197 + $0xa0] sm:$0xff] %v635
      %702 = vst [vmem:[%s197 + $0xa8] sm:$0xff] %v638
      %703 = vst [vmem:[%s197 + $0xb0] sm:$0xff] %v643
      %704 = vst [vmem:[%s197 + $0xb8] sm:$0xff] %v646
      %705 = vst [vmem:[%s197 + $0xc0] sm:$0xff] %v651
      %706 = vst [vmem:[%s197 + $0xc8] sm:$0xff] %v654
      %707 = vst [vmem:[%s197 + $0xd0] sm:$0xff] %v659
      %708 = vst [vmem:[%s197 + $0xd8] sm:$0xff] %v662
      %709 = vst [vmem:[%s197 + $0xe0] sm:$0xff] %v667
      %710 = vst [vmem:[%s197 + $0xe8] sm:$0xff] %v670
      %711 = vst [vmem:[%s197 + $0xf0] sm:$0xff] %v675
      %712 = vst [vmem:[%s197 + $0xf8] sm:$0xff] %v678
      %p713 = scmp.eq.s32.totalorder %s16, 0
      // Predicated region
      $region29: #{wgan_generator_forward.11} parent=27 // pred_check
        %p714 = pneg %p713
      $region30: #{wgan_generator_forward.11} parent=27 // pred_check_branch
        %716 = sbr.rel (%p714) target = $region32
      $region31: #{wgan_generator_forward.11} parent=27 // pred_region
        %717 = vst [vmem:[%s3] sm:$0x1] 0.0
        %718 = vst [vmem:[%s4] sm:$0x1] 0.0
      $region32: #{wgan_generator_forward.11} parent=27 // pred_fallthru
        _
      %v719 = vld [vmem:[%s3] sm:$0x1]
      %v720 = vadd.f32 %v555, %v558
      %v721 = vadd.f32 %v720, %v563
      %v722 = vadd.f32 %v721, %v566
      %v723 = vadd.f32 %v722, %v571
      %v724 = vadd.f32 %v723, %v574
      %v725 = vadd.f32 %v724, %v579
      %v726 = vadd.f32 %v725, %v582
      %v727 = vadd.f32 %v726, %v587
      %v728 = vadd.f32 %v727, %v590
      %v729 = vadd.f32 %v728, %v595
      %v730 = vadd.f32 %v729, %v598
      %v731 = vadd.f32 %v730, %v603
      %v732 = vadd.f32 %v731, %v606
      %v733 = vadd.f32 %v732, %v611
      %v734 = vadd.f32 %v733, %v614
      %v735 = vadd.f32 %v734, %v619
      %v736 = vadd.f32 %v735, %v622
      %v737 = vadd.f32 %v736, %v627
      %v738 = vadd.f32 %v737, %v630
      %v739 = vadd.f32 %v738, %v635
      %v740 = vadd.f32 %v739, %v638
      %v741 = vadd.f32 %v740, %v643
      %v742 = vadd.f32 %v741, %v646
      %v743 = vadd.f32 %v742, %v651
      %v744 = vadd.f32 %v743, %v654
      %v745 = vadd.f32 %v744, %v659
      %v746 = vadd.f32 %v745, %v662
      %v747 = vadd.f32 %v746, %v667
      %v748 = vadd.f32 %v747, %v670
      %v749 = vadd.f32 %v748, %v675
      %v750 = vadd.f32 %v749, %v678
      %v751 = vrot.slane %v750, 4
      %v752 = vadd.f32 %v750, %v751
      %v753 = vrot.slane %v752, 2
      %v754 = vadd.f32 %v752, %v753
      %v755 = vrot.slane %v754, 1
      %v756 = vadd.f32 %v754, %v755
      %v757 = vadd.f32 %v719, %v756
      %758 = vst [vmem:[%s3] sm:$0x1] %v757
      %v759 = vld [vmem:[%s4] sm:$0x1]
      %v760 = vmul.f32 %v555, %v555
      %v761 = vmul.f32 %v558, %v558
      %v762 = vmul.f32 %v563, %v563
      %v763 = vmul.f32 %v566, %v566
      %v764 = vmul.f32 %v571, %v571
      %v765 = vmul.f32 %v574, %v574
      %v766 = vmul.f32 %v579, %v579
      %v767 = vmul.f32 %v582, %v582
      %v768 = vmul.f32 %v587, %v587
      %v769 = vmul.f32 %v590, %v590
      %v770 = vmul.f32 %v595, %v595
      %v771 = vmul.f32 %v598, %v598
      %v772 = vmul.f32 %v603, %v603
      %v773 = vmul.f32 %v606, %v606
      %v774 = vmul.f32 %v611, %v611
      %v775 = vmul.f32 %v614, %v614
      %v776 = vmul.f32 %v619, %v619
      %v777 = vmul.f32 %v622, %v622
      %v778 = vmul.f32 %v627, %v627
      %v779 = vmul.f32 %v630, %v630
      %v780 = vmul.f32 %v635, %v635
      %v781 = vmul.f32 %v638, %v638
      %v782 = vmul.f32 %v643, %v643
      %v783 = vmul.f32 %v646, %v646
      %v784 = vmul.f32 %v651, %v651
      %v785 = vmul.f32 %v654, %v654
      %v786 = vmul.f32 %v659, %v659
      %v787 = vmul.f32 %v662, %v662
      %v788 = vmul.f32 %v667, %v667
      %v789 = vmul.f32 %v670, %v670
      %v790 = vmul.f32 %v675, %v675
      %v791 = vmul.f32 %v678, %v678
      %v792 = vadd.f32 %v760, %v761
      %v793 = vadd.f32 %v792, %v762
      %v794 = vadd.f32 %v793, %v763
      %v795 = vadd.f32 %v794, %v764
      %v796 = vadd.f32 %v795, %v765
      %v797 = vadd.f32 %v796, %v766
      %v798 = vadd.f32 %v797, %v767
      %v799 = vadd.f32 %v798, %v768
      %v800 = vadd.f32 %v799, %v769
      %v801 = vadd.f32 %v800, %v770
      %v802 = vadd.f32 %v801, %v771
      %v803 = vadd.f32 %v802, %v772
      %v804 = vadd.f32 %v803, %v773
      %v805 = vadd.f32 %v804, %v774
      %v806 = vadd.f32 %v805, %v775
      %v807 = vadd.f32 %v806, %v776
      %v808 = vadd.f32 %v807, %v777
      %v809 = vadd.f32 %v808, %v778
      %v810 = vadd.f32 %v809, %v779
      %v811 = vadd.f32 %v810, %v780
      %v812 = vadd.f32 %v811, %v781
      %v813 = vadd.f32 %v812, %v782
      %v814 = vadd.f32 %v813, %v783
      %v815 = vadd.f32 %v814, %v784
      %v816 = vadd.f32 %v815, %v785
      %v817 = vadd.f32 %v816, %v786
      %v818 = vadd.f32 %v817, %v787
      %v819 = vadd.f32 %v818, %v788
      %v820 = vadd.f32 %v819, %v789
      %v821 = vadd.f32 %v820, %v790
      %v822 = vadd.f32 %v821, %v791
      %v823 = vrot.slane %v822, 4
      %v824 = vadd.f32 %v822, %v823
      %v825 = vrot.slane %v824, 2
      %v826 = vadd.f32 %v824, %v825
      %v827 = vrot.slane %v826, 1
      %v828 = vadd.f32 %v826, %v827
      %v829 = vadd.f32 %v759, %v828
      %830 = vst [vmem:[%s4] sm:$0x1] %v829
      %s831 = smul.u32 32, %s16
      %p832 = scmp.lt.s32.totalorder %s831, 63
      %s833 = scalar_select %p832, %s831, 63
      %s834 = smul.addr %s833, 8
      %s835 = scalar_lea.vmem %s2, %s834
      // Predicated region
      $region33: #{wgan_generator_forward.11} parent=27 // pred_check
        %p836 = pneg %p81
      $region34: #{wgan_generator_forward.11} parent=27 // pred_check_branch
        %838 = sbr.rel (%p836) target = $region36
      $region35: #{wgan_generator_forward.11} parent=27 // pred_region
        %s839 = smul.u32 32, %s16
      $region36: #{wgan_generator_forward.11} parent=27 // pred_fallthru
        _
      // Predicated region
      $region37: #{wgan_generator_forward.11} parent=27 // pred_check
        %p840 = pneg %p102
      $region38: #{wgan_generator_forward.11} parent=27 // pred_check_branch
        %842 = sbr.rel (%p840) target = $region40
      $region39: #{wgan_generator_forward.11} parent=27 // pred_region
        _
      $region40: #{wgan_generator_forward.11} parent=27 // pred_fallthru
        _
      // Predicated region
      $region41: #{wgan_generator_forward.11} parent=27 // pred_check
        %p843 = pneg %p123
      $region42: #{wgan_generator_forward.11} parent=27 // pred_check_branch
        %845 = sbr.rel (%p843) target = $region44
      $region43: #{wgan_generator_forward.11} parent=27 // pred_region
        _
      $region44: #{wgan_generator_forward.11} parent=27 // pred_fallthru
        _
      // Predicated region
      $region45: #{wgan_generator_forward.11} parent=27 // pred_check
        %p846 = pneg %p102
      $region46: #{wgan_generator_forward.11} parent=27 // pred_check_branch
        %848 = sbr.rel (%p846) target = $region48
      $region47: #{wgan_generator_forward.11} parent=27 // pred_region
        _
      $region48: #{wgan_generator_forward.11} parent=27 // pred_fallthru
        _
      // Predicated region
      $region49: #{wgan_generator_forward.11} parent=27 // pred_check
        %p849 = pneg %p123
      $region50: #{wgan_generator_forward.11} parent=27 // pred_check_branch
        %851 = sbr.rel (%p849) target = $region52
      $region51: #{wgan_generator_forward.11} parent=27 // pred_region
        _
      $region52: #{wgan_generator_forward.11} parent=27 // pred_fallthru
        _
    $region28: #{wgan_generator_forward.11} parent=5 // pred_fallthru
      _
    %p852 = scmp.le.s32.totalorder 2, %s11
    // Predicated region
    $region53: #{wgan_generator_forward.11} parent=5 // pred_check
      %p853 = pneg %p852
    $region54: #{wgan_generator_forward.11} parent=5 // pred_check_branch
      %855 = sbr.rel (%p853) target = $region56
    $region55: #{wgan_generator_forward.11} parent=5 // pred_region
      %s856 = ssub.s32 %s11, 2
      // Predicated region
      $region57: #{wgan_generator_forward.11} parent=55 // pred_check
        %p857 = pneg %p87
      $region58: #{wgan_generator_forward.11} parent=55 // pred_check_branch
        %859 = sbr.rel (%p857) target = $region60
      $region59: #{wgan_generator_forward.11} parent=55 // pred_region
        %s860 = smul.u32 32, %s17
        %p861 = scmp.lt.s32.totalorder %s860, 63
        %s862 = scalar_select %p861, %s860, 63
        %s863 = smul.addr %s862, 8
        %s864 = scalar_lea.vmem %s2, %s863
      $region60: #{wgan_generator_forward.11} parent=55 // pred_fallthru
        _
    $region56: #{wgan_generator_forward.11} parent=5 // pred_fallthru
      _
  $region6: #{wgan_generator_forward.11} parent=0 // loop_footer
    %s15 = sadd.s32 1, %s11
  $region7: #{wgan_generator_forward.11} parent=0 // loop_footer_branch
    %10 = sbr.rel target = $region3
  $region8: #{wgan_generator_forward.11} parent=0 // loop_exit
    _

// kernel: wgan_generator_forward.12
$region0: #{wgan_generator_forward.12}
  #allocation0 [shape = 'u32[]', space=smem, size = 0x4, offset = 0x4, fixed_abs, tag = 'smem constant byte address 0x4 - core index']
  #allocation1 [shape = 'u32[144,128]{1,0:T(1,128)}', space=vmem, size = 0x12000, scoped, tag = 'internal scratch']
  %s0 = inlined_call_operand.vmem [shape: f32[512,128], index: 0, kind: input, shape index: {}]
  %s1 = inlined_call_operand.vmem [shape: f32[1,128], index: 1, kind: input, shape index: {}]
  %s2 = inlined_call_operand.vmem [shape: f32[1,128], index: 2, kind: input, shape index: {}]
  %s3 = inlined_call_operand.vmem [shape: bf16[512,128], index: 3, kind: output, shape index: {}]
  %s4 = sld [smem:[#allocation0]]
  $region45: #{wgan_generator_forward.12} parent=0
    _
  %s6 = ssub.s32 1, %s4
  %s7 = scalar_select 0, %s6, %s4
  loop: start=0, step=1, limit=4
  $region2: #{wgan_generator_forward.12} parent=0 // loop_pre_header
    _
  $region3: #{wgan_generator_forward.12} parent=0 // loop_header
    %s9 = sphi 0, %s13
    %p10 = scmp.ge.s32.totalorder %s9, 4
    %s19 = sphi 0, %s21
    %s22 = sphi 0, %s19
    %s23 = sphi 0, %s22
    %s39 = sphi 0, %s23
    %s43 = sphi 0, %s43
    %s45 = sphi 0, %s43
    %s46 = sphi 0, %s45
    %s60 = sphi 0, %s46
    %s64 = sphi 0, %s64
    %s66 = sphi 0, %s64
    %s67 = sphi 0, %s66
    %s81 = sphi 0, %s67
    %s87 = sphi 0, %s89
    %s90 = sphi 0, %s87
    %s91 = sphi 0, %s90
    %s107 = sphi 0, %s91
  $region4: #{wgan_generator_forward.12} parent=0 // loop_header_branch
    %12 = sbr.rel (%p10) target = $region8
  $region5: #{wgan_generator_forward.12} parent=0 // loop_body
    %s14 = ssub.s32 %s9, 1
    %s15 = ssub.s32 %s9, 2
    %s16 = sadd.s32 %s9, 1
    %s17 = ssub.s32 %s9, %s16
    %p18 = scmp.eq.s32.totalorder %s17, 0
    %s20 = sadd.s32 %s19, 1
    %s21 = scalar_select %p18, %s19, %s20
    %p24 = pneg %p18
    %p25 = scmp.eq.s32.totalorder %s9, 1
    %p26 = por %p24, %p25
    %p27 = scmp.ne.s32.totalorder %s19, %s22
    %p28 = scmp.eq.s32.totalorder %s9, 0
    %p29 = por %p27, %p28
    %p30 = scmp.ne.s32.totalorder %s19, %s22
    %p31 = scmp.eq.s32.totalorder %s14, 1
    %p32 = por %p30, %p31
    %p33 = scmp.ne.s32.totalorder %s22, %s23
    %p34 = scmp.eq.s32.totalorder %s14, 0
    %p35 = por %p33, %p34
    %p36 = scmp.ne.s32.totalorder %s22, %s23
    %p37 = scmp.eq.s32.totalorder %s15, 1
    %p38 = por %p36, %p37
    %p40 = scmp.ne.s32.totalorder %s23, %s39
    %p41 = scmp.eq.s32.totalorder %s15, 0
    %p42 = por %p40, %p41
    %s44 = sadd.s32 %s43, 1
    %p47 = scmp.eq.s32.totalorder %s9, 1
    %p48 = scmp.ne.s32.totalorder %s43, %s45
    %p49 = scmp.eq.s32.totalorder %s9, 0
    %p50 = por %p48, %p49
    %p51 = scmp.ne.s32.totalorder %s43, %s45
    %p52 = scmp.eq.s32.totalorder %s14, 1
    %p53 = por %p51, %p52
    %p54 = scmp.ne.s32.totalorder %s45, %s46
    %p55 = scmp.eq.s32.totalorder %s14, 0
    %p56 = por %p54, %p55
    %p57 = scmp.ne.s32.totalorder %s45, %s46
    %p58 = scmp.eq.s32.totalorder %s15, 1
    %p59 = por %p57, %p58
    %p61 = scmp.ne.s32.totalorder %s46, %s60
    %p62 = scmp.eq.s32.totalorder %s15, 0
    %p63 = por %p61, %p62
    %s65 = sadd.s32 %s64, 1
    %p68 = scmp.eq.s32.totalorder %s9, 1
    %p69 = scmp.ne.s32.totalorder %s64, %s66
    %p70 = scmp.eq.s32.totalorder %s9, 0
    %p71 = por %p69, %p70
    %p72 = scmp.ne.s32.totalorder %s64, %s66
    %p73 = scmp.eq.s32.totalorder %s14, 1
    %p74 = por %p72, %p73
    %p75 = scmp.ne.s32.totalorder %s66, %s67
    %p76 = scmp.eq.s32.totalorder %s14, 0
    %p77 = por %p75, %p76
    %p78 = scmp.ne.s32.totalorder %s66, %s67
    %p79 = scmp.eq.s32.totalorder %s15, 1
    %p80 = por %p78, %p79
    %p82 = scmp.ne.s32.totalorder %s67, %s81
    %p83 = scmp.eq.s32.totalorder %s15, 0
    %p84 = por %p82, %p83
    %s85 = ssub.s32 %s9, %s16
    %p86 = scmp.eq.s32.totalorder %s85, 0
    %s88 = sadd.s32 %s87, 1
    %s89 = scalar_select %p86, %s87, %s88
    %p92 = pneg %p86
    %p93 = scmp.eq.s32.totalorder %s9, 1
    %p94 = por %p92, %p93
    %p95 = scmp.ne.s32.totalorder %s87, %s90
    %p96 = scmp.eq.s32.totalorder %s9, 0
    %p97 = por %p95, %p96
    %p98 = scmp.ne.s32.totalorder %s87, %s90
    %p99 = scmp.eq.s32.totalorder %s14, 1
    %p100 = por %p98, %p99
    %p101 = scmp.ne.s32.totalorder %s90, %s91
    %p102 = scmp.eq.s32.totalorder %s14, 0
    %p103 = por %p101, %p102
    %p104 = scmp.ne.s32.totalorder %s90, %s91
    %p105 = scmp.eq.s32.totalorder %s15, 1
    %p106 = por %p104, %p105
    %p108 = scmp.ne.s32.totalorder %s91, %s107
    %p109 = scmp.eq.s32.totalorder %s15, 0
    %p110 = por %p108, %p109
    %p111 = scmp.le.s32.totalorder 1, %s9
    %p112 = scmp.lt.s32.totalorder %s9, 3
    %p113 = pnand %p111, %p112
    %p114 = pneg %p113
    // Predicated region
    $region9: #{wgan_generator_forward.12} parent=5 // pred_check
      _
    $region10: #{wgan_generator_forward.12} parent=5 // pred_check_branch
      %116 = sbr.rel (%p113) target = $region12
    $region11: #{wgan_generator_forward.12} parent=5 // pred_region
      %s117 = ssub.s32 %s9, 1
      // Predicated region
      $region13: #{wgan_generator_forward.12} parent=11 // pred_check
        %p118 = pneg %p56
      $region14: #{wgan_generator_forward.12} parent=11 // pred_check_branch
        %120 = sbr.rel (%p118) target = $region16
      $region15: #{wgan_generator_forward.12} parent=11 // pred_region
        _
      $region16: #{wgan_generator_forward.12} parent=11 // pred_fallthru
        _
      // Predicated region
      $region17: #{wgan_generator_forward.12} parent=11 // pred_check
        %p121 = pneg %p77
      $region18: #{wgan_generator_forward.12} parent=11 // pred_check_branch
        %123 = sbr.rel (%p121) target = $region20
      $region19: #{wgan_generator_forward.12} parent=11 // pred_region
        _
      $region20: #{wgan_generator_forward.12} parent=11 // pred_fallthru
        _
    $region12: #{wgan_generator_forward.12} parent=5 // pred_fallthru
      _
    %p124 = scmp.lt.s32.totalorder %s9, 2
    // Predicated region
    $region21: #{wgan_generator_forward.12} parent=5 // pred_check
      %p125 = pneg %p124
    $region22: #{wgan_generator_forward.12} parent=5 // pred_check_branch
      %127 = sbr.rel (%p125) target = $region24
    $region23: #{wgan_generator_forward.12} parent=5 // pred_region
      // Predicated region
      $region25: #{wgan_generator_forward.12} parent=23 // pred_check
        %p128 = pneg %p29
      $region26: #{wgan_generator_forward.12} parent=23 // pred_check_branch
        %130 = sbr.rel (%p128) target = $region28
      $region27: #{wgan_generator_forward.12} parent=23 // pred_region
        %s131 = smul.u32 32, %s9
        %p132 = scmp.lt.s32.totalorder %s131, 63
        %s133 = scalar_select %p132, %s131, 63
        %s134 = smul.addr %s133, 8
        %s135 = scalar_lea.vmem %s0, %s134
        %s136 = smul.u32 32, %s9
      $region28: #{wgan_generator_forward.12} parent=23 // pred_fallthru
        _
    $region24: #{wgan_generator_forward.12} parent=5 // pred_fallthru
      _
    %p137 = scmp.le.s32.totalorder 1, %s9
    %p138 = scmp.lt.s32.totalorder %s9, 3
    %p139 = pnand %p137, %p138
    %p140 = pneg %p139
    // Predicated region
    $region29: #{wgan_generator_forward.12} parent=5 // pred_check
      _
    $region30: #{wgan_generator_forward.12} parent=5 // pred_check_branch
      %142 = sbr.rel (%p139) target = $region32
    $region31: #{wgan_generator_forward.12} parent=5 // pred_region
      %s143 = ssub.s32 %s9, 1
      %s144 = smul.u32 32, %s14
      %p145 = scmp.lt.s32.totalorder %s144, 63
      %s146 = scalar_select %p145, %s144, 63
      %s147 = smul.addr %s146, 8
      %s148 = scalar_lea.vmem %s0, %s147
      %p149 = pneg %p35
      %p150 = pneg %p32
      %p151 = pneg %p56
      %p152 = pneg %p53
      %p153 = pneg %p77
      %p154 = pneg %p74
      %p155 = pneg %p103
      %p156 = pneg %p100
      %s157 = smul.u32 32, %s14
      %p158 = scmp.lt.s32.totalorder %s157, 63
      %s159 = scalar_select %p158, %s157, 63
      %s160 = smul.addr %s159, 4
      %s161 = scalar_lea.vmem %s3, %s160
      %s162 = smul.u32 32, %s14
      %p163 = scmp.lt.s32.totalorder %s162, 63
      %s164 = scalar_select %p163, %s162, 63
      %s165 = smul.addr %s164, 8
      %s166 = scalar_lea.vmem %s0, %s165
      %s167 = smul.u32 32, %s14
      %s168 = smul.u32 32, %s14
      %p169 = scmp.lt.s32.totalorder %s168, 63
      %s170 = scalar_select %p169, %s168, 63
      %s171 = smul.addr %s170, 4
      %s172 = scalar_lea.vmem %s3, %s171
      %s173 = smul.u32 32, %s14
      %v174 = vld [vmem:[%s166] sm:$0xff]
      %v175 = vld [vmem:[%s166 + $0x8] sm:$0xff]
      %v176 = vld [vmem:[%s166 + $0x10] sm:$0xff]
      %v177 = vld [vmem:[%s166 + $0x18] sm:$0xff]
      %v178 = vld [vmem:[%s166 + $0x20] sm:$0xff]
      %v179 = vld [vmem:[%s166 + $0x28] sm:$0xff]
      %v180 = vld [vmem:[%s166 + $0x30] sm:$0xff]
      %v181 = vld [vmem:[%s166 + $0x38] sm:$0xff]
      %v182 = vld [vmem:[%s166 + $0x40] sm:$0xff]
      %v183 = vld [vmem:[%s166 + $0x48] sm:$0xff]
      %v184 = vld [vmem:[%s166 + $0x50] sm:$0xff]
      %v185 = vld [vmem:[%s166 + $0x58] sm:$0xff]
      %v186 = vld [vmem:[%s166 + $0x60] sm:$0xff]
      %v187 = vld [vmem:[%s166 + $0x68] sm:$0xff]
      %v188 = vld [vmem:[%s166 + $0x70] sm:$0xff]
      %v189 = vld [vmem:[%s166 + $0x78] sm:$0xff]
      %v190 = vld [vmem:[%s166 + $0x80] sm:$0xff]
      %v191 = vld [vmem:[%s166 + $0x88] sm:$0xff]
      %v192 = vld [vmem:[%s166 + $0x90] sm:$0xff]
      %v193 = vld [vmem:[%s166 + $0x98] sm:$0xff]
      %v194 = vld [vmem:[%s166 + $0xa0] sm:$0xff]
      %v195 = vld [vmem:[%s166 + $0xa8] sm:$0xff]
      %v196 = vld [vmem:[%s166 + $0xb0] sm:$0xff]
      %v197 = vld [vmem:[%s166 + $0xb8] sm:$0xff]
      %v198 = vld [vmem:[%s166 + $0xc0] sm:$0xff]
      %v199 = vld [vmem:[%s166 + $0xc8] sm:$0xff]
      %v200 = vld [vmem:[%s166 + $0xd0] sm:$0xff]
      %v201 = vld [vmem:[%s166 + $0xd8] sm:$0xff]
      %v202 = vld [vmem:[%s166 + $0xe0] sm:$0xff]
      %v203 = vld [vmem:[%s166 + $0xe8] sm:$0xff]
      %v204 = vld [vmem:[%s166 + $0xf0] sm:$0xff]
      %v205 = vld [vmem:[%s166 + $0xf8] sm:$0xff]
      %v206 = vld [vmem:[%s1] sm:$0x1]
      %v208 = vlaneseq
      %v209 = vshrl.u32 %v208, 7
      %v210 = vsub.s32 0, %v209
      %v211 = vrot.slane %v206, %v210
      %v213 = vmul.f32 %v174, %v211
      %v214 = vmul.f32 %v175, %v211
      %v215 = vmul.f32 %v176, %v211
      %v216 = vmul.f32 %v177, %v211
      %v217 = vmul.f32 %v178, %v211
      %v218 = vmul.f32 %v179, %v211
      %v219 = vmul.f32 %v180, %v211
      %v220 = vmul.f32 %v181, %v211
      %v221 = vmul.f32 %v182, %v211
      %v222 = vmul.f32 %v183, %v211
      %v223 = vmul.f32 %v184, %v211
      %v224 = vmul.f32 %v185, %v211
      %v225 = vmul.f32 %v186, %v211
      %v226 = vmul.f32 %v187, %v211
      %v227 = vmul.f32 %v188, %v211
      %v228 = vmul.f32 %v189, %v211
      %v229 = vmul.f32 %v190, %v211
      %v230 = vmul.f32 %v191, %v211
      %v231 = vmul.f32 %v192, %v211
      %v232 = vmul.f32 %v193, %v211
      %v233 = vmul.f32 %v194, %v211
      %v234 = vmul.f32 %v195, %v211
      %v235 = vmul.f32 %v196, %v211
      %v236 = vmul.f32 %v197, %v211
      %v237 = vmul.f32 %v198, %v211
      %v238 = vmul.f32 %v199, %v211
      %v239 = vmul.f32 %v200, %v211
      %v240 = vmul.f32 %v201, %v211
      %v241 = vmul.f32 %v202, %v211
      %v242 = vmul.f32 %v203, %v211
      %v243 = vmul.f32 %v204, %v211
      %v244 = vmul.f32 %v205, %v211
      %v245 = vld [vmem:[%s2] sm:$0x1]
      %v247 = vlaneseq
      %v248 = vshrl.u32 %v247, 7
      %v249 = vsub.s32 0, %v248
      %v250 = vrot.slane %v245, %v249
      %v252 = vadd.f32 %v213, %v250
      %v253 = vadd.f32 %v214, %v250
      %v254 = vadd.f32 %v215, %v250
      %v255 = vadd.f32 %v216, %v250
      %v256 = vadd.f32 %v217, %v250
      %v257 = vadd.f32 %v218, %v250
      %v258 = vadd.f32 %v219, %v250
      %v259 = vadd.f32 %v220, %v250
      %v260 = vadd.f32 %v221, %v250
      %v261 = vadd.f32 %v222, %v250
      %v262 = vadd.f32 %v223, %v250
      %v263 = vadd.f32 %v224, %v250
      %v264 = vadd.f32 %v225, %v250
      %v265 = vadd.f32 %v226, %v250
      %v266 = vadd.f32 %v227, %v250
      %v267 = vadd.f32 %v228, %v250
      %v268 = vadd.f32 %v229, %v250
      %v269 = vadd.f32 %v230, %v250
      %v270 = vadd.f32 %v231, %v250
      %v271 = vadd.f32 %v232, %v250
      %v272 = vadd.f32 %v233, %v250
      %v273 = vadd.f32 %v234, %v250
      %v274 = vadd.f32 %v235, %v250
      %v275 = vadd.f32 %v236, %v250
      %v276 = vadd.f32 %v237, %v250
      %v277 = vadd.f32 %v238, %v250
      %v278 = vadd.f32 %v239, %v250
      %v279 = vadd.f32 %v240, %v250
      %v280 = vadd.f32 %v241, %v250
      %v281 = vadd.f32 %v242, %v250
      %v282 = vadd.f32 %v243, %v250
      %v283 = vadd.f32 %v244, %v250
      %v284 = vmax.f32 %v252, 0.0
      %v285 = vmax.f32 %v253, 0.0
      %v286 = vmax.f32 %v254, 0.0
      %v287 = vmax.f32 %v255, 0.0
      %v288 = vmax.f32 %v256, 0.0
      %v289 = vmax.f32 %v257, 0.0
      %v290 = vmax.f32 %v258, 0.0
      %v291 = vmax.f32 %v259, 0.0
      %v292 = vmax.f32 %v260, 0.0
      %v293 = vmax.f32 %v261, 0.0
      %v294 = vmax.f32 %v262, 0.0
      %v295 = vmax.f32 %v263, 0.0
      %v296 = vmax.f32 %v264, 0.0
      %v297 = vmax.f32 %v265, 0.0
      %v298 = vmax.f32 %v266, 0.0
      %v299 = vmax.f32 %v267, 0.0
      %v300 = vmax.f32 %v268, 0.0
      %v301 = vmax.f32 %v269, 0.0
      %v302 = vmax.f32 %v270, 0.0
      %v303 = vmax.f32 %v271, 0.0
      %v304 = vmax.f32 %v272, 0.0
      %v305 = vmax.f32 %v273, 0.0
      %v306 = vmax.f32 %v274, 0.0
      %v307 = vmax.f32 %v275, 0.0
      %v308 = vmax.f32 %v276, 0.0
      %v309 = vmax.f32 %v277, 0.0
      %v310 = vmax.f32 %v278, 0.0
      %v311 = vmax.f32 %v279, 0.0
      %v312 = vmax.f32 %v280, 0.0
      %v313 = vmax.f32 %v281, 0.0
      %v314 = vmax.f32 %v282, 0.0
      %v315 = vmax.f32 %v283, 0.0
      %v316 = vpack.c.bf16 %v285, %v284
      %v317 = vpack.c.bf16 %v287, %v286
      %v318 = vpack.c.bf16 %v289, %v288
      %v319 = vpack.c.bf16 %v291, %v290
      %v320 = vpack.c.bf16 %v293, %v292
      %v321 = vpack.c.bf16 %v295, %v294
      %v322 = vpack.c.bf16 %v297, %v296
      %v323 = vpack.c.bf16 %v299, %v298
      %v324 = vpack.c.bf16 %v301, %v300
      %v325 = vpack.c.bf16 %v303, %v302
      %v326 = vpack.c.bf16 %v305, %v304
      %v327 = vpack.c.bf16 %v307, %v306
      %v328 = vpack.c.bf16 %v309, %v308
      %v329 = vpack.c.bf16 %v311, %v310
      %v330 = vpack.c.bf16 %v313, %v312
      %v331 = vpack.c.bf16 %v315, %v314
      %v348 = vunpack.c.l.b16 %v316
      %v349 = vunpack.c.h.b16 %v316
      %v350 = vunpack.c.l.b16 %v317
      %v351 = vunpack.c.h.b16 %v317
      %v352 = vunpack.c.l.b16 %v318
      %v353 = vunpack.c.h.b16 %v318
      %v354 = vunpack.c.l.b16 %v319
      %v355 = vunpack.c.h.b16 %v319
      %v356 = vunpack.c.l.b16 %v320
      %v357 = vunpack.c.h.b16 %v320
      %v358 = vunpack.c.l.b16 %v321
      %v359 = vunpack.c.h.b16 %v321
      %v360 = vunpack.c.l.b16 %v322
      %v361 = vunpack.c.h.b16 %v322
      %v362 = vunpack.c.l.b16 %v323
      %v363 = vunpack.c.h.b16 %v323
      %v364 = vunpack.c.l.b16 %v324
      %v365 = vunpack.c.h.b16 %v324
      %v366 = vunpack.c.l.b16 %v325
      %v367 = vunpack.c.h.b16 %v325
      %v368 = vunpack.c.l.b16 %v326
      %v369 = vunpack.c.h.b16 %v326
      %v370 = vunpack.c.l.b16 %v327
      %v371 = vunpack.c.h.b16 %v327
      %v372 = vunpack.c.l.b16 %v328
      %v373 = vunpack.c.h.b16 %v328
      %v374 = vunpack.c.l.b16 %v329
      %v375 = vunpack.c.h.b16 %v329
      %v376 = vunpack.c.l.b16 %v330
      %v377 = vunpack.c.h.b16 %v330
      %v378 = vunpack.c.l.b16 %v331
      %v379 = vunpack.c.h.b16 %v331
      %v380 = vpack.c.b16 %v348, %v348
      %v381 = vpack.c.b16 %v349, %v349
      %v382 = vpack.c.b16 %v350, %v350
      %v383 = vpack.c.b16 %v351, %v351
      %v384 = vpack.c.b16 %v352, %v352
      %v385 = vpack.c.b16 %v353, %v353
      %v386 = vpack.c.b16 %v354, %v354
      %v387 = vpack.c.b16 %v355, %v355
      %v388 = vpack.c.b16 %v356, %v356
      %v389 = vpack.c.b16 %v357, %v357
      %v390 = vpack.c.b16 %v358, %v358
      %v391 = vpack.c.b16 %v359, %v359
      %v392 = vpack.c.b16 %v360, %v360
      %v393 = vpack.c.b16 %v361, %v361
      %v394 = vpack.c.b16 %v362, %v362
      %v395 = vpack.c.b16 %v363, %v363
      %v396 = vpack.c.b16 %v364, %v364
      %v397 = vpack.c.b16 %v365, %v365
      %v398 = vpack.c.b16 %v366, %v366
      %v399 = vpack.c.b16 %v367, %v367
      %v400 = vpack.c.b16 %v368, %v368
      %v401 = vpack.c.b16 %v369, %v369
      %v402 = vpack.c.b16 %v370, %v370
      %v403 = vpack.c.b16 %v371, %v371
      %v404 = vpack.c.b16 %v372, %v372
      %v405 = vpack.c.b16 %v373, %v373
      %v406 = vpack.c.b16 %v374, %v374
      %v407 = vpack.c.b16 %v375, %v375
      %v408 = vpack.c.b16 %v376, %v376
      %v409 = vpack.c.b16 %v377, %v377
      %v410 = vpack.c.b16 %v378, %v378
      %v411 = vpack.c.b16 %v379, %v379
      %444 = vst [vmem:[%s172] sm:$0xf] %v380
      %445 = vst [vmem:[%s172 + $0x4] sm:$0xf] %v381
      %446 = vst [vmem:[%s172 + $0x8] sm:$0xf] %v382
      %447 = vst [vmem:[%s172 + $0xc] sm:$0xf] %v383
      %448 = vst [vmem:[%s172 + $0x10] sm:$0xf] %v384
      %449 = vst [vmem:[%s172 + $0x14] sm:$0xf] %v385
      %450 = vst [vmem:[%s172 + $0x18] sm:$0xf] %v386
      %451 = vst [vmem:[%s172 + $0x1c] sm:$0xf] %v387
      %452 = vst [vmem:[%s172 + $0x20] sm:$0xf] %v388
      %453 = vst [vmem:[%s172 + $0x24] sm:$0xf] %v389
      %454 = vst [vmem:[%s172 + $0x28] sm:$0xf] %v390
      %455 = vst [vmem:[%s172 + $0x2c] sm:$0xf] %v391
      %456 = vst [vmem:[%s172 + $0x30] sm:$0xf] %v392
      %457 = vst [vmem:[%s172 + $0x34] sm:$0xf] %v393
      %458 = vst [vmem:[%s172 + $0x38] sm:$0xf] %v394
      %459 = vst [vmem:[%s172 + $0x3c] sm:$0xf] %v395
      %460 = vst [vmem:[%s172 + $0x40] sm:$0xf] %v396
      %461 = vst [vmem:[%s172 + $0x44] sm:$0xf] %v397
      %462 = vst [vmem:[%s172 + $0x48] sm:$0xf] %v398
      %463 = vst [vmem:[%s172 + $0x4c] sm:$0xf] %v399
      %464 = vst [vmem:[%s172 + $0x50] sm:$0xf] %v400
      %465 = vst [vmem:[%s172 + $0x54] sm:$0xf] %v401
      %466 = vst [vmem:[%s172 + $0x58] sm:$0xf] %v402
      %467 = vst [vmem:[%s172 + $0x5c] sm:$0xf] %v403
      %468 = vst [vmem:[%s172 + $0x60] sm:$0xf] %v404
      %469 = vst [vmem:[%s172 + $0x64] sm:$0xf] %v405
      %470 = vst [vmem:[%s172 + $0x68] sm:$0xf] %v406
      %471 = vst [vmem:[%s172 + $0x6c] sm:$0xf] %v407
      %472 = vst [vmem:[%s172 + $0x70] sm:$0xf] %v408
      %473 = vst [vmem:[%s172 + $0x74] sm:$0xf] %v409
      %474 = vst [vmem:[%s172 + $0x78] sm:$0xf] %v410
      %475 = vst [vmem:[%s172 + $0x7c] sm:$0xf] %v411
      %s476 = smul.u32 32, %s14
      %p477 = scmp.lt.s32.totalorder %s476, 63
      %s478 = scalar_select %p477, %s476, 63
      %s479 = smul.addr %s478, 4
      %s480 = scalar_lea.vmem %s3, %s479
      // Predicated region
      $region33: #{wgan_generator_forward.12} parent=31 // pred_check
        %p481 = pneg %p100
      $region34: #{wgan_generator_forward.12} parent=31 // pred_check_branch
        %483 = sbr.rel (%p481) target = $region36
      $region35: #{wgan_generator_forward.12} parent=31 // pred_region
        %s484 = smul.u32 32, %s14
      $region36: #{wgan_generator_forward.12} parent=31 // pred_fallthru
        _
    $region32: #{wgan_generator_forward.12} parent=5 // pred_fallthru
      _
    %p485 = scmp.le.s32.totalorder 2, %s9
    // Predicated region
    $region37: #{wgan_generator_forward.12} parent=5 // pred_check
      %p486 = pneg %p485
    $region38: #{wgan_generator_forward.12} parent=5 // pred_check_branch
      %488 = sbr.rel (%p486) target = $region40
    $region39: #{wgan_generator_forward.12} parent=5 // pred_region
      %s489 = ssub.s32 %s9, 2
      // Predicated region
      $region41: #{wgan_generator_forward.12} parent=39 // pred_check
        %p490 = pneg %p106
      $region42: #{wgan_generator_forward.12} parent=39 // pred_check_branch
        %492 = sbr.rel (%p490) target = $region44
      $region43: #{wgan_generator_forward.12} parent=39 // pred_region
        %s493 = smul.u32 32, %s15
        %p494 = scmp.lt.s32.totalorder %s493, 63
        %s495 = scalar_select %p494, %s493, 63
        %s496 = smul.addr %s495, 4
        %s497 = scalar_lea.vmem %s3, %s496
      $region44: #{wgan_generator_forward.12} parent=39 // pred_fallthru
        _
    $region40: #{wgan_generator_forward.12} parent=5 // pred_fallthru
      _
  $region6: #{wgan_generator_forward.12} parent=0 // loop_footer
    %s13 = sadd.s32 1, %s9
  $region7: #{wgan_generator_forward.12} parent=0 // loop_footer_branch
    %8 = sbr.rel target = $region3
  $region8: #{wgan_generator_forward.12} parent=0 // loop_exit
    _

// kernel: wgan_generator_forward.13
$region0: #{wgan_generator_forward.13}
  #allocation0 [shape = 'u32[]', space=smem, size = 0x4, offset = 0x4, fixed_abs, tag = 'smem constant byte address 0x4 - core index']
  #allocation1 [shape = 'u32[144,128]{1,0:T(1,128)}', space=vmem, size = 0x12000, scoped, tag = 'internal scratch']
  %s0 = inlined_call_operand.vmem [shape: bf16[2048,128], index: 0, kind: input, shape index: {}]
  %s1 = inlined_call_operand.vmem [shape: bf16[128,128], index: 1, kind: input, shape index: {}]
  %s2 = inlined_call_operand.vmem [shape: f32[2048,128], index: 2, kind: output, shape index: {}]
  %s3 = sld [smem:[#allocation0]]
  $region41: #{wgan_generator_forward.13} parent=0
    _
  %s5 = ssub.s32 1, %s3
  %s6 = scalar_select 0, %s5, %s3
  loop: start=0, step=1, limit=10
  $region2: #{wgan_generator_forward.13} parent=0 // loop_pre_header
    _
  $region3: #{wgan_generator_forward.13} parent=0 // loop_header
    %s8 = sphi 0, %s12
    %p9 = scmp.ge.s32.totalorder %s8, 10
    %s18 = sphi 0, %s20
    %s21 = sphi 0, %s18
    %s22 = sphi 0, %s21
    %s38 = sphi 0, %s22
    %s42 = sphi 0, %s42
    %s44 = sphi 0, %s42
    %s45 = sphi 0, %s44
    %s59 = sphi 0, %s45
    %s65 = sphi 0, %s67
    %s68 = sphi 0, %s65
    %s69 = sphi 0, %s68
    %s85 = sphi 0, %s69
  $region4: #{wgan_generator_forward.13} parent=0 // loop_header_branch
    %11 = sbr.rel (%p9) target = $region8
  $region5: #{wgan_generator_forward.13} parent=0 // loop_body
    %s13 = ssub.s32 %s8, 1
    %s14 = ssub.s32 %s8, 2
    %s15 = sadd.s32 %s8, 1
    %s16 = ssub.s32 %s8, %s15
    %p17 = scmp.eq.s32.totalorder %s16, 0
    %s19 = sadd.s32 %s18, 1
    %s20 = scalar_select %p17, %s18, %s19
    %p23 = pneg %p17
    %p24 = scmp.eq.s32.totalorder %s8, 7
    %p25 = por %p23, %p24
    %p26 = scmp.ne.s32.totalorder %s18, %s21
    %p27 = scmp.eq.s32.totalorder %s8, 0
    %p28 = por %p26, %p27
    %p29 = scmp.ne.s32.totalorder %s18, %s21
    %p30 = scmp.eq.s32.totalorder %s13, 7
    %p31 = por %p29, %p30
    %p32 = scmp.ne.s32.totalorder %s21, %s22
    %p33 = scmp.eq.s32.totalorder %s13, 0
    %p34 = por %p32, %p33
    %p35 = scmp.ne.s32.totalorder %s21, %s22
    %p36 = scmp.eq.s32.totalorder %s14, 7
    %p37 = por %p35, %p36
    %p39 = scmp.ne.s32.totalorder %s22, %s38
    %p40 = scmp.eq.s32.totalorder %s14, 0
    %p41 = por %p39, %p40
    %s43 = sadd.s32 %s42, 1
    %p46 = scmp.eq.s32.totalorder %s8, 7
    %p47 = scmp.ne.s32.totalorder %s42, %s44
    %p48 = scmp.eq.s32.totalorder %s8, 0
    %p49 = por %p47, %p48
    %p50 = scmp.ne.s32.totalorder %s42, %s44
    %p51 = scmp.eq.s32.totalorder %s13, 7
    %p52 = por %p50, %p51
    %p53 = scmp.ne.s32.totalorder %s44, %s45
    %p54 = scmp.eq.s32.totalorder %s13, 0
    %p55 = por %p53, %p54
    %p56 = scmp.ne.s32.totalorder %s44, %s45
    %p57 = scmp.eq.s32.totalorder %s14, 7
    %p58 = por %p56, %p57
    %p60 = scmp.ne.s32.totalorder %s45, %s59
    %p61 = scmp.eq.s32.totalorder %s14, 0
    %p62 = por %p60, %p61
    %s63 = ssub.s32 %s8, %s15
    %p64 = scmp.eq.s32.totalorder %s63, 0
    %s66 = sadd.s32 %s65, 1
    %s67 = scalar_select %p64, %s65, %s66
    %p70 = pneg %p64
    %p71 = scmp.eq.s32.totalorder %s8, 7
    %p72 = por %p70, %p71
    %p73 = scmp.ne.s32.totalorder %s65, %s68
    %p74 = scmp.eq.s32.totalorder %s8, 0
    %p75 = por %p73, %p74
    %p76 = scmp.ne.s32.totalorder %s65, %s68
    %p77 = scmp.eq.s32.totalorder %s13, 7
    %p78 = por %p76, %p77
    %p79 = scmp.ne.s32.totalorder %s68, %s69
    %p80 = scmp.eq.s32.totalorder %s13, 0
    %p81 = por %p79, %p80
    %p82 = scmp.ne.s32.totalorder %s68, %s69
    %p83 = scmp.eq.s32.totalorder %s14, 7
    %p84 = por %p82, %p83
    %p86 = scmp.ne.s32.totalorder %s69, %s85
    %p87 = scmp.eq.s32.totalorder %s14, 0
    %p88 = por %p86, %p87
    %p89 = scmp.le.s32.totalorder 1, %s8
    %p90 = scmp.lt.s32.totalorder %s8, 9
    %p91 = pnand %p89, %p90
    %p92 = pneg %p91
    // Predicated region
    $region9: #{wgan_generator_forward.13} parent=5 // pred_check
      _
    $region10: #{wgan_generator_forward.13} parent=5 // pred_check_branch
      %94 = sbr.rel (%p91) target = $region12
    $region11: #{wgan_generator_forward.13} parent=5 // pred_region
      %s95 = ssub.s32 %s8, 1
      // Predicated region
      $region13: #{wgan_generator_forward.13} parent=11 // pred_check
        %p96 = pneg %p55
      $region14: #{wgan_generator_forward.13} parent=11 // pred_check_branch
        %98 = sbr.rel (%p96) target = $region16
      $region15: #{wgan_generator_forward.13} parent=11 // pred_region
        _
      $region16: #{wgan_generator_forward.13} parent=11 // pred_fallthru
        _
    $region12: #{wgan_generator_forward.13} parent=5 // pred_fallthru
      _
    %p99 = scmp.lt.s32.totalorder %s8, 8
    // Predicated region
    $region17: #{wgan_generator_forward.13} parent=5 // pred_check
      %p100 = pneg %p99
    $region18: #{wgan_generator_forward.13} parent=5 // pred_check_branch
      %102 = sbr.rel (%p100) target = $region20
    $region19: #{wgan_generator_forward.13} parent=5 // pred_region
      // Predicated region
      $region21: #{wgan_generator_forward.13} parent=19 // pred_check
        %p103 = pneg %p28
      $region22: #{wgan_generator_forward.13} parent=19 // pred_check_branch
        %105 = sbr.rel (%p103) target = $region24
      $region23: #{wgan_generator_forward.13} parent=19 // pred_region
        %s106 = smul.u32 32, %s8
        %p107 = scmp.lt.s32.totalorder %s106, 255
        %s108 = scalar_select %p107, %s106, 255
        %s109 = smul.addr %s108, 4
        %s110 = scalar_lea.vmem %s0, %s109
        %s111 = smul.u32 32, %s8
      $region24: #{wgan_generator_forward.13} parent=19 // pred_fallthru
        _
    $region20: #{wgan_generator_forward.13} parent=5 // pred_fallthru
      _
    %p112 = scmp.le.s32.totalorder 1, %s8
    %p113 = scmp.lt.s32.totalorder %s8, 9
    %p114 = pnand %p112, %p113
    %p115 = pneg %p114
    // Predicated region
    $region25: #{wgan_generator_forward.13} parent=5 // pred_check
      _
    $region26: #{wgan_generator_forward.13} parent=5 // pred_check_branch
      %117 = sbr.rel (%p114) target = $region28
    $region27: #{wgan_generator_forward.13} parent=5 // pred_region
      %s118 = ssub.s32 %s8, 1
      %s119 = smul.u32 32, %s13
      %p120 = scmp.lt.s32.totalorder %s119, 255
      %s121 = scalar_select %p120, %s119, 255
      %s122 = smul.addr %s121, 4
      %s123 = scalar_lea.vmem %s0, %s122
      %p124 = pneg %p34
      %p125 = pneg %p31
      %p126 = pneg %p55
      %p127 = pneg %p52
      %p128 = pneg %p81
      %p129 = pneg %p78
      %s130 = smul.u32 32, %s13
      %p131 = scmp.lt.s32.totalorder %s130, 255
      %s132 = scalar_select %p131, %s130, 255
      %s133 = smul.addr %s132, 8
      %s134 = scalar_lea.vmem %s2, %s133
      %s135 = smul.u32 32, %s13
      %p136 = scmp.lt.s32.totalorder %s135, 255
      %s137 = scalar_select %p136, %s135, 255
      %s138 = smul.addr %s137, 4
      %s139 = scalar_lea.vmem %s0, %s138
      %s140 = smul.u32 32, %s13
      %s141 = smul.u32 32, %s13
      %p142 = scmp.lt.s32.totalorder %s141, 255
      %s143 = scalar_select %p142, %s141, 255
      %s144 = smul.addr %s143, 8
      %s145 = scalar_lea.vmem %s2, %s144
      %s146 = smul.u32 32, %s13
      %v148 = vld [vmem:[%s139] sm:$0xf]
      %v149 = vld [vmem:[%s139 + $0x4] sm:$0xf]
      %v150 = vld [vmem:[%s139 + $0x8] sm:$0xf]
      %v151 = vld [vmem:[%s139 + $0xc] sm:$0xf]
      %v152 = vld [vmem:[%s139 + $0x10] sm:$0xf]
      %v153 = vld [vmem:[%s139 + $0x14] sm:$0xf]
      %v154 = vld [vmem:[%s139 + $0x18] sm:$0xf]
      %v155 = vld [vmem:[%s139 + $0x1c] sm:$0xf]
      %v156 = vld [vmem:[%s139 + $0x20] sm:$0xf]
      %v157 = vld [vmem:[%s139 + $0x24] sm:$0xf]
      %v158 = vld [vmem:[%s139 + $0x28] sm:$0xf]
      %v159 = vld [vmem:[%s139 + $0x2c] sm:$0xf]
      %v160 = vld [vmem:[%s139 + $0x30] sm:$0xf]
      %v161 = vld [vmem:[%s139 + $0x34] sm:$0xf]
      %v162 = vld [vmem:[%s139 + $0x38] sm:$0xf]
      %v163 = vld [vmem:[%s139 + $0x3c] sm:$0xf]
      %v164 = vld [vmem:[%s139 + $0x40] sm:$0xf]
      %v165 = vld [vmem:[%s139 + $0x44] sm:$0xf]
      %v166 = vld [vmem:[%s139 + $0x48] sm:$0xf]
      %v167 = vld [vmem:[%s139 + $0x4c] sm:$0xf]
      %v168 = vld [vmem:[%s139 + $0x50] sm:$0xf]
      %v169 = vld [vmem:[%s139 + $0x54] sm:$0xf]
      %v170 = vld [vmem:[%s139 + $0x58] sm:$0xf]
      %v171 = vld [vmem:[%s139 + $0x5c] sm:$0xf]
      %v172 = vld [vmem:[%s139 + $0x60] sm:$0xf]
      %v173 = vld [vmem:[%s139 + $0x64] sm:$0xf]
      %v174 = vld [vmem:[%s139 + $0x68] sm:$0xf]
      %v175 = vld [vmem:[%s139 + $0x6c] sm:$0xf]
      %v176 = vld [vmem:[%s139 + $0x70] sm:$0xf]
      %v177 = vld [vmem:[%s139 + $0x74] sm:$0xf]
      %v178 = vld [vmem:[%s139 + $0x78] sm:$0xf]
      %v179 = vld [vmem:[%s139 + $0x7c] sm:$0xf]
      %v180 = vld [vmem:[%s1] sm:$0xf]
      %v181 = vld [vmem:[%s1 + $0x4] sm:$0xf]
      %v182 = vld [vmem:[%s1 + $0x8] sm:$0xf]
      %v183 = vld [vmem:[%s1 + $0xc] sm:$0xf]
      %v184 = vld [vmem:[%s1 + $0x10] sm:$0xf]
      %v185 = vld [vmem:[%s1 + $0x14] sm:$0xf]
      %v186 = vld [vmem:[%s1 + $0x18] sm:$0xf]
      %v187 = vld [vmem:[%s1 + $0x1c] sm:$0xf]
      %v188 = vld [vmem:[%s1 + $0x20] sm:$0xf]
      %v189 = vld [vmem:[%s1 + $0x24] sm:$0xf]
      %v190 = vld [vmem:[%s1 + $0x28] sm:$0xf]
      %v191 = vld [vmem:[%s1 + $0x2c] sm:$0xf]
      %v192 = vld [vmem:[%s1 + $0x30] sm:$0xf]
      %v193 = vld [vmem:[%s1 + $0x34] sm:$0xf]
      %v194 = vld [vmem:[%s1 + $0x38] sm:$0xf]
      %v195 = vld [vmem:[%s1 + $0x3c] sm:$0xf]
      %v228 = vunpack.c.l.b16 %v148
      %v229 = vunpack.c.l.b16 %v149
      %v230 = vunpack.c.l.b16 %v150
      %v231 = vunpack.c.l.b16 %v151
      %v232 = vunpack.c.l.b16 %v152
      %v233 = vunpack.c.l.b16 %v153
      %v234 = vunpack.c.l.b16 %v154
      %v235 = vunpack.c.l.b16 %v155
      %v236 = vunpack.c.l.b16 %v156
      %v237 = vunpack.c.l.b16 %v157
      %v238 = vunpack.c.l.b16 %v158
      %v239 = vunpack.c.l.b16 %v159
      %v240 = vunpack.c.l.b16 %v160
      %v241 = vunpack.c.l.b16 %v161
      %v242 = vunpack.c.l.b16 %v162
      %v243 = vunpack.c.l.b16 %v163
      %v244 = vunpack.c.l.b16 %v164
      %v245 = vunpack.c.l.b16 %v165
      %v246 = vunpack.c.l.b16 %v166
      %v247 = vunpack.c.l.b16 %v167
      %v248 = vunpack.c.l.b16 %v168
      %v249 = vunpack.c.l.b16 %v169
      %v250 = vunpack.c.l.b16 %v170
      %v251 = vunpack.c.l.b16 %v171
      %v252 = vunpack.c.l.b16 %v172
      %v253 = vunpack.c.l.b16 %v173
      %v254 = vunpack.c.l.b16 %v174
      %v255 = vunpack.c.l.b16 %v175
      %v256 = vunpack.c.l.b16 %v176
      %v257 = vunpack.c.l.b16 %v177
      %v258 = vunpack.c.l.b16 %v178
      %v259 = vunpack.c.l.b16 %v179
      %v260 = vpack.c.b16 %v229, %v228
      %v261 = vpack.c.b16 %v231, %v230
      %v262 = vpack.c.b16 %v233, %v232
      %v263 = vpack.c.b16 %v235, %v234
      %v264 = vpack.c.b16 %v237, %v236
      %v265 = vpack.c.b16 %v239, %v238
      %v266 = vpack.c.b16 %v241, %v240
      %v267 = vpack.c.b16 %v243, %v242
      %v268 = vpack.c.b16 %v245, %v244
      %v269 = vpack.c.b16 %v247, %v246
      %v270 = vpack.c.b16 %v249, %v248
      %v271 = vpack.c.b16 %v251, %v250
      %v272 = vpack.c.b16 %v253, %v252
      %v273 = vpack.c.b16 %v255, %v254
      %v274 = vpack.c.b16 %v257, %v256
      %v275 = vpack.c.b16 %v259, %v258
      %v308 = vunpack.c.l.b16 %v180
      %v309 = vunpack.c.l.b16 %v181
      %v310 = vunpack.c.l.b16 %v182
      %v311 = vunpack.c.l.b16 %v183
      %v312 = vunpack.c.l.b16 %v184
      %v313 = vunpack.c.l.b16 %v185
      %v314 = vunpack.c.l.b16 %v186
      %v315 = vunpack.c.l.b16 %v187
      %v316 = vunpack.c.l.b16 %v188
      %v317 = vunpack.c.l.b16 %v189
      %v318 = vunpack.c.l.b16 %v190
      %v319 = vunpack.c.l.b16 %v191
      %v320 = vunpack.c.l.b16 %v192
      %v321 = vunpack.c.l.b16 %v193
      %v322 = vunpack.c.l.b16 %v194
      %v323 = vunpack.c.l.b16 %v195
      %v324 = vpack.c.b16 %v309, %v308
      %v325 = vpack.c.b16 %v311, %v310
      %v326 = vpack.c.b16 %v313, %v312
      %v327 = vpack.c.b16 %v315, %v314
      %v328 = vpack.c.b16 %v317, %v316
      %v329 = vpack.c.b16 %v319, %v318
      %v330 = vpack.c.b16 %v321, %v320
      %v331 = vpack.c.b16 %v323, %v322
      %340 = vmatprep.subr.bf16.mxu0 0
      %341 = vmatpush1.bf16.msra.mxu0 %v324
      %342 = vmatprep.subr.bf16.mxu0 0
      %343 = vmatpush1.bf16.msra.mxu0 %v325
      %344 = vmatprep.subr.bf16.mxu0 0
      %345 = vmatpush1.bf16.msra.mxu0 %v326
      %346 = vmatprep.subr.bf16.mxu0 0
      %347 = vmatpush1.bf16.msra.mxu0 %v327
      %348 = vmatprep.subr.bf16.mxu0 0
      %349 = vmatpush1.bf16.msra.mxu0 %v328
      %350 = vmatprep.subr.bf16.mxu0 0
      %351 = vmatpush1.bf16.msra.mxu0 %v329
      %352 = vmatprep.subr.bf16.mxu0 0
      %353 = vmatpush1.bf16.msra.mxu0 %v330
      %354 = vmatprep.subr.bf16.mxu0 0
      %355 = vmatpush1.bf16.msra.mxu0 %v331
      %356 = vmatprep.subr.bf16.mxu0 0
      %357 = vmatpush1.bf16.msra.mxu0 0
      %358 = vmatprep.subr.bf16.mxu0 0
      %359 = vmatpush1.bf16.msra.mxu0 0
      %360 = vmatprep.subr.bf16.mxu0 0
      %361 = vmatpush1.bf16.msra.mxu0 0
      %362 = vmatprep.subr.bf16.mxu0 0
      %363 = vmatpush1.bf16.msra.mxu0 0
      %364 = vmatprep.subr.bf16.mxu0 0
      %365 = vmatpush1.bf16.msra.mxu0 0
      %366 = vmatprep.subr.bf16.mxu0 0
      %367 = vmatpush1.bf16.msra.mxu0 0
      %368 = vmatprep.subr.bf16.mxu0 0
      %369 = vmatpush1.bf16.msra.mxu0 0
      %370 = vmatprep.subr.bf16.mxu0 0
      %371 = vmatpush1.bf16.msra.mxu0 0
      %372 = vmatprep.mubr.bf16.mxu0 0
      %373 = vmatmul.mubr.bf16.gmra.mrb[0].mxu0 %v260
      %v374 = vpop.f32.mrb[0].mxu0
      %v375 = vadd.f32 0.0, %v374
      %v376 = vpop.f32.mrb[0].mxu0
      %v377 = vpop.f32.mrb[0].mxu0
      %v378 = vadd.f32 0.0, %v377
      %v379 = vpop.f32.mrb[0].mxu0
      %380 = vmatprep.mubr.bf16.mxu0 0
      %381 = vmatmul.mubr.bf16.gmra.mrb[0].mxu0 %v261
      %v382 = vpop.f32.mrb[0].mxu0
      %v383 = vadd.f32 0.0, %v382
      %v384 = vpop.f32.mrb[0].mxu0
      %v385 = vpop.f32.mrb[0].mxu0
      %v386 = vadd.f32 0.0, %v385
      %v387 = vpop.f32.mrb[0].mxu0
      %388 = vmatprep.mubr.bf16.mxu0 0
      %389 = vmatmul.mubr.bf16.gmra.mrb[0].mxu0 %v262
      %v390 = vpop.f32.mrb[0].mxu0
      %v391 = vadd.f32 0.0, %v390
      %v392 = vpop.f32.mrb[0].mxu0
      %v393 = vpop.f32.mrb[0].mxu0
      %v394 = vadd.f32 0.0, %v393
      %v395 = vpop.f32.mrb[0].mxu0
      %396 = vmatprep.mubr.bf16.mxu0 0
      %397 = vmatmul.mubr.bf16.gmra.mrb[0].mxu0 %v263
      %v398 = vpop.f32.mrb[0].mxu0
      %v399 = vadd.f32 0.0, %v398
      %v400 = vpop.f32.mrb[0].mxu0
      %v401 = vpop.f32.mrb[0].mxu0
      %v402 = vadd.f32 0.0, %v401
      %v403 = vpop.f32.mrb[0].mxu0
      %404 = vmatprep.mubr.bf16.mxu0 0
      %405 = vmatmul.mubr.bf16.gmra.mrb[0].mxu0 %v264
      %v406 = vpop.f32.mrb[0].mxu0
      %v407 = vadd.f32 0.0, %v406
      %v408 = vpop.f32.mrb[0].mxu0
      %v409 = vpop.f32.mrb[0].mxu0
      %v410 = vadd.f32 0.0, %v409
      %v411 = vpop.f32.mrb[0].mxu0
      %412 = vmatprep.mubr.bf16.mxu0 0
      %413 = vmatmul.mubr.bf16.gmra.mrb[0].mxu0 %v265
      %v414 = vpop.f32.mrb[0].mxu0
      %v415 = vadd.f32 0.0, %v414
      %v416 = vpop.f32.mrb[0].mxu0
      %v417 = vpop.f32.mrb[0].mxu0
      %v418 = vadd.f32 0.0, %v417
      %v419 = vpop.f32.mrb[0].mxu0
      %420 = vmatprep.mubr.bf16.mxu0 0
      %421 = vmatmul.mubr.bf16.gmra.mrb[0].mxu0 %v266
      %v422 = vpop.f32.mrb[0].mxu0
      %v423 = vadd.f32 0.0, %v422
      %v424 = vpop.f32.mrb[0].mxu0
      %v425 = vpop.f32.mrb[0].mxu0
      %v426 = vadd.f32 0.0, %v425
      %v427 = vpop.f32.mrb[0].mxu0
      %428 = vmatprep.mubr.bf16.mxu0 0
      %429 = vmatmul.mubr.bf16.gmra.mrb[0].mxu0 %v267
      %v430 = vpop.f32.mrb[0].mxu0
      %v431 = vadd.f32 0.0, %v430
      %v432 = vpop.f32.mrb[0].mxu0
      %v433 = vpop.f32.mrb[0].mxu0
      %v434 = vadd.f32 0.0, %v433
      %v435 = vpop.f32.mrb[0].mxu0
      %436 = vmatprep.mubr.bf16.mxu0 0
      %437 = vmatmul.mubr.bf16.gmra.mrb[0].mxu0 %v268
      %v438 = vpop.f32.mrb[0].mxu0
      %v439 = vadd.f32 0.0, %v438
      %v440 = vpop.f32.mrb[0].mxu0
      %v441 = vpop.f32.mrb[0].mxu0
      %v442 = vadd.f32 0.0, %v441
      %v443 = vpop.f32.mrb[0].mxu0
      %444 = vmatprep.mubr.bf16.mxu0 0
      %445 = vmatmul.mubr.bf16.gmra.mrb[0].mxu0 %v269
      %v446 = vpop.f32.mrb[0].mxu0
      %v447 = vadd.f32 0.0, %v446
      %v448 = vpop.f32.mrb[0].mxu0
      %v449 = vpop.f32.mrb[0].mxu0
      %v450 = vadd.f32 0.0, %v449
      %v451 = vpop.f32.mrb[0].mxu0
      %452 = vmatprep.mubr.bf16.mxu0 0
      %453 = vmatmul.mubr.bf16.gmra.mrb[0].mxu0 %v270
      %v454 = vpop.f32.mrb[0].mxu0
      %v455 = vadd.f32 0.0, %v454
      %v456 = vpop.f32.mrb[0].mxu0
      %v457 = vpop.f32.mrb[0].mxu0
      %v458 = vadd.f32 0.0, %v457
      %v459 = vpop.f32.mrb[0].mxu0
      %460 = vmatprep.mubr.bf16.mxu0 0
      %461 = vmatmul.mubr.bf16.gmra.mrb[0].mxu0 %v271
      %v462 = vpop.f32.mrb[0].mxu0
      %v463 = vadd.f32 0.0, %v462
      %v464 = vpop.f32.mrb[0].mxu0
      %v465 = vpop.f32.mrb[0].mxu0
      %v466 = vadd.f32 0.0, %v465
      %v467 = vpop.f32.mrb[0].mxu0
      %468 = vmatprep.mubr.bf16.mxu0 0
      %469 = vmatmul.mubr.bf16.gmra.mrb[0].mxu0 %v272
      %v470 = vpop.f32.mrb[0].mxu0
      %v471 = vadd.f32 0.0, %v470
      %v472 = vpop.f32.mrb[0].mxu0
      %v473 = vpop.f32.mrb[0].mxu0
      %v474 = vadd.f32 0.0, %v473
      %v475 = vpop.f32.mrb[0].mxu0
      %476 = vmatprep.mubr.bf16.mxu0 0
      %477 = vmatmul.mubr.bf16.gmra.mrb[0].mxu0 %v273
      %v478 = vpop.f32.mrb[0].mxu0
      %v479 = vadd.f32 0.0, %v478
      %v480 = vpop.f32.mrb[0].mxu0
      %v481 = vpop.f32.mrb[0].mxu0
      %v482 = vadd.f32 0.0, %v481
      %v483 = vpop.f32.mrb[0].mxu0
      %484 = vmatprep.mubr.bf16.mxu0 0
      %485 = vmatmul.mubr.bf16.gmra.mrb[0].mxu0 %v274
      %v486 = vpop.f32.mrb[0].mxu0
      %v487 = vadd.f32 0.0, %v486
      %v488 = vpop.f32.mrb[0].mxu0
      %v489 = vpop.f32.mrb[0].mxu0
      %v490 = vadd.f32 0.0, %v489
      %v491 = vpop.f32.mrb[0].mxu0
      %492 = vmatprep.mubr.bf16.mxu0 0
      %493 = vmatmul.mubr.bf16.gmra.mrb[0].mxu0 %v275
      %v494 = vpop.f32.mrb[0].mxu0
      %v495 = vadd.f32 0.0, %v494
      %v496 = vpop.f32.mrb[0].mxu0
      %v497 = vpop.f32.mrb[0].mxu0
      %v498 = vadd.f32 0.0, %v497
      %v499 = vpop.f32.mrb[0].mxu0
      %500 = vdwg.mxu0
      %v501 = vtanh.pop %v375
      %v502 = vtanh.pop %v378
      %v503 = vtanh.pop %v383
      %v504 = vtanh.pop %v386
      %v505 = vtanh.pop %v391
      %v506 = vtanh.pop %v394
      %v507 = vtanh.pop %v399
      %v508 = vtanh.pop %v402
      %v509 = vtanh.pop %v407
      %v510 = vtanh.pop %v410
      %v511 = vtanh.pop %v415
      %v512 = vtanh.pop %v418
      %v513 = vtanh.pop %v423
      %v514 = vtanh.pop %v426
      %v515 = vtanh.pop %v431
      %v516 = vtanh.pop %v434
      %v517 = vtanh.pop %v439
      %v518 = vtanh.pop %v442
      %v519 = vtanh.pop %v447
      %v520 = vtanh.pop %v450
      %v521 = vtanh.pop %v455
      %v522 = vtanh.pop %v458
      %v523 = vtanh.pop %v463
      %v524 = vtanh.pop %v466
      %v525 = vtanh.pop %v471
      %v526 = vtanh.pop %v474
      %v527 = vtanh.pop %v479
      %v528 = vtanh.pop %v482
      %v529 = vtanh.pop %v487
      %v530 = vtanh.pop %v490
      %v531 = vtanh.pop %v495
      %v532 = vtanh.pop %v498
      %533 = vst [vmem:[%s145] sm:$0xff] %v501
      %534 = vst [vmem:[%s145 + $0x8] sm:$0xff] %v502
      %535 = vst [vmem:[%s145 + $0x10] sm:$0xff] %v503
      %536 = vst [vmem:[%s145 + $0x18] sm:$0xff] %v504
      %537 = vst [vmem:[%s145 + $0x20] sm:$0xff] %v505
      %538 = vst [vmem:[%s145 + $0x28] sm:$0xff] %v506
      %539 = vst [vmem:[%s145 + $0x30] sm:$0xff] %v507
      %540 = vst [vmem:[%s145 + $0x38] sm:$0xff] %v508
      %541 = vst [vmem:[%s145 + $0x40] sm:$0xff] %v509
      %542 = vst [vmem:[%s145 + $0x48] sm:$0xff] %v510
      %543 = vst [vmem:[%s145 + $0x50] sm:$0xff] %v511
      %544 = vst [vmem:[%s145 + $0x58] sm:$0xff] %v512
      %545 = vst [vmem:[%s145 + $0x60] sm:$0xff] %v513
      %546 = vst [vmem:[%s145 + $0x68] sm:$0xff] %v514
      %547 = vst [vmem:[%s145 + $0x70] sm:$0xff] %v515
      %548 = vst [vmem:[%s145 + $0x78] sm:$0xff] %v516
      %549 = vst [vmem:[%s145 + $0x80] sm:$0xff] %v517
      %550 = vst [vmem:[%s145 + $0x88] sm:$0xff] %v518
      %551 = vst [vmem:[%s145 + $0x90] sm:$0xff] %v519
      %552 = vst [vmem:[%s145 + $0x98] sm:$0xff] %v520
      %553 = vst [vmem:[%s145 + $0xa0] sm:$0xff] %v521
      %554 = vst [vmem:[%s145 + $0xa8] sm:$0xff] %v522
      %555 = vst [vmem:[%s145 + $0xb0] sm:$0xff] %v523
      %556 = vst [vmem:[%s145 + $0xb8] sm:$0xff] %v524
      %557 = vst [vmem:[%s145 + $0xc0] sm:$0xff] %v525
      %558 = vst [vmem:[%s145 + $0xc8] sm:$0xff] %v526
      %559 = vst [vmem:[%s145 + $0xd0] sm:$0xff] %v527
      %560 = vst [vmem:[%s145 + $0xd8] sm:$0xff] %v528
      %561 = vst [vmem:[%s145 + $0xe0] sm:$0xff] %v529
      %562 = vst [vmem:[%s145 + $0xe8] sm:$0xff] %v530
      %563 = vst [vmem:[%s145 + $0xf0] sm:$0xff] %v531
      %564 = vst [vmem:[%s145 + $0xf8] sm:$0xff] %v532
      %s565 = smul.u32 32, %s13
      %p566 = scmp.lt.s32.totalorder %s565, 255
      %s567 = scalar_select %p566, %s565, 255
      %s568 = smul.addr %s567, 8
      %s569 = scalar_lea.vmem %s2, %s568
      // Predicated region
      $region29: #{wgan_generator_forward.13} parent=27 // pred_check
        %p570 = pneg %p78
      $region30: #{wgan_generator_forward.13} parent=27 // pred_check_branch
        %572 = sbr.rel (%p570) target = $region32
      $region31: #{wgan_generator_forward.13} parent=27 // pred_region
        %s573 = smul.u32 32, %s13
      $region32: #{wgan_generator_forward.13} parent=27 // pred_fallthru
        _
    $region28: #{wgan_generator_forward.13} parent=5 // pred_fallthru
      _
    %p574 = scmp.le.s32.totalorder 2, %s8
    // Predicated region
    $region33: #{wgan_generator_forward.13} parent=5 // pred_check
      %p575 = pneg %p574
    $region34: #{wgan_generator_forward.13} parent=5 // pred_check_branch
      %577 = sbr.rel (%p575) target = $region36
    $region35: #{wgan_generator_forward.13} parent=5 // pred_region
      %s578 = ssub.s32 %s8, 2
      // Predicated region
      $region37: #{wgan_generator_forward.13} parent=35 // pred_check
        %p579 = pneg %p84
      $region38: #{wgan_generator_forward.13} parent=35 // pred_check_branch
        %581 = sbr.rel (%p579) target = $region40
      $region39: #{wgan_generator_forward.13} parent=35 // pred_region
        %s582 = smul.u32 32, %s14
        %p583 = scmp.lt.s32.totalorder %s582, 255
        %s584 = scalar_select %p583, %s582, 255
        %s585 = smul.addr %s584, 8
        %s586 = scalar_lea.vmem %s2, %s585
      $region40: #{wgan_generator_forward.13} parent=35 // pred_fallthru
        _
    $region36: #{wgan_generator_forward.13} parent=5 // pred_fallthru
      _
  $region6: #{wgan_generator_forward.13} parent=0 // loop_footer
    %s12 = sadd.s32 1, %s8
  $region7: #{wgan_generator_forward.13} parent=0 // loop_footer_branch
    %7 = sbr.rel target = $region3
  $region8: #{wgan_generator_forward.13} parent=0 // loop_exit
    _

</llo_original>
